<compile_context>
chip_gen: v5e
topology: v5e:2x2
jax: 0.10.0
libtpu: 0.0.40
codegen_flags: <defaults>
</compile_context>

<pallas_src>
import math
import functools

import jax
import jax.numpy as jnp
from jax import lax
from jax.experimental import pallas as pl
from jax.experimental.pallas import tpu as pltpu


def _pick_tile(dim, target, align):
    """Largest tile <= target that divides `dim` and is a multiple of `align`,
    falling back to the full extent (always a legal BlockSpec block)."""
    if dim <= target:
        return dim
    t = (target // align) * align
    while t >= align:
        if dim % t == 0:
            return t
        t -= align
    return dim


# ----------------------------------------------------------------------------
# 1) Fused QKV projection: tiled matmul, bf16 MXU operands, f32 accumulator
# ----------------------------------------------------------------------------

def _matmul_kernel(x_ref, w_ref, o_ref, acc_ref):
    @pl.when(pl.program_id(2) == 0)
    def _init():
        acc_ref[...] = jnp.zeros(acc_ref.shape, acc_ref.dtype)

    acc_ref[...] += jnp.dot(x_ref[...].astype(jnp.bfloat16), w_ref[...],
                            preferred_element_type=jnp.float32)

    @pl.when(pl.program_id(2) == pl.num_programs(2) - 1)
    def _finalize():
        o_ref[...] = acc_ref[...].astype(o_ref.dtype)


def fused_qkv_proj(x2d, w_fused, *, bm=512, bn=512, bk=512):
    """x2d: (M, K) activations; w_fused: (K, N) bf16 pre-transposed [Q|K|V].
    Returns (M, N) bf16."""
    M, K = x2d.shape
    K2, N = w_fused.shape
    assert K == K2
    tm = _pick_tile(M, bm, 8)
    tn = _pick_tile(N, bn, 128)
    tk = _pick_tile(K, bk, 128)
    grid = (M // tm, N // tn, K // tk)
    return pl.pallas_call(
        _matmul_kernel,
        out_shape=jax.ShapeDtypeStruct((M, N), jnp.bfloat16),
        grid=grid,
        in_specs=[
            pl.BlockSpec((tm, tk), lambda i, j, k: (i, k)),
            pl.BlockSpec((tk, tn), lambda i, j, k: (k, j)),
        ],
        out_specs=pl.BlockSpec((tm, tn), lambda i, j, k: (i, j)),
        scratch_shapes=[pltpu.VMEM((tm, tn), jnp.float32)],
        compiler_params=pltpu.CompilerParams(
            dimension_semantics=("parallel", "parallel", "arbitrary"),
            vmem_limit_bytes=40 * 1024 * 1024,
        ),
    )(x2d, w_fused)


# ----------------------------------------------------------------------------
# 2) Single RoPE + head-major relayout pass over ALL head slots
#    (Q and K slots rotated, V slots copied); rotate_half via pltpu.roll (XLU)
#    with the +/-1 sign folded into sin.
# ----------------------------------------------------------------------------

def _rope_relayout_kernel(x_ref, cos_ref, sin_ref, o_ref, *, num_rope_heads):
    h = pl.program_id(1)
    x = x_ref[0]                                     # (ts, D) bf16

    @pl.when(h < num_rope_heads)
    def _rope():
        xf = x.astype(jnp.float32)
        cos = cos_ref[0].astype(jnp.float32)
        sin = sin_ref[0].astype(jnp.float32)         # +/-1 sign already folded
        half = xf.shape[-1] // 2
        rot = pltpu.roll(xf, shift=half, axis=1)     # == concat(x2, x1)
        o_ref[0, 0] = (xf * cos + rot * sin).astype(o_ref.dtype)

    @pl.when(h >= num_rope_heads)
    def _copy():                                     # V head slots: relayout only
        o_ref[0, 0] = x.astype(o_ref.dtype)


def rope_and_relayout(qkv, cos, sin_signed, *, num_rope_heads, total_heads,
                      head_dim, bs=512):
    """qkv: (B, S, total_heads*D) fused [Q|K|V] projection (bf16).
    Returns head-major (B, total_heads, S, D) bf16 with RoPE applied to the
    first `num_rope_heads` head slots (Q then K); V slots are copied."""
    B, S, _ = qkv.shape
    D = head_dim
    ts = _pick_tile(S, bs, 8)
    grid = (B, total_heads, S // ts)
    kernel = functools.partial(_rope_relayout_kernel,
                               num_rope_heads=num_rope_heads)
    return pl.pallas_call(
        kernel,
        out_shape=jax.ShapeDtypeStruct((B, total_heads, S, D), jnp.bfloat16),
        grid=grid,
        in_specs=[
            pl.BlockSpec((1, ts, D), lambda b, h, s: (b, s, h)),
            pl.BlockSpec((1, ts, D), lambda b, h, s: (b, s, 0)),
            pl.BlockSpec((1, ts, D), lambda b, h, s: (b, s, 0)),
        ],
        out_specs=pl.BlockSpec((1, 1, ts, D), lambda b, h, s: (b, h, s, 0)),
        compiler_params=pltpu.CompilerParams(
            dimension_semantics=("parallel", "parallel", "parallel"),
            vmem_limit_bytes=40 * 1024 * 1024,
        ),
    )(qkv, cos, sin_signed)


# ----------------------------------------------------------------------------
# 3) Flash attention with GQA: K/V tile shared by the whole query-head group,
#    single merged (G*tq, D) matmul per kv step, online softmax in f32.
# ----------------------------------------------------------------------------

def _flash_attn_kernel(q_ref, k_ref, v_ref, o_ref, m_sc, l_sc, acc_sc, *,
                       num_groups, head_dim, block_q, scale):
    ki = pl.program_id(3)

    @pl.when(ki == 0)
    def _init():
        m_sc[...] = jnp.full(m_sc.shape, -jnp.inf, m_sc.dtype)
        l_sc[...] = jnp.zeros(l_sc.shape, l_sc.dtype)
        acc_sc[...] = jnp.zeros(acc_sc.shape, acc_sc.dtype)

    G, D, tq = num_groups, head_dim, block_q
    q = q_ref[0].reshape(G * tq, D)          # (G*tq, D) bf16 — leading-dim merge
    k = k_ref[0, 0]                          # (tk, D) bf16
    v = v_ref[0, 0]                          # (tk, D) bf16

    # One merged MXU push for the whole GQA group: contract on D of both
    # operands (no in-kernel transpose).
    s = lax.dot_general(
        q, k, dimension_numbers=(((1,), (1,)), ((), ())),
        preferred_element_type=jnp.float32) * scale          # (G*tq, tk) f32

    m_prev = m_sc[...]                                        # (G*tq, 1)
    m_new = jnp.maximum(m_prev, jnp.max(s, axis=-1, keepdims=True))
    alpha = jnp.exp(m_prev - m_new)
    # TODO(synk): on v6e/v7x the single EUP may bound this step; if profiling
    # shows it, feed exp in bf16 or shrink tk so exp overlaps the next matmul.
    p = jnp.exp(s - m_new)                                    # (G*tq, tk) f32
    l_sc[...] = alpha * l_sc[...] + jnp.sum(p, axis=-1, keepdims=True)
    acc_sc[...] = alpha * acc_sc[...] + jnp.dot(
        p.astype(jnp.bfloat16), v, preferred_element_type=jnp.float32)
    m_sc[...] = m_new

    @pl.when(ki == pl.num_programs(3) - 1)
    def _finalize():
        inv_l = pl.reciprocal(l_sc[...], approx=True)         # EUP, ~free
        o_ref[0] = (acc_sc[...] * inv_l).reshape(G, tq, D).astype(o_ref.dtype)


def flash_attention(qkv_hm, *, num_heads, num_kv_heads, head_dim, out_dtype,
                    bq=512, bkv=256):
    """qkv_hm: head-major (B, NH+2*NKV, S, D): Q heads [0,NH), K heads
    [NH,NH+NKV), V heads [NH+NKV, NH+2*NKV).  Returns (B, NH, S, D)."""
    B, _, S, D = qkv_hm.shape
    NH, NKV = num_heads, num_kv_heads
    G = NH // NKV
    tq = _pick_tile(S, bq, 8)
    tk = _pick_tile(S, bkv, 8)
    grid = (B, NKV, S // tq, S // tk)
    kernel = functools.partial(_flash_attn_kernel, num_groups=G, head_dim=D,
                               block_q=tq, scale=1.0 / math.sqrt(D))
    return pl.pallas_call(
        kernel,
        out_shape=jax.ShapeDtypeStruct((B, NH, S, D), out_dtype),
        grid=grid,
        in_specs=[
            # All G query heads of GQA group kv: one contiguous (G, tq, D) block.
            pl.BlockSpec((1, G, tq, D), lambda b, kv, qi, ki: (b, kv, qi, 0)),
            # K head kv (head slot NH + kv): contiguous (tk, D) block.
            pl.BlockSpec((1, 1, tk, D), lambda b, kv, qi, ki: (b, NH + kv, ki, 0)),
            # V head kv (head slot NH + NKV + kv).
            pl.BlockSpec((1, 1, tk, D),
                         lambda b, kv, qi, ki: (b, NH + NKV + kv, ki, 0)),
        ],
        # Output written head-major, resident across the kv axis.
        out_specs=pl.BlockSpec((1, G, tq, D), lambda b, kv, qi, ki: (b, kv, qi, 0)),
        scratch_shapes=[
            pltpu.VMEM((G * tq, 1), jnp.float32),   # m
            pltpu.VMEM((G * tq, 1), jnp.float32),   # l
            pltpu.VMEM((G * tq, D), jnp.float32),   # acc
        ],
        compiler_params=pltpu.CompilerParams(
            dimension_semantics=("parallel", "parallel", "parallel", "arbitrary"),
            vmem_limit_bytes=40 * 1024 * 1024,
        ),
    )(qkv_hm, qkv_hm, qkv_hm)


# ----------------------------------------------------------------------------
# Module wrapper (glue in plain JAX; no host-side transposes / relayouts)
# ----------------------------------------------------------------------------

class LlamaAttentionPallas:
    def __init__(self, hidden_size, num_heads, num_key_value_heads,
                 rope_theta=10000.0, max_position_embeddings=2048, key=None):
        self.hidden_size = hidden_size
        self.num_heads = num_heads
        self.head_dim = hidden_size // num_heads
        self.num_key_value_heads = num_key_value_heads
        self.num_key_value_groups = num_heads // num_key_value_heads
        self.rope_theta = rope_theta
        self.max_position_embeddings = max_position_embeddings

        k1, k2, k3, k4 = jax.random.split(key, 4)
        std = 0.02
        # torch nn.Linear weight layout: (out_features, in_features), bias=False
        self.q_w = std * jax.random.normal(
            k1, (num_heads * self.head_dim, hidden_size), jnp.float32)
        self.k_w = std * jax.random.normal(
            k2, (num_key_value_heads * self.head_dim, hidden_size), jnp.float32)
        self.v_w = std * jax.random.normal(
            k3, (num_key_value_heads * self.head_dim, hidden_size), jnp.float32)
        self.o_w = std * jax.random.normal(
            k4, (hidden_size, hidden_size), jnp.float32)  # unused by ref forward

        # Fused, pre-transposed, bf16 [Q | K | V] weight built once at init:
        # (H, (NH + 2*NKV)*D).  No weight.T and no f32 weight traffic per forward.
        self.w_fused = jnp.concatenate(
            [self.q_w.T, self.k_w.T, self.v_w.T], axis=1).astype(jnp.bfloat16)

    def _rotary(self, position_ids, dtype):
        # LlamaRotaryEmbedding.forward semantics (tiny host-side compute).
        D = self.head_dim
        inv_freq = 1.0 / (self.rope_theta ** (
            jnp.arange(0, D, 2, dtype=jnp.float32) / D))               # (D/2,)
        freqs = position_ids[:, :, None].astype(jnp.float32) * inv_freq[None, None, :]
        emb = jnp.concatenate([freqs, freqs], axis=-1)                 # (B, S, D)
        return jnp.cos(emb).astype(dtype), jnp.sin(emb).astype(dtype)

    def __call__(self, hidden_states, position_ids):
        B, S, H = hidden_states.shape
        D = self.head_dim
        NH, NKV = self.num_heads, self.num_key_value_heads
        NTOT = NH + 2 * NKV

        # 1) Fused QKV projection (tiled/pipelined Pallas matmul, bf16 out).
        x2d = hidden_states.reshape(B * S, H)
        qkv = fused_qkv_proj(x2d, self.w_fused).reshape(B, S, NTOT * D)

        # 2) One RoPE + head-major relayout pass (Q and K rotated, V copied).
        cos, sin = self._rotary(position_ids, jnp.float32)
        half = D // 2
        sin_signed = jnp.concatenate([-sin[..., :half], sin[..., half:]], axis=-1)
        qkv_hm = rope_and_relayout(qkv, cos, sin_signed,
                                   num_rope_heads=NH + NKV, total_heads=NTOT,
                                   head_dim=D)

        # 3) Flash attention with GQA (repeat_kv realized purely via index_maps).
        return flash_attention(qkv_hm, num_heads=NH, num_kv_heads=NKV,
                               head_dim=D, out_dtype=hidden_states.dtype)
        # Returns (B, num_heads, S, head_dim) — matches the reference forward.


# ----------------------------------------------------------------------------
# Pure-JAX reference (for verification)
# ----------------------------------------------------------------------------

def _reference(mod, hidden_states, position_ids):
    B, S, H = hidden_states.shape
    D = mod.head_dim
    q = hidden_states @ mod.q_w.T
    k = hidden_states @ mod.k_w.T
    v = hidden_states @ mod.v_w.T
    q = q.reshape(B, S, mod.num_heads, D).transpose(0, 2, 1, 3)
    k = k.reshape(B, S, mod.num_key_value_heads, D).transpose(0, 2, 1, 3)
    v = v.reshape(B, S, mod.num_key_value_heads, D).transpose(0, 2, 1, 3)
    cos, sin = mod._rotary(position_ids, hidden_states.dtype)
    cos_, sin_ = cos[:, None], sin[:, None]

    def rot(x):
        x1, x2 = x[..., :D // 2], x[..., D // 2:]
        return jnp.concatenate([-x2, x1], axis=-1)

    q = q * cos_ + rot(q) * sin_
    k = k * cos_ + rot(k) * sin_
    k = jnp.repeat(k, mod.num_key_value_groups, axis=1)
    v = jnp.repeat(v, mod.num_key_value_groups, axis=1)
    s = jnp.einsum('bhqd,bhkd->bhqk', q, k) / math.sqrt(D)
    p = jax.nn.softmax(s.astype(jnp.float32), axis=-1).astype(q.dtype)
    return jnp.einsum('bhqk,bhkd->bhqd', p, v)


# ----------------------------------------------------------------------------
# Main
# ----------------------------------------------------------------------------

if __name__ == "__main__":
    # Small but TPU-friendly shapes: head_dim=128 (lane-aligned), multiple
    # kv tiles so the online-softmax accumulation path is exercised, GQA=4.
    B, S = 2, 512
    NUM_HEADS, NUM_KV_HEADS, HEAD_DIM = 8, 2, 128   # GQA group size = 4
    H = NUM_HEADS * HEAD_DIM                        # 1024

    key = jax.random.PRNGKey(0)
    kx, kw = jax.random.split(key)
    hidden_states = jax.random.normal(kx, (B, S, H), jnp.float32)
    position_ids = jnp.broadcast_to(jnp.arange(S, dtype=jnp.int32)[None, :], (B, S))

    mod = LlamaAttentionPallas(H, NUM_HEADS, NUM_KV_HEADS, key=kw)

    out = jax.block_until_ready(mod(hidden_states, position_ids))
    assert out.shape == (B, NUM_HEADS, S, HEAD_DIM), out.shape

    ref = _reference(mod, hidden_states, position_ids)
    err = float(jnp.max(jnp.abs(out - ref)))
    # bf16 weights/activations on the MXU + approx reciprocal => bf16 tolerance.
    assert jnp.allclose(out, ref, atol=2e-2, rtol=2e-2), err

    print("KERNEL_OK")
</pallas_src>

<mosaic_0001>
module attributes {stable_mosaic.version = 11 : i64} {
  func.func @_matmul_kernel(%arg0: i32, %arg1: i32, %arg2: i32, %arg3: memref<512x512xf32, #tpu.memory_space<vmem>>, %arg4: memref<512x512xbf16, #tpu.memory_space<vmem>>, %arg5: memref<512x512xbf16, #tpu.memory_space<vmem>>, %arg6: memref<512x512xf32, #tpu.memory_space<vmem>>) attributes {dimension_semantics = [#tpu.dimension_semantics<parallel>, #tpu.dimension_semantics<parallel>, #tpu.dimension_semantics<arbitrary>], iteration_bounds = array<i64: 2, 3, 2>, scalar_prefetch = 0 : i64, scratch_operands = 1 : i64, tpu.core_type = #tpu.core_type<tc>, window_params = [{transform_indices = @transform_0, window_bounds = array<i64: 512, 512>}, {transform_indices = @transform_1, window_bounds = array<i64: 512, 512>}, {transform_indices = @transform_2, window_bounds = array<i64: 512, 512>}]} {
    %c0_i32 = arith.constant 0 : i32
    %0 = arith.cmpi eq, %arg2, %c0_i32 : i32
    %1 = arith.extui %0 : i1 to i32
    %c0_i32_0 = arith.constant 0 : i32
    %2 = arith.cmpi ne, %1, %c0_i32_0 : i32
    scf.if %2 {
      %cst_9 = arith.constant 0.000000e+00 : f32
      %13 = vector.broadcast %cst_9 : f32 to vector<512x512xf32>
      %c0_10 = arith.constant 0 : index
      %c0_11 = arith.constant 0 : index
      %14 = vector.load %arg6[%c0_10, %c0_11] : memref<512x512xf32, #tpu.memory_space<vmem>>, vector<512x512xf32>
      tpu.vector_store %arg6[%c0_10, %c0_11], %13 {strides = array<i32>} : memref<512x512xf32, #tpu.memory_space<vmem>>, vector<512x512xf32>,
    } else {
    }
    %c0 = arith.constant 0 : index
    %c0_1 = arith.constant 0 : index
    %3 = vector.load %arg6[%c0, %c0_1] : memref<512x512xf32, #tpu.memory_space<vmem>>, vector<512x512xf32>
    %c0_2 = arith.constant 0 : index
    %c0_3 = arith.constant 0 : index
    %4 = vector.load %arg3[%c0_2, %c0_3] : memref<512x512xf32, #tpu.memory_space<vmem>>, vector<512x512xf32>
    %5 = arith.truncf %4 : vector<512x512xf32> to vector<512x512xbf16>
    %c0_4 = arith.constant 0 : index
    %c0_5 = arith.constant 0 : index
    %6 = vector.load %arg4[%c0_4, %c0_5] : memref<512x512xbf16, #tpu.memory_space<vmem>>, vector<512x512xbf16>
    %cst = arith.constant dense<0.000000e+00> : vector<512x512xf32>
    %7 = tpu.matmul %5, %6, %cst {dimension_numbers = #tpu.dot_dimension_numbers<[1], [0], [0], [1], [0, 0, 1, 1], [], []>} : vector<512x512xbf16>, vector<512x512xbf16>, vector<512x512xf32> -> vector<512x512xf32>
    %8 = arith.addf %3, %7 : vector<512x512xf32>
    %c0_6 = arith.constant 0 : index
    %c0_7 = arith.constant 0 : index
    %9 = vector.load %arg6[%c0_6, %c0_7] : memref<512x512xf32, #tpu.memory_space<vmem>>, vector<512x512xf32>
    tpu.vector_store %arg6[%c0_6, %c0_7], %8 {strides = array<i32>} : memref<512x512xf32, #tpu.memory_space<vmem>>, vector<512x512xf32>,
    %c1_i32 = arith.constant 1 : i32
    %10 = arith.cmpi eq, %arg2, %c1_i32 : i32
    %11 = arith.extui %10 : i1 to i32
    %c0_i32_8 = arith.constant 0 : i32
    %12 = arith.cmpi ne, %11, %c0_i32_8 : i32
    scf.if %12 {
      %c0_9 = arith.constant 0 : index
      %c0_10 = arith.constant 0 : index
      %13 = vector.load %arg6[%c0_9, %c0_10] : memref<512x512xf32, #tpu.memory_space<vmem>>, vector<512x512xf32>
      %14 = arith.truncf %13 : vector<512x512xf32> to vector<512x512xbf16>
      %c0_11 = arith.constant 0 : index
      %c0_12 = arith.constant 0 : index
      %15 = vector.load %arg5[%c0_11, %c0_12] : memref<512x512xbf16, #tpu.memory_space<vmem>>, vector<512x512xbf16>
      tpu.vector_store %arg5[%c0_11, %c0_12], %14 {strides = array<i32>} : memref<512x512xbf16, #tpu.memory_space<vmem>>, vector<512x512xbf16>,
    } else {
    }
    return
  }
  func.func @transform_0(%arg0: i32, %arg1: i32, %arg2: i32) -> (i32, i32) {
    %c0_i32 = arith.constant 0 : i32
    return %arg0, %arg2 : i32, i32
  }
  func.func @transform_1(%arg0: i32, %arg1: i32, %arg2: i32) -> (i32, i32) {
    %c0_i32 = arith.constant 0 : i32
    return %arg2, %arg1 : i32, i32
  }
  func.func @transform_2(%arg0: i32, %arg1: i32, %arg2: i32) -> (i32, i32) {
    %c0_i32 = arith.constant 0 : i32
    return %arg0, %arg1 : i32, i32
  }
}

</mosaic_0001>

<llo_original>
// kernel: tpu_custom_call.1
$region0: #{tpu_custom_call.1}
  #allocation0 [shape = 'u32[]', space=smem, size = 0x4, offset = 0x4, fixed_abs, tag = 'smem constant byte address 0x4 - core index']
  #allocation1 [shape = 'u32[72,128]{1,0:T(1,128)}', space=vmem, size = 0x9000, scoped, tag = 'internal scratch']
  #allocation2 [shape = 'f32[512,512]{1,0:T(8,128)}', space=vmem, size = 0x100000, scoped, tag = 'scratch operand']
  %s0 = inlined_call_operand.hbm [shape: f32[1024,1024], index: 0, kind: input, shape index: {}]
  %s1 = inlined_call_operand.hbm [shape: bf16[1024,1536], index: 1, kind: input, shape index: {}]
  %s2 = inlined_call_operand.hbm [shape: bf16[1024,1536], index: 2, kind: output, shape index: {}]
  %s3 = sld [smem:[#allocation0]]
  $region57: #{tpu_custom_call.1} parent=0
    _
  %s5 = ssub.s32 1, %s3
  %s6 = scalar_select 0, %s5, %s3
  $region1: #{tpu_custom_call.1} parent=0
    #allocation3 [shape = 'u8[2097152]{0}', space=vmem, size = 0x200000, scoped, tag = 'input window, operand 0']
    #allocation4 [shape = 's32[2]{0}', space=sflag, size = 0x8, scoped, tag = 'scoped memory for tpu_custom_call.1']
    #allocation5 [shape = 's32[2]{0}', space=sflag, size = 0x8, scoped, tag = 'scoped memory for tpu_custom_call.1']
    #allocation6 [shape = 'u8[1048576]{0}', space=vmem, size = 0x100000, scoped, tag = 'input window, operand 1']
    #allocation7 [shape = 's32[2]{0}', space=sflag, size = 0x8, scoped, tag = 'scoped memory for tpu_custom_call.1']
    #allocation8 [shape = 'u8[1048576]{0}', space=vmem, size = 0x100000, scoped, tag = 'output window, operand 0']
    %7 = vsyncpa [#allocation4], 0
    %s8 = scalar_lea.sflag [#allocation4], 1
    %9 = vsyncpa %s8, 0
    %10 = vsyncpa [#allocation7], 0
    %s11 = scalar_lea.sflag [#allocation7], 1
    %12 = vsyncpa %s11, 0
    %13 = vsyncpa [#allocation5], 0
    %s14 = scalar_lea.sflag [#allocation5], 1
    %15 = vsyncpa %s14, 0
    loop: start=0, step=1, limit=14
    $region2: #{tpu_custom_call.1} parent=1 // loop_pre_header
      _
    $region3: #{tpu_custom_call.1} parent=1 // loop_header
      %s17 = sphi 0, %s21
      %p18 = scmp.ge.s32.totalorder %s17, 14
      %s24 = sphi 0, %s43
      %s25 = sphi 0, %s39
      %s26 = sphi 0, %s35
      %s27 = sphi 0, %s24
      %s28 = sphi 0, %s25
      %s29 = sphi 0, %s26
      %s30 = sphi 0, %s27
      %s31 = sphi 0, %s28
      %s32 = sphi 0, %s29
      %s48 = sphi 0, %s50
      %s51 = sphi 0, %s48
      %s52 = sphi 0, %s51
      %s68 = sphi 0, %s52
      %s76 = sphi 0, %s78
      %s79 = sphi 0, %s76
      %s80 = sphi 0, %s79
      %s96 = sphi 0, %s80
      %s104 = sphi 0, %s106
      %s107 = sphi 0, %s104
      %s108 = sphi 0, %s107
      %s124 = sphi 0, %s108
    $region4: #{tpu_custom_call.1} parent=1 // loop_header_branch
      %20 = sbr.rel (%p18) target = $region8
    $region5: #{tpu_custom_call.1} parent=1 // loop_body
      %s22 = ssub.s32 %s17, 1
      %s23 = ssub.s32 %s17, 2
      %s33 = sadd.s32 1, %s26
      %p34 = scmp.ge.s32.totalorder %s33, 2
      %s35 = scalar_select %p34, 0, %s33
      %s36 = sadd.s32 1, %s25
      %s37 = scalar_select %p34, %s36, %s25
      %p38 = scmp.ge.s32.totalorder %s37, 3
      %s39 = scalar_select %p38, 0, %s37
      %s40 = sadd.s32 1, %s24
      %s41 = scalar_select %p38, %s40, %s24
      %p42 = scmp.ge.s32.totalorder %s41, 2
      %s43 = scalar_select %p42, 0, %s41
      %s44 = ssub.s32 %s24, %s43
      %s45 = ssub.s32 %s26, %s35
      %s46 = sor.u32 %s44, %s45
      %p47 = scmp.eq.s32.totalorder %s46, 0
      %s49 = sadd.s32 %s48, 1
      %s50 = scalar_select %p47, %s48, %s49
      %p53 = pneg %p47
      %p54 = scmp.eq.s32.totalorder %s17, 11
      %p55 = por %p53, %p54
      %p56 = scmp.ne.s32.totalorder %s48, %s51
      %p57 = scmp.eq.s32.totalorder %s17, 0
      %p58 = por %p56, %p57
      %p59 = scmp.ne.s32.totalorder %s48, %s51
      %p60 = scmp.eq.s32.totalorder %s22, 11
      %p61 = por %p59, %p60
      %p62 = scmp.ne.s32.totalorder %s51, %s52
      %p63 = scmp.eq.s32.totalorder %s22, 0
      %p64 = por %p62, %p63
      %p65 = scmp.ne.s32.totalorder %s51, %s52
      %p66 = scmp.eq.s32.totalorder %s23, 11
      %p67 = por %p65, %p66
      %p69 = scmp.ne.s32.totalorder %s52, %s68
      %p70 = scmp.eq.s32.totalorder %s23, 0
      %p71 = por %p69, %p70
      %s72 = ssub.s32 %s26, %s35
      %s73 = ssub.s32 %s25, %s39
      %s74 = sor.u32 %s72, %s73
      %p75 = scmp.eq.s32.totalorder %s74, 0
      %s77 = sadd.s32 %s76, 1
      %s78 = scalar_select %p75, %s76, %s77
      %p81 = pneg %p75
      %p82 = scmp.eq.s32.totalorder %s17, 11
      %p83 = por %p81, %p82
      %p84 = scmp.ne.s32.totalorder %s76, %s79
      %p85 = scmp.eq.s32.totalorder %s17, 0
      %p86 = por %p84, %p85
      %p87 = scmp.ne.s32.totalorder %s76, %s79
      %p88 = scmp.eq.s32.totalorder %s22, 11
      %p89 = por %p87, %p88
      %p90 = scmp.ne.s32.totalorder %s79, %s80
      %p91 = scmp.eq.s32.totalorder %s22, 0
      %p92 = por %p90, %p91
      %p93 = scmp.ne.s32.totalorder %s79, %s80
      %p94 = scmp.eq.s32.totalorder %s23, 11
      %p95 = por %p93, %p94
      %p97 = scmp.ne.s32.totalorder %s80, %s96
      %p98 = scmp.eq.s32.totalorder %s23, 0
      %p99 = por %p97, %p98
      %s100 = ssub.s32 %s24, %s43
      %s101 = ssub.s32 %s25, %s39
      %s102 = sor.u32 %s100, %s101
      %p103 = scmp.eq.s32.totalorder %s102, 0
      %s105 = sadd.s32 %s104, 1
      %s106 = scalar_select %p103, %s104, %s105
      %p109 = pneg %p103
      %p110 = scmp.eq.s32.totalorder %s17, 11
      %p111 = por %p109, %p110
      %p112 = scmp.ne.s32.totalorder %s104, %s107
      %p113 = scmp.eq.s32.totalorder %s17, 0
      %p114 = por %p112, %p113
      %p115 = scmp.ne.s32.totalorder %s104, %s107
      %p116 = scmp.eq.s32.totalorder %s22, 11
      %p117 = por %p115, %p116
      %p118 = scmp.ne.s32.totalorder %s107, %s108
      %p119 = scmp.eq.s32.totalorder %s22, 0
      %p120 = por %p118, %p119
      %p121 = scmp.ne.s32.totalorder %s107, %s108
      %p122 = scmp.eq.s32.totalorder %s23, 11
      %p123 = por %p121, %p122
      %p125 = scmp.ne.s32.totalorder %s108, %s124
      %p126 = scmp.eq.s32.totalorder %s23, 0
      %p127 = por %p125, %p126
      %p128 = scmp.le.s32.totalorder 1, %s17
      %p129 = scmp.lt.s32.totalorder %s17, 13
      %p130 = pnand %p128, %p129
      %p131 = pneg %p130
      // Predicated region
      $region9: #{tpu_custom_call.1} parent=5 // pred_check
        _
      $region10: #{tpu_custom_call.1} parent=5 // pred_check_branch
        %133 = sbr.rel (%p130) target = $region12
      $region11: #{tpu_custom_call.1} parent=5 // pred_region
        %s134 = ssub.s32 %s17, 1
      $region12: #{tpu_custom_call.1} parent=5 // pred_fallthru
        _
      %p135 = scmp.lt.s32.totalorder %s17, 12
      // Predicated region
      $region13: #{tpu_custom_call.1} parent=5 // pred_check
        %p136 = pneg %p135
      $region14: #{tpu_custom_call.1} parent=5 // pred_check_branch
        %138 = sbr.rel (%p136) target = $region16
      $region15: #{tpu_custom_call.1} parent=5 // pred_region
        // Predicated region
        $region17: #{tpu_custom_call.1} parent=15 // pred_check
          %p139 = pneg %p58
        $region18: #{tpu_custom_call.1} parent=15 // pred_check_branch
          %141 = sbr.rel (%p139) target = $region20
        $region19: #{tpu_custom_call.1} parent=15 // pred_region
          %s142 = sand.u32 %s48, 1
          %s143 = scalar_lea.sflag [#allocation4], %s142
          %s144 = sand.u32 %s48, 1
          %s145 = smul.addr %s144, 2048
          %s146 = scalar_lea.vmem [#allocation3], %s145
          %s147 = smul.u32 64, %s24
          %s148 = smul.u32 4, %s26
          %150 = vsyncadd %s143, 0
          %s151 = smul.addr %s147, 8
          %s152 = sadd.s32 %s148, %s151
          %s153 = smul.addr %s152, 8
          %s154 = scalar_lea.hbm %s0, %s153
          %s155 = sshll.u32 %s154, 4
          %s156 = int_to_ptr.hbm [resolvable:$true] %s155
          %s157 = sshll.u32 %s146, 4
          %s158 = int_to_ptr.vmem [resolvable:$true] %s157
          %163 = dma.hbm_to_vmem [thread:$0]  %s156, 32768, %s158, %s143, 1024, 512, 32
        $region20: #{tpu_custom_call.1} parent=15 // pred_fallthru
          _
        // Predicated region
        $region21: #{tpu_custom_call.1} parent=15 // pred_check
          %p164 = pneg %p86
        $region22: #{tpu_custom_call.1} parent=15 // pred_check_branch
          %166 = sbr.rel (%p164) target = $region24
        $region23: #{tpu_custom_call.1} parent=15 // pred_region
          %s167 = sand.u32 %s76, 1
          %s168 = scalar_lea.sflag [#allocation7], %s167
          %s169 = sand.u32 %s76, 1
          %s170 = smul.addr %s169, 1024
          %s171 = scalar_lea.vmem [#allocation6], %s170
          %s172 = smul.u32 64, %s26
          %s173 = smul.u32 4, %s25
          %175 = vsyncadd %s168, 0
          %s176 = smul.addr %s172, 12
          %s177 = sadd.s32 %s173, %s176
          %s178 = smul.addr %s177, 4
          %s179 = scalar_lea.hbm %s1, %s178
          %s180 = sshll.u32 %s179, 4
          %s181 = int_to_ptr.hbm [resolvable:$true] %s180
          %s182 = sshll.u32 %s171, 4
          %s183 = int_to_ptr.vmem [resolvable:$true] %s182
          %188 = dma.hbm_to_vmem [thread:$0]  %s181, 16384, %s183, %s168, 768, 256, 16
        $region24: #{tpu_custom_call.1} parent=15 // pred_fallthru
          _
      $region16: #{tpu_custom_call.1} parent=5 // pred_fallthru
        _
      %p189 = scmp.le.s32.totalorder 1, %s17
      %p190 = scmp.lt.s32.totalorder %s17, 13
      %p191 = pnand %p189, %p190
      %p192 = pneg %p191
      // Predicated region
      $region25: #{tpu_custom_call.1} parent=5 // pred_check
        _
      $region26: #{tpu_custom_call.1} parent=5 // pred_check_branch
        %194 = sbr.rel (%p191) target = $region28
      $region27: #{tpu_custom_call.1} parent=5 // pred_region
        %s195 = ssub.s32 %s17, 1
        %s196 = sand.u32 %s51, 1
        %s197 = scalar_lea.sflag [#allocation4], %s196
        %s198 = sand.u32 %s51, 1
        %s199 = smul.addr %s198, 2048
        %s200 = scalar_lea.vmem [#allocation3], %s199
        // Predicated region
        $region29: #{tpu_custom_call.1} parent=27 // pred_check
          %p201 = pneg %p64
        $region30: #{tpu_custom_call.1} parent=27 // pred_check_branch
          %203 = sbr.rel (%p201) target = $region32
        $region31: #{tpu_custom_call.1} parent=27 // pred_region
          %205 = dma.done %s197, 32768
        $region32: #{tpu_custom_call.1} parent=27 // pred_fallthru
          _
        %s206 = sand.u32 %s79, 1
        %s207 = scalar_lea.sflag [#allocation7], %s206
        %s208 = sand.u32 %s79, 1
        %s209 = smul.addr %s208, 1024
        %s210 = scalar_lea.vmem [#allocation6], %s209
        // Predicated region
        $region33: #{tpu_custom_call.1} parent=27 // pred_check
          %p211 = pneg %p92
        $region34: #{tpu_custom_call.1} parent=27 // pred_check_branch
          %213 = sbr.rel (%p211) target = $region36
        $region35: #{tpu_custom_call.1} parent=27 // pred_region
          %215 = dma.done %s207, 16384
        $region36: #{tpu_custom_call.1} parent=27 // pred_fallthru
          _
        %s216 = sand.u32 %s51, 1
        %s217 = scalar_lea.sflag [#allocation4], %s216
        %s218 = sand.u32 %s51, 1
        %s219 = smul.addr %s218, 2048
        %s220 = scalar_lea.vmem [#allocation3], %s219
        %p221 = pneg %p64
        %p222 = pneg %p61
        %s223 = sand.u32 %s79, 1
        %s224 = scalar_lea.sflag [#allocation7], %s223
        %s225 = sand.u32 %s79, 1
        %s226 = smul.addr %s225, 1024
        %s227 = scalar_lea.vmem [#allocation6], %s226
        %p228 = pneg %p92
        %p229 = pneg %p89
        %p230 = pneg %p120
        %p231 = pneg %p117
        %s232 = sand.u32 %s107, 1
        %s233 = scalar_lea.sflag [#allocation5], %s232
        %s234 = sand.u32 %s107, 1
        %s235 = smul.addr %s234, 1024
        %s236 = scalar_lea.vmem [#allocation8], %s235
        %s237 = smul.u32 64, %s27
        %s238 = smul.u32 4, %s29
        %s239 = smul.u32 64, %s29
        %s240 = smul.u32 4, %s28
        %s241 = smul.u32 64, %s27
        %s242 = smul.u32 4, %s28
        %p243 = scmp.eq.s32.totalorder %s29, 0
        // Predicated region
        $region37: #{tpu_custom_call.1} parent=27 // pred_check
          %p244 = pneg %p243
        $region38: #{tpu_custom_call.1} parent=27 // pred_check_branch
          %246 = sbr.rel (%p244) target = $region40
        $region39: #{tpu_custom_call.1} parent=27 // pred_region
          %247 = vst [vmem:[#allocation2] sm:$0xff] 0.0
          %248 = vst [vmem:[#allocation2 + $0x8] sm:$0xff] 0.0
          %249 = vst [vmem:[#allocation2 + $0x10] sm:$0xff] 0.0
          %250 = vst [vmem:[#allocation2 + $0x18] sm:$0xff] 0.0
          %251 = vst [vmem:[#allocation2 + $0x20] sm:$0xff] 0.0
          %252 = vst [vmem:[#allocation2 + $0x28] sm:$0xff] 0.0
          %253 = vst [vmem:[#allocation2 + $0x30] sm:$0xff] 0.0
          %254 = vst [vmem:[#allocation2 + $0x38] sm:$0xff] 0.0
          %255 = vst [vmem:[#allocation2 + $0x40] sm:$0xff] 0.0
          %256 = vst [vmem:[#allocation2 + $0x48] sm:$0xff] 0.0
          %257 = vst [vmem:[#allocation2 + $0x50] sm:$0xff] 0.0
          %258 = vst [vmem:[#allocation2 + $0x58] sm:$0xff] 0.0
          %259 = vst [vmem:[#allocation2 + $0x60] sm:$0xff] 0.0
          %260 = vst [vmem:[#allocation2 + $0x68] sm:$0xff] 0.0
          %261 = vst [vmem:[#allocation2 + $0x70] sm:$0xff] 0.0
          %262 = vst [vmem:[#allocation2 + $0x78] sm:$0xff] 0.0
          %263 = vst [vmem:[#allocation2 + $0x80] sm:$0xff] 0.0
          %264 = vst [vmem:[#allocation2 + $0x88] sm:$0xff] 0.0
          %265 = vst [vmem:[#allocation2 + $0x90] sm:$0xff] 0.0
          %266 = vst [vmem:[#allocation2 + $0x98] sm:$0xff] 0.0
          %267 = vst [vmem:[#allocation2 + $0xa0] sm:$0xff] 0.0
          %268 = vst [vmem:[#allocation2 + $0xa8] sm:$0xff] 0.0
          %269 = vst [vmem:[#allocation2 + $0xb0] sm:$0xff] 0.0
          %270 = vst [vmem:[#allocation2 + $0xb8] sm:$0xff] 0.0
          %271 = vst [vmem:[#allocation2 + $0xc0] sm:$0xff] 0.0
          %272 = vst [vmem:[#allocation2 + $0xc8] sm:$0xff] 0.0
          %273 = vst [vmem:[#allocation2 + $0xd0] sm:$0xff] 0.0
          %274 = vst [vmem:[#allocation2 + $0xd8] sm:$0xff] 0.0
          %275 = vst [vmem:[#allocation2 + $0xe0] sm:$0xff] 0.0
          %276 = vst [vmem:[#allocation2 + $0xe8] sm:$0xff] 0.0
          %277 = vst [vmem:[#allocation2 + $0xf0] sm:$0xff] 0.0
          %278 = vst [vmem:[#allocation2 + $0xf8] sm:$0xff] 0.0
          %279 = vst [vmem:[#allocation2 + $0x100] sm:$0xff] 0.0
          %280 = vst [vmem:[#allocation2 + $0x108] sm:$0xff] 0.0
          %281 = vst [vmem:[#allocation2 + $0x110] sm:$0xff] 0.0
          %282 = vst [vmem:[#allocation2 + $0x118] sm:$0xff] 0.0
          %283 = vst [vmem:[#allocation2 + $0x120] sm:$0xff] 0.0
          %284 = vst [vmem:[#allocation2 + $0x128] sm:$0xff] 0.0
          %285 = vst [vmem:[#allocation2 + $0x130] sm:$0xff] 0.0
          %286 = vst [vmem:[#allocation2 + $0x138] sm:$0xff] 0.0
          %287 = vst [vmem:[#allocation2 + $0x140] sm:$0xff] 0.0
          %288 = vst [vmem:[#allocation2 + $0x148] sm:$0xff] 0.0
          %289 = vst [vmem:[#allocation2 + $0x150] sm:$0xff] 0.0
          %290 = vst [vmem:[#allocation2 + $0x158] sm:$0xff] 0.0
          %291 = vst [vmem:[#allocation2 + $0x160] sm:$0xff] 0.0
          %292 = vst [vmem:[#allocation2 + $0x168] sm:$0xff] 0.0
          %293 = vst [vmem:[#allocation2 + $0x170] sm:$0xff] 0.0
          %294 = vst [vmem:[#allocation2 + $0x178] sm:$0xff] 0.0
          %295 = vst [vmem:[#allocation2 + $0x180] sm:$0xff] 0.0
          %296 = vst [vmem:[#allocation2 + $0x188] sm:$0xff] 0.0
          %297 = vst [vmem:[#allocation2 + $0x190] sm:$0xff] 0.0
          %298 = vst [vmem:[#allocation2 + $0x198] sm:$0xff] 0.0
          %299 = vst [vmem:[#allocation2 + $0x1a0] sm:$0xff] 0.0
          %300 = vst [vmem:[#allocation2 + $0x1a8] sm:$0xff] 0.0
          %301 = vst [vmem:[#allocation2 + $0x1b0] sm:$0xff] 0.0
          %302 = vst [vmem:[#allocation2 + $0x1b8] sm:$0xff] 0.0
          %303 = vst [vmem:[#allocation2 + $0x1c0] sm:$0xff] 0.0
          %304 = vst [vmem:[#allocation2 + $0x1c8] sm:$0xff] 0.0
          %305 = vst [vmem:[#allocation2 + $0x1d0] sm:$0xff] 0.0
          %306 = vst [vmem:[#allocation2 + $0x1d8] sm:$0xff] 0.0
          %307 = vst [vmem:[#allocation2 + $0x1e0] sm:$0xff] 0.0
          %308 = vst [vmem:[#allocation2 + $0x1e8] sm:$0xff] 0.0
          %309 = vst [vmem:[#allocation2 + $0x1f0] sm:$0xff] 0.0
          %310 = vst [vmem:[#allocation2 + $0x1f8] sm:$0xff] 0.0
          %311 = vst [vmem:[#allocation2 + $0x200] sm:$0xff] 0.0
          %312 = vst [vmem:[#allocation2 + $0x208] sm:$0xff] 0.0
          %313 = vst [vmem:[#allocation2 + $0x210] sm:$0xff] 0.0
          %314 = vst [vmem:[#allocation2 + $0x218] sm:$0xff] 0.0
          %315 = vst [vmem:[#allocation2 + $0x220] sm:$0xff] 0.0
          %316 = vst [vmem:[#allocation2 + $0x228] sm:$0xff] 0.0
          %317 = vst [vmem:[#allocation2 + $0x230] sm:$0xff] 0.0
          %318 = vst [vmem:[#allocation2 + $0x238] sm:$0xff] 0.0
          %319 = vst [vmem:[#allocation2 + $0x240] sm:$0xff] 0.0
          %320 = vst [vmem:[#allocation2 + $0x248] sm:$0xff] 0.0
          %321 = vst [vmem:[#allocation2 + $0x250] sm:$0xff] 0.0
          %322 = vst [vmem:[#allocation2 + $0x258] sm:$0xff] 0.0
          %323 = vst [vmem:[#allocation2 + $0x260] sm:$0xff] 0.0
          %324 = vst [vmem:[#allocation2 + $0x268] sm:$0xff] 0.0
          %325 = vst [vmem:[#allocation2 + $0x270] sm:$0xff] 0.0
          %326 = vst [vmem:[#allocation2 + $0x278] sm:$0xff] 0.0
          %327 = vst [vmem:[#allocation2 + $0x280] sm:$0xff] 0.0
          %328 = vst [vmem:[#allocation2 + $0x288] sm:$0xff] 0.0
          %329 = vst [vmem:[#allocation2 + $0x290] sm:$0xff] 0.0
          %330 = vst [vmem:[#allocation2 + $0x298] sm:$0xff] 0.0
          %331 = vst [vmem:[#allocation2 + $0x2a0] sm:$0xff] 0.0
          %332 = vst [vmem:[#allocation2 + $0x2a8] sm:$0xff] 0.0
          %333 = vst [vmem:[#allocation2 + $0x2b0] sm:$0xff] 0.0
          %334 = vst [vmem:[#allocation2 + $0x2b8] sm:$0xff] 0.0
          %335 = vst [vmem:[#allocation2 + $0x2c0] sm:$0xff] 0.0
          %336 = vst [vmem:[#allocation2 + $0x2c8] sm:$0xff] 0.0
          %337 = vst [vmem:[#allocation2 + $0x2d0] sm:$0xff] 0.0
          %338 = vst [vmem:[#allocation2 + $0x2d8] sm:$0xff] 0.0
          %339 = vst [vmem:[#allocation2 + $0x2e0] sm:$0xff] 0.0
          %340 = vst [vmem:[#allocation2 + $0x2e8] sm:$0xff] 0.0
          %341 = vst [vmem:[#allocation2 + $0x2f0] sm:$0xff] 0.0
          %342 = vst [vmem:[#allocation2 + $0x2f8] sm:$0xff] 0.0
          %343 = vst [vmem:[#allocation2 + $0x300] sm:$0xff] 0.0
          %344 = vst [vmem:[#allocation2 + $0x308] sm:$0xff] 0.0
          %345 = vst [vmem:[#allocation2 + $0x310] sm:$0xff] 0.0
          %346 = vst [vmem:[#allocation2 + $0x318] sm:$0xff] 0.0
          %347 = vst [vmem:[#allocation2 + $0x320] sm:$0xff] 0.0
          %348 = vst [vmem:[#allocation2 + $0x328] sm:$0xff] 0.0
          %349 = vst [vmem:[#allocation2 + $0x330] sm:$0xff] 0.0
          %350 = vst [vmem:[#allocation2 + $0x338] sm:$0xff] 0.0
          %351 = vst [vmem:[#allocation2 + $0x340] sm:$0xff] 0.0
          %352 = vst [vmem:[#allocation2 + $0x348] sm:$0xff] 0.0
          %353 = vst [vmem:[#allocation2 + $0x350] sm:$0xff] 0.0
          %354 = vst [vmem:[#allocation2 + $0x358] sm:$0xff] 0.0
          %355 = vst [vmem:[#allocation2 + $0x360] sm:$0xff] 0.0
          %356 = vst [vmem:[#allocation2 + $0x368] sm:$0xff] 0.0
          %357 = vst [vmem:[#allocation2 + $0x370] sm:$0xff] 0.0
          %358 = vst [vmem:[#allocation2 + $0x378] sm:$0xff] 0.0
          %359 = vst [vmem:[#allocation2 + $0x380] sm:$0xff] 0.0
          %360 = vst [vmem:[#allocation2 + $0x388] sm:$0xff] 0.0
          %361 = vst [vmem:[#allocation2 + $0x390] sm:$0xff] 0.0
          %362 = vst [vmem:[#allocation2 + $0x398] sm:$0xff] 0.0
          %363 = vst [vmem:[#allocation2 + $0x3a0] sm:$0xff] 0.0
          %364 = vst [vmem:[#allocation2 + $0x3a8] sm:$0xff] 0.0
          %365 = vst [vmem:[#allocation2 + $0x3b0] sm:$0xff] 0.0
          %366 = vst [vmem:[#allocation2 + $0x3b8] sm:$0xff] 0.0
          %367 = vst [vmem:[#allocation2 + $0x3c0] sm:$0xff] 0.0
          %368 = vst [vmem:[#allocation2 + $0x3c8] sm:$0xff] 0.0
          %369 = vst [vmem:[#allocation2 + $0x3d0] sm:$0xff] 0.0
          %370 = vst [vmem:[#allocation2 + $0x3d8] sm:$0xff] 0.0
          %371 = vst [vmem:[#allocation2 + $0x3e0] sm:$0xff] 0.0
          %372 = vst [vmem:[#allocation2 + $0x3e8] sm:$0xff] 0.0
          %373 = vst [vmem:[#allocation2 + $0x3f0] sm:$0xff] 0.0
          %374 = vst [vmem:[#allocation2 + $0x3f8] sm:$0xff] 0.0
          %375 = vst [vmem:[#allocation2 + $0x400] sm:$0xff] 0.0
          %376 = vst [vmem:[#allocation2 + $0x408] sm:$0xff] 0.0
          %377 = vst [vmem:[#allocation2 + $0x410] sm:$0xff] 0.0
          %378 = vst [vmem:[#allocation2 + $0x418] sm:$0xff] 0.0
          %379 = vst [vmem:[#allocation2 + $0x420] sm:$0xff] 0.0
          %380 = vst [vmem:[#allocation2 + $0x428] sm:$0xff] 0.0
          %381 = vst [vmem:[#allocation2 + $0x430] sm:$0xff] 0.0
          %382 = vst [vmem:[#allocation2 + $0x438] sm:$0xff] 0.0
          %383 = vst [vmem:[#allocation2 + $0x440] sm:$0xff] 0.0
          %384 = vst [vmem:[#allocation2 + $0x448] sm:$0xff] 0.0
          %385 = vst [vmem:[#allocation2 + $0x450] sm:$0xff] 0.0
          %386 = vst [vmem:[#allocation2 + $0x458] sm:$0xff] 0.0
          %387 = vst [vmem:[#allocation2 + $0x460] sm:$0xff] 0.0
          %388 = vst [vmem:[#allocation2 + $0x468] sm:$0xff] 0.0
          %389 = vst [vmem:[#allocation2 + $0x470] sm:$0xff] 0.0
          %390 = vst [vmem:[#allocation2 + $0x478] sm:$0xff] 0.0
          %391 = vst [vmem:[#allocation2 + $0x480] sm:$0xff] 0.0
          %392 = vst [vmem:[#allocation2 + $0x488] sm:$0xff] 0.0
          %393 = vst [vmem:[#allocation2 + $0x490] sm:$0xff] 0.0
          %394 = vst [vmem:[#allocation2 + $0x498] sm:$0xff] 0.0
          %395 = vst [vmem:[#allocation2 + $0x4a0] sm:$0xff] 0.0
          %396 = vst [vmem:[#allocation2 + $0x4a8] sm:$0xff] 0.0
          %397 = vst [vmem:[#allocation2 + $0x4b0] sm:$0xff] 0.0
          %398 = vst [vmem:[#allocation2 + $0x4b8] sm:$0xff] 0.0
          %399 = vst [vmem:[#allocation2 + $0x4c0] sm:$0xff] 0.0
          %400 = vst [vmem:[#allocation2 + $0x4c8] sm:$0xff] 0.0
          %401 = vst [vmem:[#allocation2 + $0x4d0] sm:$0xff] 0.0
          %402 = vst [vmem:[#allocation2 + $0x4d8] sm:$0xff] 0.0
          %403 = vst [vmem:[#allocation2 + $0x4e0] sm:$0xff] 0.0
          %404 = vst [vmem:[#allocation2 + $0x4e8] sm:$0xff] 0.0
          %405 = vst [vmem:[#allocation2 + $0x4f0] sm:$0xff] 0.0
          %406 = vst [vmem:[#allocation2 + $0x4f8] sm:$0xff] 0.0
          %407 = vst [vmem:[#allocation2 + $0x500] sm:$0xff] 0.0
          %408 = vst [vmem:[#allocation2 + $0x508] sm:$0xff] 0.0
          %409 = vst [vmem:[#allocation2 + $0x510] sm:$0xff] 0.0
          %410 = vst [vmem:[#allocation2 + $0x518] sm:$0xff] 0.0
          %411 = vst [vmem:[#allocation2 + $0x520] sm:$0xff] 0.0
          %412 = vst [vmem:[#allocation2 + $0x528] sm:$0xff] 0.0
          %413 = vst [vmem:[#allocation2 + $0x530] sm:$0xff] 0.0
          %414 = vst [vmem:[#allocation2 + $0x538] sm:$0xff] 0.0
          %415 = vst [vmem:[#allocation2 + $0x540] sm:$0xff] 0.0
          %416 = vst [vmem:[#allocation2 + $0x548] sm:$0xff] 0.0
          %417 = vst [vmem:[#allocation2 + $0x550] sm:$0xff] 0.0
          %418 = vst [vmem:[#allocation2 + $0x558] sm:$0xff] 0.0
          %419 = vst [vmem:[#allocation2 + $0x560] sm:$0xff] 0.0
          %420 = vst [vmem:[#allocation2 + $0x568] sm:$0xff] 0.0
          %421 = vst [vmem:[#allocation2 + $0x570] sm:$0xff] 0.0
          %422 = vst [vmem:[#allocation2 + $0x578] sm:$0xff] 0.0
          %423 = vst [vmem:[#allocation2 + $0x580] sm:$0xff] 0.0
          %424 = vst [vmem:[#allocation2 + $0x588] sm:$0xff] 0.0
          %425 = vst [vmem:[#allocation2 + $0x590] sm:$0xff] 0.0
          %426 = vst [vmem:[#allocation2 + $0x598] sm:$0xff] 0.0
          %427 = vst [vmem:[#allocation2 + $0x5a0] sm:$0xff] 0.0
          %428 = vst [vmem:[#allocation2 + $0x5a8] sm:$0xff] 0.0
          %429 = vst [vmem:[#allocation2 + $0x5b0] sm:$0xff] 0.0
          %430 = vst [vmem:[#allocation2 + $0x5b8] sm:$0xff] 0.0
          %431 = vst [vmem:[#allocation2 + $0x5c0] sm:$0xff] 0.0
          %432 = vst [vmem:[#allocation2 + $0x5c8] sm:$0xff] 0.0
          %433 = vst [vmem:[#allocation2 + $0x5d0] sm:$0xff] 0.0
          %434 = vst [vmem:[#allocation2 + $0x5d8] sm:$0xff] 0.0
          %435 = vst [vmem:[#allocation2 + $0x5e0] sm:$0xff] 0.0
          %436 = vst [vmem:[#allocation2 + $0x5e8] sm:$0xff] 0.0
          %437 = vst [vmem:[#allocation2 + $0x5f0] sm:$0xff] 0.0
          %438 = vst [vmem:[#allocation2 + $0x5f8] sm:$0xff] 0.0
          %439 = vst [vmem:[#allocation2 + $0x600] sm:$0xff] 0.0
          %440 = vst [vmem:[#allocation2 + $0x608] sm:$0xff] 0.0
          %441 = vst [vmem:[#allocation2 + $0x610] sm:$0xff] 0.0
          %442 = vst [vmem:[#allocation2 + $0x618] sm:$0xff] 0.0
          %443 = vst [vmem:[#allocation2 + $0x620] sm:$0xff] 0.0
          %444 = vst [vmem:[#allocation2 + $0x628] sm:$0xff] 0.0
          %445 = vst [vmem:[#allocation2 + $0x630] sm:$0xff] 0.0
          %446 = vst [vmem:[#allocation2 + $0x638] sm:$0xff] 0.0
          %447 = vst [vmem:[#allocation2 + $0x640] sm:$0xff] 0.0
          %448 = vst [vmem:[#allocation2 + $0x648] sm:$0xff] 0.0
          %449 = vst [vmem:[#allocation2 + $0x650] sm:$0xff] 0.0
          %450 = vst [vmem:[#allocation2 + $0x658] sm:$0xff] 0.0
          %451 = vst [vmem:[#allocation2 + $0x660] sm:$0xff] 0.0
          %452 = vst [vmem:[#allocation2 + $0x668] sm:$0xff] 0.0
          %453 = vst [vmem:[#allocation2 + $0x670] sm:$0xff] 0.0
          %454 = vst [vmem:[#allocation2 + $0x678] sm:$0xff] 0.0
          %455 = vst [vmem:[#allocation2 + $0x680] sm:$0xff] 0.0
          %456 = vst [vmem:[#allocation2 + $0x688] sm:$0xff] 0.0
          %457 = vst [vmem:[#allocation2 + $0x690] sm:$0xff] 0.0
          %458 = vst [vmem:[#allocation2 + $0x698] sm:$0xff] 0.0
          %459 = vst [vmem:[#allocation2 + $0x6a0] sm:$0xff] 0.0
          %460 = vst [vmem:[#allocation2 + $0x6a8] sm:$0xff] 0.0
          %461 = vst [vmem:[#allocation2 + $0x6b0] sm:$0xff] 0.0
          %462 = vst [vmem:[#allocation2 + $0x6b8] sm:$0xff] 0.0
          %463 = vst [vmem:[#allocation2 + $0x6c0] sm:$0xff] 0.0
          %464 = vst [vmem:[#allocation2 + $0x6c8] sm:$0xff] 0.0
          %465 = vst [vmem:[#allocation2 + $0x6d0] sm:$0xff] 0.0
          %466 = vst [vmem:[#allocation2 + $0x6d8] sm:$0xff] 0.0
          %467 = vst [vmem:[#allocation2 + $0x6e0] sm:$0xff] 0.0
          %468 = vst [vmem:[#allocation2 + $0x6e8] sm:$0xff] 0.0
          %469 = vst [vmem:[#allocation2 + $0x6f0] sm:$0xff] 0.0
          %470 = vst [vmem:[#allocation2 + $0x6f8] sm:$0xff] 0.0
          %471 = vst [vmem:[#allocation2 + $0x700] sm:$0xff] 0.0
          %472 = vst [vmem:[#allocation2 + $0x708] sm:$0xff] 0.0
          %473 = vst [vmem:[#allocation2 + $0x710] sm:$0xff] 0.0
          %474 = vst [vmem:[#allocation2 + $0x718] sm:$0xff] 0.0
          %475 = vst [vmem:[#allocation2 + $0x720] sm:$0xff] 0.0
          %476 = vst [vmem:[#allocation2 + $0x728] sm:$0xff] 0.0
          %477 = vst [vmem:[#allocation2 + $0x730] sm:$0xff] 0.0
          %478 = vst [vmem:[#allocation2 + $0x738] sm:$0xff] 0.0
          %479 = vst [vmem:[#allocation2 + $0x740] sm:$0xff] 0.0
          %480 = vst [vmem:[#allocation2 + $0x748] sm:$0xff] 0.0
          %481 = vst [vmem:[#allocation2 + $0x750] sm:$0xff] 0.0
          %482 = vst [vmem:[#allocation2 + $0x758] sm:$0xff] 0.0
          %483 = vst [vmem:[#allocation2 + $0x760] sm:$0xff] 0.0
          %484 = vst [vmem:[#allocation2 + $0x768] sm:$0xff] 0.0
          %485 = vst [vmem:[#allocation2 + $0x770] sm:$0xff] 0.0
          %486 = vst [vmem:[#allocation2 + $0x778] sm:$0xff] 0.0
          %487 = vst [vmem:[#allocation2 + $0x780] sm:$0xff] 0.0
          %488 = vst [vmem:[#allocation2 + $0x788] sm:$0xff] 0.0
          %489 = vst [vmem:[#allocation2 + $0x790] sm:$0xff] 0.0
          %490 = vst [vmem:[#allocation2 + $0x798] sm:$0xff] 0.0
          %491 = vst [vmem:[#allocation2 + $0x7a0] sm:$0xff] 0.0
          %492 = vst [vmem:[#allocation2 + $0x7a8] sm:$0xff] 0.0
          %493 = vst [vmem:[#allocation2 + $0x7b0] sm:$0xff] 0.0
          %494 = vst [vmem:[#allocation2 + $0x7b8] sm:$0xff] 0.0
          %495 = vst [vmem:[#allocation2 + $0x7c0] sm:$0xff] 0.0
          %496 = vst [vmem:[#allocation2 + $0x7c8] sm:$0xff] 0.0
          %497 = vst [vmem:[#allocation2 + $0x7d0] sm:$0xff] 0.0
          %498 = vst [vmem:[#allocation2 + $0x7d8] sm:$0xff] 0.0
          %499 = vst [vmem:[#allocation2 + $0x7e0] sm:$0xff] 0.0
          %500 = vst [vmem:[#allocation2 + $0x7e8] sm:$0xff] 0.0
          %501 = vst [vmem:[#allocation2 + $0x7f0] sm:$0xff] 0.0
          %502 = vst [vmem:[#allocation2 + $0x7f8] sm:$0xff] 0.0
        $region40: #{tpu_custom_call.1} parent=27 // pred_fallthru
          _
        %v503 = vld [vmem:[#allocation2] sm:$0xff]
        %v504 = vld [vmem:[#allocation2 + $0x8] sm:$0xff]
        %v505 = vld [vmem:[#allocation2 + $0x10] sm:$0xff]
        %v506 = vld [vmem:[#allocation2 + $0x18] sm:$0xff]
        %v507 = vld [vmem:[#allocation2 + $0x20] sm:$0xff]
        %v508 = vld [vmem:[#allocation2 + $0x28] sm:$0xff]
        %v509 = vld [vmem:[#allocation2 + $0x30] sm:$0xff]
        %v510 = vld [vmem:[#allocation2 + $0x38] sm:$0xff]
        %v511 = vld [vmem:[#allocation2 + $0x40] sm:$0xff]
        %v512 = vld [vmem:[#allocation2 + $0x48] sm:$0xff]
        %v513 = vld [vmem:[#allocation2 + $0x50] sm:$0xff]
        %v514 = vld [vmem:[#allocation2 + $0x58] sm:$0xff]
        %v515 = vld [vmem:[#allocation2 + $0x60] sm:$0xff]
        %v516 = vld [vmem:[#allocation2 + $0x68] sm:$0xff]
        %v517 = vld [vmem:[#allocation2 + $0x70] sm:$0xff]
        %v518 = vld [vmem:[#allocation2 + $0x78] sm:$0xff]
        %v519 = vld [vmem:[#allocation2 + $0x80] sm:$0xff]
        %v520 = vld [vmem:[#allocation2 + $0x88] sm:$0xff]
        %v521 = vld [vmem:[#allocation2 + $0x90] sm:$0xff]
        %v522 = vld [vmem:[#allocation2 + $0x98] sm:$0xff]
        %v523 = vld [vmem:[#allocation2 + $0xa0] sm:$0xff]
        %v524 = vld [vmem:[#allocation2 + $0xa8] sm:$0xff]
        %v525 = vld [vmem:[#allocation2 + $0xb0] sm:$0xff]
        %v526 = vld [vmem:[#allocation2 + $0xb8] sm:$0xff]
        %v527 = vld [vmem:[#allocation2 + $0xc0] sm:$0xff]
        %v528 = vld [vmem:[#allocation2 + $0xc8] sm:$0xff]
        %v529 = vld [vmem:[#allocation2 + $0xd0] sm:$0xff]
        %v530 = vld [vmem:[#allocation2 + $0xd8] sm:$0xff]
        %v531 = vld [vmem:[#allocation2 + $0xe0] sm:$0xff]
        %v532 = vld [vmem:[#allocation2 + $0xe8] sm:$0xff]
        %v533 = vld [vmem:[#allocation2 + $0xf0] sm:$0xff]
        %v534 = vld [vmem:[#allocation2 + $0xf8] sm:$0xff]
        %v535 = vld [vmem:[#allocation2 + $0x100] sm:$0xff]
        %v536 = vld [vmem:[#allocation2 + $0x108] sm:$0xff]
        %v537 = vld [vmem:[#allocation2 + $0x110] sm:$0xff]
        %v538 = vld [vmem:[#allocation2 + $0x118] sm:$0xff]
        %v539 = vld [vmem:[#allocation2 + $0x120] sm:$0xff]
        %v540 = vld [vmem:[#allocation2 + $0x128] sm:$0xff]
        %v541 = vld [vmem:[#allocation2 + $0x130] sm:$0xff]
        %v542 = vld [vmem:[#allocation2 + $0x138] sm:$0xff]
        %v543 = vld [vmem:[#allocation2 + $0x140] sm:$0xff]
        %v544 = vld [vmem:[#allocation2 + $0x148] sm:$0xff]
        %v545 = vld [vmem:[#allocation2 + $0x150] sm:$0xff]
        %v546 = vld [vmem:[#allocation2 + $0x158] sm:$0xff]
        %v547 = vld [vmem:[#allocation2 + $0x160] sm:$0xff]
        %v548 = vld [vmem:[#allocation2 + $0x168] sm:$0xff]
        %v549 = vld [vmem:[#allocation2 + $0x170] sm:$0xff]
        %v550 = vld [vmem:[#allocation2 + $0x178] sm:$0xff]
        %v551 = vld [vmem:[#allocation2 + $0x180] sm:$0xff]
        %v552 = vld [vmem:[#allocation2 + $0x188] sm:$0xff]
        %v553 = vld [vmem:[#allocation2 + $0x190] sm:$0xff]
        %v554 = vld [vmem:[#allocation2 + $0x198] sm:$0xff]
        %v555 = vld [vmem:[#allocation2 + $0x1a0] sm:$0xff]
        %v556 = vld [vmem:[#allocation2 + $0x1a8] sm:$0xff]
        %v557 = vld [vmem:[#allocation2 + $0x1b0] sm:$0xff]
        %v558 = vld [vmem:[#allocation2 + $0x1b8] sm:$0xff]
        %v559 = vld [vmem:[#allocation2 + $0x1c0] sm:$0xff]
        %v560 = vld [vmem:[#allocation2 + $0x1c8] sm:$0xff]
        %v561 = vld [vmem:[#allocation2 + $0x1d0] sm:$0xff]
        %v562 = vld [vmem:[#allocation2 + $0x1d8] sm:$0xff]
        %v563 = vld [vmem:[#allocation2 + $0x1e0] sm:$0xff]
        %v564 = vld [vmem:[#allocation2 + $0x1e8] sm:$0xff]
        %v565 = vld [vmem:[#allocation2 + $0x1f0] sm:$0xff]
        %v566 = vld [vmem:[#allocation2 + $0x1f8] sm:$0xff]
        %v567 = vld [vmem:[#allocation2 + $0x200] sm:$0xff]
        %v568 = vld [vmem:[#allocation2 + $0x208] sm:$0xff]
        %v569 = vld [vmem:[#allocation2 + $0x210] sm:$0xff]
        %v570 = vld [vmem:[#allocation2 + $0x218] sm:$0xff]
        %v571 = vld [vmem:[#allocation2 + $0x220] sm:$0xff]
        %v572 = vld [vmem:[#allocation2 + $0x228] sm:$0xff]
        %v573 = vld [vmem:[#allocation2 + $0x230] sm:$0xff]
        %v574 = vld [vmem:[#allocation2 + $0x238] sm:$0xff]
        %v575 = vld [vmem:[#allocation2 + $0x240] sm:$0xff]
        %v576 = vld [vmem:[#allocation2 + $0x248] sm:$0xff]
        %v577 = vld [vmem:[#allocation2 + $0x250] sm:$0xff]
        %v578 = vld [vmem:[#allocation2 + $0x258] sm:$0xff]
        %v579 = vld [vmem:[#allocation2 + $0x260] sm:$0xff]
        %v580 = vld [vmem:[#allocation2 + $0x268] sm:$0xff]
        %v581 = vld [vmem:[#allocation2 + $0x270] sm:$0xff]
        %v582 = vld [vmem:[#allocation2 + $0x278] sm:$0xff]
        %v583 = vld [vmem:[#allocation2 + $0x280] sm:$0xff]
        %v584 = vld [vmem:[#allocation2 + $0x288] sm:$0xff]
        %v585 = vld [vmem:[#allocation2 + $0x290] sm:$0xff]
        %v586 = vld [vmem:[#allocation2 + $0x298] sm:$0xff]
        %v587 = vld [vmem:[#allocation2 + $0x2a0] sm:$0xff]
        %v588 = vld [vmem:[#allocation2 + $0x2a8] sm:$0xff]
        %v589 = vld [vmem:[#allocation2 + $0x2b0] sm:$0xff]
        %v590 = vld [vmem:[#allocation2 + $0x2b8] sm:$0xff]
        %v591 = vld [vmem:[#allocation2 + $0x2c0] sm:$0xff]
        %v592 = vld [vmem:[#allocation2 + $0x2c8] sm:$0xff]
        %v593 = vld [vmem:[#allocation2 + $0x2d0] sm:$0xff]
        %v594 = vld [vmem:[#allocation2 + $0x2d8] sm:$0xff]
        %v595 = vld [vmem:[#allocation2 + $0x2e0] sm:$0xff]
        %v596 = vld [vmem:[#allocation2 + $0x2e8] sm:$0xff]
        %v597 = vld [vmem:[#allocation2 + $0x2f0] sm:$0xff]
        %v598 = vld [vmem:[#allocation2 + $0x2f8] sm:$0xff]
        %v599 = vld [vmem:[#allocation2 + $0x300] sm:$0xff]
        %v600 = vld [vmem:[#allocation2 + $0x308] sm:$0xff]
        %v601 = vld [vmem:[#allocation2 + $0x310] sm:$0xff]
        %v602 = vld [vmem:[#allocation2 + $0x318] sm:$0xff]
        %v603 = vld [vmem:[#allocation2 + $0x320] sm:$0xff]
        %v604 = vld [vmem:[#allocation2 + $0x328] sm:$0xff]
        %v605 = vld [vmem:[#allocation2 + $0x330] sm:$0xff]
        %v606 = vld [vmem:[#allocation2 + $0x338] sm:$0xff]
        %v607 = vld [vmem:[#allocation2 + $0x340] sm:$0xff]
        %v608 = vld [vmem:[#allocation2 + $0x348] sm:$0xff]
        %v609 = vld [vmem:[#allocation2 + $0x350] sm:$0xff]
        %v610 = vld [vmem:[#allocation2 + $0x358] sm:$0xff]
        %v611 = vld [vmem:[#allocation2 + $0x360] sm:$0xff]
        %v612 = vld [vmem:[#allocation2 + $0x368] sm:$0xff]
        %v613 = vld [vmem:[#allocation2 + $0x370] sm:$0xff]
        %v614 = vld [vmem:[#allocation2 + $0x378] sm:$0xff]
        %v615 = vld [vmem:[#allocation2 + $0x380] sm:$0xff]
        %v616 = vld [vmem:[#allocation2 + $0x388] sm:$0xff]
        %v617 = vld [vmem:[#allocation2 + $0x390] sm:$0xff]
        %v618 = vld [vmem:[#allocation2 + $0x398] sm:$0xff]
        %v619 = vld [vmem:[#allocation2 + $0x3a0] sm:$0xff]
        %v620 = vld [vmem:[#allocation2 + $0x3a8] sm:$0xff]
        %v621 = vld [vmem:[#allocation2 + $0x3b0] sm:$0xff]
        %v622 = vld [vmem:[#allocation2 + $0x3b8] sm:$0xff]
        %v623 = vld [vmem:[#allocation2 + $0x3c0] sm:$0xff]
        %v624 = vld [vmem:[#allocation2 + $0x3c8] sm:$0xff]
        %v625 = vld [vmem:[#allocation2 + $0x3d0] sm:$0xff]
        %v626 = vld [vmem:[#allocation2 + $0x3d8] sm:$0xff]
        %v627 = vld [vmem:[#allocation2 + $0x3e0] sm:$0xff]
        %v628 = vld [vmem:[#allocation2 + $0x3e8] sm:$0xff]
        %v629 = vld [vmem:[#allocation2 + $0x3f0] sm:$0xff]
        %v630 = vld [vmem:[#allocation2 + $0x3f8] sm:$0xff]
        %v631 = vld [vmem:[#allocation2 + $0x400] sm:$0xff]
        %v632 = vld [vmem:[#allocation2 + $0x408] sm:$0xff]
        %v633 = vld [vmem:[#allocation2 + $0x410] sm:$0xff]
        %v634 = vld [vmem:[#allocation2 + $0x418] sm:$0xff]
        %v635 = vld [vmem:[#allocation2 + $0x420] sm:$0xff]
        %v636 = vld [vmem:[#allocation2 + $0x428] sm:$0xff]
        %v637 = vld [vmem:[#allocation2 + $0x430] sm:$0xff]
        %v638 = vld [vmem:[#allocation2 + $0x438] sm:$0xff]
        %v639 = vld [vmem:[#allocation2 + $0x440] sm:$0xff]
        %v640 = vld [vmem:[#allocation2 + $0x448] sm:$0xff]
        %v641 = vld [vmem:[#allocation2 + $0x450] sm:$0xff]
        %v642 = vld [vmem:[#allocation2 + $0x458] sm:$0xff]
        %v643 = vld [vmem:[#allocation2 + $0x460] sm:$0xff]
        %v644 = vld [vmem:[#allocation2 + $0x468] sm:$0xff]
        %v645 = vld [vmem:[#allocation2 + $0x470] sm:$0xff]
        %v646 = vld [vmem:[#allocation2 + $0x478] sm:$0xff]
        %v647 = vld [vmem:[#allocation2 + $0x480] sm:$0xff]
        %v648 = vld [vmem:[#allocation2 + $0x488] sm:$0xff]
        %v649 = vld [vmem:[#allocation2 + $0x490] sm:$0xff]
        %v650 = vld [vmem:[#allocation2 + $0x498] sm:$0xff]
        %v651 = vld [vmem:[#allocation2 + $0x4a0] sm:$0xff]
        %v652 = vld [vmem:[#allocation2 + $0x4a8] sm:$0xff]
        %v653 = vld [vmem:[#allocation2 + $0x4b0] sm:$0xff]
        %v654 = vld [vmem:[#allocation2 + $0x4b8] sm:$0xff]
        %v655 = vld [vmem:[#allocation2 + $0x4c0] sm:$0xff]
        %v656 = vld [vmem:[#allocation2 + $0x4c8] sm:$0xff]
        %v657 = vld [vmem:[#allocation2 + $0x4d0] sm:$0xff]
        %v658 = vld [vmem:[#allocation2 + $0x4d8] sm:$0xff]
        %v659 = vld [vmem:[#allocation2 + $0x4e0] sm:$0xff]
        %v660 = vld [vmem:[#allocation2 + $0x4e8] sm:$0xff]
        %v661 = vld [vmem:[#allocation2 + $0x4f0] sm:$0xff]
        %v662 = vld [vmem:[#allocation2 + $0x4f8] sm:$0xff]
        %v663 = vld [vmem:[#allocation2 + $0x500] sm:$0xff]
        %v664 = vld [vmem:[#allocation2 + $0x508] sm:$0xff]
        %v665 = vld [vmem:[#allocation2 + $0x510] sm:$0xff]
        %v666 = vld [vmem:[#allocation2 + $0x518] sm:$0xff]
        %v667 = vld [vmem:[#allocation2 + $0x520] sm:$0xff]
        %v668 = vld [vmem:[#allocation2 + $0x528] sm:$0xff]
        %v669 = vld [vmem:[#allocation2 + $0x530] sm:$0xff]
        %v670 = vld [vmem:[#allocation2 + $0x538] sm:$0xff]
        %v671 = vld [vmem:[#allocation2 + $0x540] sm:$0xff]
        %v672 = vld [vmem:[#allocation2 + $0x548] sm:$0xff]
        %v673 = vld [vmem:[#allocation2 + $0x550] sm:$0xff]
        %v674 = vld [vmem:[#allocation2 + $0x558] sm:$0xff]
        %v675 = vld [vmem:[#allocation2 + $0x560] sm:$0xff]
        %v676 = vld [vmem:[#allocation2 + $0x568] sm:$0xff]
        %v677 = vld [vmem:[#allocation2 + $0x570] sm:$0xff]
        %v678 = vld [vmem:[#allocation2 + $0x578] sm:$0xff]
        %v679 = vld [vmem:[#allocation2 + $0x580] sm:$0xff]
        %v680 = vld [vmem:[#allocation2 + $0x588] sm:$0xff]
        %v681 = vld [vmem:[#allocation2 + $0x590] sm:$0xff]
        %v682 = vld [vmem:[#allocation2 + $0x598] sm:$0xff]
        %v683 = vld [vmem:[#allocation2 + $0x5a0] sm:$0xff]
        %v684 = vld [vmem:[#allocation2 + $0x5a8] sm:$0xff]
        %v685 = vld [vmem:[#allocation2 + $0x5b0] sm:$0xff]
        %v686 = vld [vmem:[#allocation2 + $0x5b8] sm:$0xff]
        %v687 = vld [vmem:[#allocation2 + $0x5c0] sm:$0xff]
        %v688 = vld [vmem:[#allocation2 + $0x5c8] sm:$0xff]
        %v689 = vld [vmem:[#allocation2 + $0x5d0] sm:$0xff]
        %v690 = vld [vmem:[#allocation2 + $0x5d8] sm:$0xff]
        %v691 = vld [vmem:[#allocation2 + $0x5e0] sm:$0xff]
        %v692 = vld [vmem:[#allocation2 + $0x5e8] sm:$0xff]
        %v693 = vld [vmem:[#allocation2 + $0x5f0] sm:$0xff]
        %v694 = vld [vmem:[#allocation2 + $0x5f8] sm:$0xff]
        %v695 = vld [vmem:[#allocation2 + $0x600] sm:$0xff]
        %v696 = vld [vmem:[#allocation2 + $0x608] sm:$0xff]
        %v697 = vld [vmem:[#allocation2 + $0x610] sm:$0xff]
        %v698 = vld [vmem:[#allocation2 + $0x618] sm:$0xff]
        %v699 = vld [vmem:[#allocation2 + $0x620] sm:$0xff]
        %v700 = vld [vmem:[#allocation2 + $0x628] sm:$0xff]
        %v701 = vld [vmem:[#allocation2 + $0x630] sm:$0xff]
        %v702 = vld [vmem:[#allocation2 + $0x638] sm:$0xff]
        %v703 = vld [vmem:[#allocation2 + $0x640] sm:$0xff]
        %v704 = vld [vmem:[#allocation2 + $0x648] sm:$0xff]
        %v705 = vld [vmem:[#allocation2 + $0x650] sm:$0xff]
        %v706 = vld [vmem:[#allocation2 + $0x658] sm:$0xff]
        %v707 = vld [vmem:[#allocation2 + $0x660] sm:$0xff]
        %v708 = vld [vmem:[#allocation2 + $0x668] sm:$0xff]
        %v709 = vld [vmem:[#allocation2 + $0x670] sm:$0xff]
        %v710 = vld [vmem:[#allocation2 + $0x678] sm:$0xff]
        %v711 = vld [vmem:[#allocation2 + $0x680] sm:$0xff]
        %v712 = vld [vmem:[#allocation2 + $0x688] sm:$0xff]
        %v713 = vld [vmem:[#allocation2 + $0x690] sm:$0xff]
        %v714 = vld [vmem:[#allocation2 + $0x698] sm:$0xff]
        %v715 = vld [vmem:[#allocation2 + $0x6a0] sm:$0xff]
        %v716 = vld [vmem:[#allocation2 + $0x6a8] sm:$0xff]
        %v717 = vld [vmem:[#allocation2 + $0x6b0] sm:$0xff]
        %v718 = vld [vmem:[#allocation2 + $0x6b8] sm:$0xff]
        %v719 = vld [vmem:[#allocation2 + $0x6c0] sm:$0xff]
        %v720 = vld [vmem:[#allocation2 + $0x6c8] sm:$0xff]
        %v721 = vld [vmem:[#allocation2 + $0x6d0] sm:$0xff]
        %v722 = vld [vmem:[#allocation2 + $0x6d8] sm:$0xff]
        %v723 = vld [vmem:[#allocation2 + $0x6e0] sm:$0xff]
        %v724 = vld [vmem:[#allocation2 + $0x6e8] sm:$0xff]
        %v725 = vld [vmem:[#allocation2 + $0x6f0] sm:$0xff]
        %v726 = vld [vmem:[#allocation2 + $0x6f8] sm:$0xff]
        %v727 = vld [vmem:[#allocation2 + $0x700] sm:$0xff]
        %v728 = vld [vmem:[#allocation2 + $0x708] sm:$0xff]
        %v729 = vld [vmem:[#allocation2 + $0x710] sm:$0xff]
        %v730 = vld [vmem:[#allocation2 + $0x718] sm:$0xff]
        %v731 = vld [vmem:[#allocation2 + $0x720] sm:$0xff]
        %v732 = vld [vmem:[#allocation2 + $0x728] sm:$0xff]
        %v733 = vld [vmem:[#allocation2 + $0x730] sm:$0xff]
        %v734 = vld [vmem:[#allocation2 + $0x738] sm:$0xff]
        %v735 = vld [vmem:[#allocation2 + $0x740] sm:$0xff]
        %v736 = vld [vmem:[#allocation2 + $0x748] sm:$0xff]
        %v737 = vld [vmem:[#allocation2 + $0x750] sm:$0xff]
        %v738 = vld [vmem:[#allocation2 + $0x758] sm:$0xff]
        %v739 = vld [vmem:[#allocation2 + $0x760] sm:$0xff]
        %v740 = vld [vmem:[#allocation2 + $0x768] sm:$0xff]
        %v741 = vld [vmem:[#allocation2 + $0x770] sm:$0xff]
        %v742 = vld [vmem:[#allocation2 + $0x778] sm:$0xff]
        %v743 = vld [vmem:[#allocation2 + $0x780] sm:$0xff]
        %v744 = vld [vmem:[#allocation2 + $0x788] sm:$0xff]
        %v745 = vld [vmem:[#allocation2 + $0x790] sm:$0xff]
        %v746 = vld [vmem:[#allocation2 + $0x798] sm:$0xff]
        %v747 = vld [vmem:[#allocation2 + $0x7a0] sm:$0xff]
        %v748 = vld [vmem:[#allocation2 + $0x7a8] sm:$0xff]
        %v749 = vld [vmem:[#allocation2 + $0x7b0] sm:$0xff]
        %v750 = vld [vmem:[#allocation2 + $0x7b8] sm:$0xff]
        %v751 = vld [vmem:[#allocation2 + $0x7c0] sm:$0xff]
        %v752 = vld [vmem:[#allocation2 + $0x7c8] sm:$0xff]
        %v753 = vld [vmem:[#allocation2 + $0x7d0] sm:$0xff]
        %v754 = vld [vmem:[#allocation2 + $0x7d8] sm:$0xff]
        %v755 = vld [vmem:[#allocation2 + $0x7e0] sm:$0xff]
        %v756 = vld [vmem:[#allocation2 + $0x7e8] sm:$0xff]
        %v757 = vld [vmem:[#allocation2 + $0x7f0] sm:$0xff]
        %v758 = vld [vmem:[#allocation2 + $0x7f8] sm:$0xff]
        %v759 = vld [vmem:[%s200] sm:$0xff]
        %v760 = vld [vmem:[%s200 + $0x8] sm:$0xff]
        %v761 = vld [vmem:[%s200 + $0x10] sm:$0xff]
        %v762 = vld [vmem:[%s200 + $0x18] sm:$0xff]
        %v763 = vld [vmem:[%s200 + $0x20] sm:$0xff]
        %v764 = vld [vmem:[%s200 + $0x28] sm:$0xff]
        %v765 = vld [vmem:[%s200 + $0x30] sm:$0xff]
        %v766 = vld [vmem:[%s200 + $0x38] sm:$0xff]
        %v767 = vld [vmem:[%s200 + $0x40] sm:$0xff]
        %v768 = vld [vmem:[%s200 + $0x48] sm:$0xff]
        %v769 = vld [vmem:[%s200 + $0x50] sm:$0xff]
        %v770 = vld [vmem:[%s200 + $0x58] sm:$0xff]
        %v771 = vld [vmem:[%s200 + $0x60] sm:$0xff]
        %v772 = vld [vmem:[%s200 + $0x68] sm:$0xff]
        %v773 = vld [vmem:[%s200 + $0x70] sm:$0xff]
        %v774 = vld [vmem:[%s200 + $0x78] sm:$0xff]
        %v775 = vld [vmem:[%s200 + $0x80] sm:$0xff]
        %v776 = vld [vmem:[%s200 + $0x88] sm:$0xff]
        %v777 = vld [vmem:[%s200 + $0x90] sm:$0xff]
        %v778 = vld [vmem:[%s200 + $0x98] sm:$0xff]
        %v779 = vld [vmem:[%s200 + $0xa0] sm:$0xff]
        %v780 = vld [vmem:[%s200 + $0xa8] sm:$0xff]
        %v781 = vld [vmem:[%s200 + $0xb0] sm:$0xff]
        %v782 = vld [vmem:[%s200 + $0xb8] sm:$0xff]
        %v783 = vld [vmem:[%s200 + $0xc0] sm:$0xff]
        %v784 = vld [vmem:[%s200 + $0xc8] sm:$0xff]
        %v785 = vld [vmem:[%s200 + $0xd0] sm:$0xff]
        %v786 = vld [vmem:[%s200 + $0xd8] sm:$0xff]
        %v787 = vld [vmem:[%s200 + $0xe0] sm:$0xff]
        %v788 = vld [vmem:[%s200 + $0xe8] sm:$0xff]
        %v789 = vld [vmem:[%s200 + $0xf0] sm:$0xff]
        %v790 = vld [vmem:[%s200 + $0xf8] sm:$0xff]
        %v791 = vld [vmem:[%s200 + $0x100] sm:$0xff]
        %v792 = vld [vmem:[%s200 + $0x108] sm:$0xff]
        %v793 = vld [vmem:[%s200 + $0x110] sm:$0xff]
        %v794 = vld [vmem:[%s200 + $0x118] sm:$0xff]
        %v795 = vld [vmem:[%s200 + $0x120] sm:$0xff]
        %v796 = vld [vmem:[%s200 + $0x128] sm:$0xff]
        %v797 = vld [vmem:[%s200 + $0x130] sm:$0xff]
        %v798 = vld [vmem:[%s200 + $0x138] sm:$0xff]
        %v799 = vld [vmem:[%s200 + $0x140] sm:$0xff]
        %v800 = vld [vmem:[%s200 + $0x148] sm:$0xff]
        %v801 = vld [vmem:[%s200 + $0x150] sm:$0xff]
        %v802 = vld [vmem:[%s200 + $0x158] sm:$0xff]
        %v803 = vld [vmem:[%s200 + $0x160] sm:$0xff]
        %v804 = vld [vmem:[%s200 + $0x168] sm:$0xff]
        %v805 = vld [vmem:[%s200 + $0x170] sm:$0xff]
        %v806 = vld [vmem:[%s200 + $0x178] sm:$0xff]
        %v807 = vld [vmem:[%s200 + $0x180] sm:$0xff]
        %v808 = vld [vmem:[%s200 + $0x188] sm:$0xff]
        %v809 = vld [vmem:[%s200 + $0x190] sm:$0xff]
        %v810 = vld [vmem:[%s200 + $0x198] sm:$0xff]
        %v811 = vld [vmem:[%s200 + $0x1a0] sm:$0xff]
        %v812 = vld [vmem:[%s200 + $0x1a8] sm:$0xff]
        %v813 = vld [vmem:[%s200 + $0x1b0] sm:$0xff]
        %v814 = vld [vmem:[%s200 + $0x1b8] sm:$0xff]
        %v815 = vld [vmem:[%s200 + $0x1c0] sm:$0xff]
        %v816 = vld [vmem:[%s200 + $0x1c8] sm:$0xff]
        %v817 = vld [vmem:[%s200 + $0x1d0] sm:$0xff]
        %v818 = vld [vmem:[%s200 + $0x1d8] sm:$0xff]
        %v819 = vld [vmem:[%s200 + $0x1e0] sm:$0xff]
        %v820 = vld [vmem:[%s200 + $0x1e8] sm:$0xff]
        %v821 = vld [vmem:[%s200 + $0x1f0] sm:$0xff]
        %v822 = vld [vmem:[%s200 + $0x1f8] sm:$0xff]
        %v823 = vld [vmem:[%s200 + $0x200] sm:$0xff]
        %v824 = vld [vmem:[%s200 + $0x208] sm:$0xff]
        %v825 = vld [vmem:[%s200 + $0x210] sm:$0xff]
        %v826 = vld [vmem:[%s200 + $0x218] sm:$0xff]
        %v827 = vld [vmem:[%s200 + $0x220] sm:$0xff]
        %v828 = vld [vmem:[%s200 + $0x228] sm:$0xff]
        %v829 = vld [vmem:[%s200 + $0x230] sm:$0xff]
        %v830 = vld [vmem:[%s200 + $0x238] sm:$0xff]
        %v831 = vld [vmem:[%s200 + $0x240] sm:$0xff]
        %v832 = vld [vmem:[%s200 + $0x248] sm:$0xff]
        %v833 = vld [vmem:[%s200 + $0x250] sm:$0xff]
        %v834 = vld [vmem:[%s200 + $0x258] sm:$0xff]
        %v835 = vld [vmem:[%s200 + $0x260] sm:$0xff]
        %v836 = vld [vmem:[%s200 + $0x268] sm:$0xff]
        %v837 = vld [vmem:[%s200 + $0x270] sm:$0xff]
        %v838 = vld [vmem:[%s200 + $0x278] sm:$0xff]
        %v839 = vld [vmem:[%s200 + $0x280] sm:$0xff]
        %v840 = vld [vmem:[%s200 + $0x288] sm:$0xff]
        %v841 = vld [vmem:[%s200 + $0x290] sm:$0xff]
        %v842 = vld [vmem:[%s200 + $0x298] sm:$0xff]
        %v843 = vld [vmem:[%s200 + $0x2a0] sm:$0xff]
        %v844 = vld [vmem:[%s200 + $0x2a8] sm:$0xff]
        %v845 = vld [vmem:[%s200 + $0x2b0] sm:$0xff]
        %v846 = vld [vmem:[%s200 + $0x2b8] sm:$0xff]
        %v847 = vld [vmem:[%s200 + $0x2c0] sm:$0xff]
        %v848 = vld [vmem:[%s200 + $0x2c8] sm:$0xff]
        %v849 = vld [vmem:[%s200 + $0x2d0] sm:$0xff]
        %v850 = vld [vmem:[%s200 + $0x2d8] sm:$0xff]
        %v851 = vld [vmem:[%s200 + $0x2e0] sm:$0xff]
        %v852 = vld [vmem:[%s200 + $0x2e8] sm:$0xff]
        %v853 = vld [vmem:[%s200 + $0x2f0] sm:$0xff]
        %v854 = vld [vmem:[%s200 + $0x2f8] sm:$0xff]
        %v855 = vld [vmem:[%s200 + $0x300] sm:$0xff]
        %v856 = vld [vmem:[%s200 + $0x308] sm:$0xff]
        %v857 = vld [vmem:[%s200 + $0x310] sm:$0xff]
        %v858 = vld [vmem:[%s200 + $0x318] sm:$0xff]
        %v859 = vld [vmem:[%s200 + $0x320] sm:$0xff]
        %v860 = vld [vmem:[%s200 + $0x328] sm:$0xff]
        %v861 = vld [vmem:[%s200 + $0x330] sm:$0xff]
        %v862 = vld [vmem:[%s200 + $0x338] sm:$0xff]
        %v863 = vld [vmem:[%s200 + $0x340] sm:$0xff]
        %v864 = vld [vmem:[%s200 + $0x348] sm:$0xff]
        %v865 = vld [vmem:[%s200 + $0x350] sm:$0xff]
        %v866 = vld [vmem:[%s200 + $0x358] sm:$0xff]
        %v867 = vld [vmem:[%s200 + $0x360] sm:$0xff]
        %v868 = vld [vmem:[%s200 + $0x368] sm:$0xff]
        %v869 = vld [vmem:[%s200 + $0x370] sm:$0xff]
        %v870 = vld [vmem:[%s200 + $0x378] sm:$0xff]
        %v871 = vld [vmem:[%s200 + $0x380] sm:$0xff]
        %v872 = vld [vmem:[%s200 + $0x388] sm:$0xff]
        %v873 = vld [vmem:[%s200 + $0x390] sm:$0xff]
        %v874 = vld [vmem:[%s200 + $0x398] sm:$0xff]
        %v875 = vld [vmem:[%s200 + $0x3a0] sm:$0xff]
        %v876 = vld [vmem:[%s200 + $0x3a8] sm:$0xff]
        %v877 = vld [vmem:[%s200 + $0x3b0] sm:$0xff]
        %v878 = vld [vmem:[%s200 + $0x3b8] sm:$0xff]
        %v879 = vld [vmem:[%s200 + $0x3c0] sm:$0xff]
        %v880 = vld [vmem:[%s200 + $0x3c8] sm:$0xff]
        %v881 = vld [vmem:[%s200 + $0x3d0] sm:$0xff]
        %v882 = vld [vmem:[%s200 + $0x3d8] sm:$0xff]
        %v883 = vld [vmem:[%s200 + $0x3e0] sm:$0xff]
        %v884 = vld [vmem:[%s200 + $0x3e8] sm:$0xff]
        %v885 = vld [vmem:[%s200 + $0x3f0] sm:$0xff]
        %v886 = vld [vmem:[%s200 + $0x3f8] sm:$0xff]
        %v887 = vld [vmem:[%s200 + $0x400] sm:$0xff]
        %v888 = vld [vmem:[%s200 + $0x408] sm:$0xff]
        %v889 = vld [vmem:[%s200 + $0x410] sm:$0xff]
        %v890 = vld [vmem:[%s200 + $0x418] sm:$0xff]
        %v891 = vld [vmem:[%s200 + $0x420] sm:$0xff]
        %v892 = vld [vmem:[%s200 + $0x428] sm:$0xff]
        %v893 = vld [vmem:[%s200 + $0x430] sm:$0xff]
        %v894 = vld [vmem:[%s200 + $0x438] sm:$0xff]
        %v895 = vld [vmem:[%s200 + $0x440] sm:$0xff]
        %v896 = vld [vmem:[%s200 + $0x448] sm:$0xff]
        %v897 = vld [vmem:[%s200 + $0x450] sm:$0xff]
        %v898 = vld [vmem:[%s200 + $0x458] sm:$0xff]
        %v899 = vld [vmem:[%s200 + $0x460] sm:$0xff]
        %v900 = vld [vmem:[%s200 + $0x468] sm:$0xff]
        %v901 = vld [vmem:[%s200 + $0x470] sm:$0xff]
        %v902 = vld [vmem:[%s200 + $0x478] sm:$0xff]
        %v903 = vld [vmem:[%s200 + $0x480] sm:$0xff]
        %v904 = vld [vmem:[%s200 + $0x488] sm:$0xff]
        %v905 = vld [vmem:[%s200 + $0x490] sm:$0xff]
        %v906 = vld [vmem:[%s200 + $0x498] sm:$0xff]
        %v907 = vld [vmem:[%s200 + $0x4a0] sm:$0xff]
        %v908 = vld [vmem:[%s200 + $0x4a8] sm:$0xff]
        %v909 = vld [vmem:[%s200 + $0x4b0] sm:$0xff]
        %v910 = vld [vmem:[%s200 + $0x4b8] sm:$0xff]
        %v911 = vld [vmem:[%s200 + $0x4c0] sm:$0xff]
        %v912 = vld [vmem:[%s200 + $0x4c8] sm:$0xff]
        %v913 = vld [vmem:[%s200 + $0x4d0] sm:$0xff]
        %v914 = vld [vmem:[%s200 + $0x4d8] sm:$0xff]
        %v915 = vld [vmem:[%s200 + $0x4e0] sm:$0xff]
        %v916 = vld [vmem:[%s200 + $0x4e8] sm:$0xff]
        %v917 = vld [vmem:[%s200 + $0x4f0] sm:$0xff]
        %v918 = vld [vmem:[%s200 + $0x4f8] sm:$0xff]
        %v919 = vld [vmem:[%s200 + $0x500] sm:$0xff]
        %v920 = vld [vmem:[%s200 + $0x508] sm:$0xff]
        %v921 = vld [vmem:[%s200 + $0x510] sm:$0xff]
        %v922 = vld [vmem:[%s200 + $0x518] sm:$0xff]
        %v923 = vld [vmem:[%s200 + $0x520] sm:$0xff]
        %v924 = vld [vmem:[%s200 + $0x528] sm:$0xff]
        %v925 = vld [vmem:[%s200 + $0x530] sm:$0xff]
        %v926 = vld [vmem:[%s200 + $0x538] sm:$0xff]
        %v927 = vld [vmem:[%s200 + $0x540] sm:$0xff]
        %v928 = vld [vmem:[%s200 + $0x548] sm:$0xff]
        %v929 = vld [vmem:[%s200 + $0x550] sm:$0xff]
        %v930 = vld [vmem:[%s200 + $0x558] sm:$0xff]
        %v931 = vld [vmem:[%s200 + $0x560] sm:$0xff]
        %v932 = vld [vmem:[%s200 + $0x568] sm:$0xff]
        %v933 = vld [vmem:[%s200 + $0x570] sm:$0xff]
        %v934 = vld [vmem:[%s200 + $0x578] sm:$0xff]
        %v935 = vld [vmem:[%s200 + $0x580] sm:$0xff]
        %v936 = vld [vmem:[%s200 + $0x588] sm:$0xff]
        %v937 = vld [vmem:[%s200 + $0x590] sm:$0xff]
        %v938 = vld [vmem:[%s200 + $0x598] sm:$0xff]
        %v939 = vld [vmem:[%s200 + $0x5a0] sm:$0xff]
        %v940 = vld [vmem:[%s200 + $0x5a8] sm:$0xff]
        %v941 = vld [vmem:[%s200 + $0x5b0] sm:$0xff]
        %v942 = vld [vmem:[%s200 + $0x5b8] sm:$0xff]
        %v943 = vld [vmem:[%s200 + $0x5c0] sm:$0xff]
        %v944 = vld [vmem:[%s200 + $0x5c8] sm:$0xff]
        %v945 = vld [vmem:[%s200 + $0x5d0] sm:$0xff]
        %v946 = vld [vmem:[%s200 + $0x5d8] sm:$0xff]
        %v947 = vld [vmem:[%s200 + $0x5e0] sm:$0xff]
        %v948 = vld [vmem:[%s200 + $0x5e8] sm:$0xff]
        %v949 = vld [vmem:[%s200 + $0x5f0] sm:$0xff]
        %v950 = vld [vmem:[%s200 + $0x5f8] sm:$0xff]
        %v951 = vld [vmem:[%s200 + $0x600] sm:$0xff]
        %v952 = vld [vmem:[%s200 + $0x608] sm:$0xff]
        %v953 = vld [vmem:[%s200 + $0x610] sm:$0xff]
        %v954 = vld [vmem:[%s200 + $0x618] sm:$0xff]
        %v955 = vld [vmem:[%s200 + $0x620] sm:$0xff]
        %v956 = vld [vmem:[%s200 + $0x628] sm:$0xff]
        %v957 = vld [vmem:[%s200 + $0x630] sm:$0xff]
        %v958 = vld [vmem:[%s200 + $0x638] sm:$0xff]
        %v959 = vld [vmem:[%s200 + $0x640] sm:$0xff]
        %v960 = vld [vmem:[%s200 + $0x648] sm:$0xff]
        %v961 = vld [vmem:[%s200 + $0x650] sm:$0xff]
        %v962 = vld [vmem:[%s200 + $0x658] sm:$0xff]
        %v963 = vld [vmem:[%s200 + $0x660] sm:$0xff]
        %v964 = vld [vmem:[%s200 + $0x668] sm:$0xff]
        %v965 = vld [vmem:[%s200 + $0x670] sm:$0xff]
        %v966 = vld [vmem:[%s200 + $0x678] sm:$0xff]
        %v967 = vld [vmem:[%s200 + $0x680] sm:$0xff]
        %v968 = vld [vmem:[%s200 + $0x688] sm:$0xff]
        %v969 = vld [vmem:[%s200 + $0x690] sm:$0xff]
        %v970 = vld [vmem:[%s200 + $0x698] sm:$0xff]
        %v971 = vld [vmem:[%s200 + $0x6a0] sm:$0xff]
        %v972 = vld [vmem:[%s200 + $0x6a8] sm:$0xff]
        %v973 = vld [vmem:[%s200 + $0x6b0] sm:$0xff]
        %v974 = vld [vmem:[%s200 + $0x6b8] sm:$0xff]
        %v975 = vld [vmem:[%s200 + $0x6c0] sm:$0xff]
        %v976 = vld [vmem:[%s200 + $0x6c8] sm:$0xff]
        %v977 = vld [vmem:[%s200 + $0x6d0] sm:$0xff]
        %v978 = vld [vmem:[%s200 + $0x6d8] sm:$0xff]
        %v979 = vld [vmem:[%s200 + $0x6e0] sm:$0xff]
        %v980 = vld [vmem:[%s200 + $0x6e8] sm:$0xff]
        %v981 = vld [vmem:[%s200 + $0x6f0] sm:$0xff]
        %v982 = vld [vmem:[%s200 + $0x6f8] sm:$0xff]
        %v983 = vld [vmem:[%s200 + $0x700] sm:$0xff]
        %v984 = vld [vmem:[%s200 + $0x708] sm:$0xff]
        %v985 = vld [vmem:[%s200 + $0x710] sm:$0xff]
        %v986 = vld [vmem:[%s200 + $0x718] sm:$0xff]
        %v987 = vld [vmem:[%s200 + $0x720] sm:$0xff]
        %v988 = vld [vmem:[%s200 + $0x728] sm:$0xff]
        %v989 = vld [vmem:[%s200 + $0x730] sm:$0xff]
        %v990 = vld [vmem:[%s200 + $0x738] sm:$0xff]
        %v991 = vld [vmem:[%s200 + $0x740] sm:$0xff]
        %v992 = vld [vmem:[%s200 + $0x748] sm:$0xff]
        %v993 = vld [vmem:[%s200 + $0x750] sm:$0xff]
        %v994 = vld [vmem:[%s200 + $0x758] sm:$0xff]
        %v995 = vld [vmem:[%s200 + $0x760] sm:$0xff]
        %v996 = vld [vmem:[%s200 + $0x768] sm:$0xff]
        %v997 = vld [vmem:[%s200 + $0x770] sm:$0xff]
        %v998 = vld [vmem:[%s200 + $0x778] sm:$0xff]
        %v999 = vld [vmem:[%s200 + $0x780] sm:$0xff]
        %v1000 = vld [vmem:[%s200 + $0x788] sm:$0xff]
        %v1001 = vld [vmem:[%s200 + $0x790] sm:$0xff]
        %v1002 = vld [vmem:[%s200 + $0x798] sm:$0xff]
        %v1003 = vld [vmem:[%s200 + $0x7a0] sm:$0xff]
        %v1004 = vld [vmem:[%s200 + $0x7a8] sm:$0xff]
        %v1005 = vld [vmem:[%s200 + $0x7b0] sm:$0xff]
        %v1006 = vld [vmem:[%s200 + $0x7b8] sm:$0xff]
        %v1007 = vld [vmem:[%s200 + $0x7c0] sm:$0xff]
        %v1008 = vld [vmem:[%s200 + $0x7c8] sm:$0xff]
        %v1009 = vld [vmem:[%s200 + $0x7d0] sm:$0xff]
        %v1010 = vld [vmem:[%s200 + $0x7d8] sm:$0xff]
        %v1011 = vld [vmem:[%s200 + $0x7e0] sm:$0xff]
        %v1012 = vld [vmem:[%s200 + $0x7e8] sm:$0xff]
        %v1013 = vld [vmem:[%s200 + $0x7f0] sm:$0xff]
        %v1014 = vld [vmem:[%s200 + $0x7f8] sm:$0xff]
        %v1015 = vpack.c.bf16 %v763, %v759
        %v1016 = vpack.c.bf16 %v764, %v760
        %v1017 = vpack.c.bf16 %v765, %v761
        %v1018 = vpack.c.bf16 %v766, %v762
        %v1019 = vpack.c.bf16 %v771, %v767
        %v1020 = vpack.c.bf16 %v772, %v768
        %v1021 = vpack.c.bf16 %v773, %v769
        %v1022 = vpack.c.bf16 %v774, %v770
        %v1023 = vpack.c.bf16 %v779, %v775
        %v1024 = vpack.c.bf16 %v780, %v776
        %v1025 = vpack.c.bf16 %v781, %v777
        %v1026 = vpack.c.bf16 %v782, %v778
        %v1027 = vpack.c.bf16 %v787, %v783
        %v1028 = vpack.c.bf16 %v788, %v784
        %v1029 = vpack.c.bf16 %v789, %v785
        %v1030 = vpack.c.bf16 %v790, %v786
        %v1031 = vpack.c.bf16 %v795, %v791
        %v1032 = vpack.c.bf16 %v796, %v792
        %v1033 = vpack.c.bf16 %v797, %v793
        %v1034 = vpack.c.bf16 %v798, %v794
        %v1035 = vpack.c.bf16 %v803, %v799
        %v1036 = vpack.c.bf16 %v804, %v800
        %v1037 = vpack.c.bf16 %v805, %v801
        %v1038 = vpack.c.bf16 %v806, %v802
        %v1039 = vpack.c.bf16 %v811, %v807
        %v1040 = vpack.c.bf16 %v812, %v808
        %v1041 = vpack.c.bf16 %v813, %v809
        %v1042 = vpack.c.bf16 %v814, %v810
        %v1043 = vpack.c.bf16 %v819, %v815
        %v1044 = vpack.c.bf16 %v820, %v816
        %v1045 = vpack.c.bf16 %v821, %v817
        %v1046 = vpack.c.bf16 %v822, %v818
        %v1047 = vpack.c.bf16 %v827, %v823
        %v1048 = vpack.c.bf16 %v828, %v824
        %v1049 = vpack.c.bf16 %v829, %v825
        %v1050 = vpack.c.bf16 %v830, %v826
        %v1051 = vpack.c.bf16 %v835, %v831
        %v1052 = vpack.c.bf16 %v836, %v832
        %v1053 = vpack.c.bf16 %v837, %v833
        %v1054 = vpack.c.bf16 %v838, %v834
        %v1055 = vpack.c.bf16 %v843, %v839
        %v1056 = vpack.c.bf16 %v844, %v840
        %v1057 = vpack.c.bf16 %v845, %v841
        %v1058 = vpack.c.bf16 %v846, %v842
        %v1059 = vpack.c.bf16 %v851, %v847
        %v1060 = vpack.c.bf16 %v852, %v848
        %v1061 = vpack.c.bf16 %v853, %v849
        %v1062 = vpack.c.bf16 %v854, %v850
        %v1063 = vpack.c.bf16 %v859, %v855
        %v1064 = vpack.c.bf16 %v860, %v856
        %v1065 = vpack.c.bf16 %v861, %v857
        %v1066 = vpack.c.bf16 %v862, %v858
        %v1067 = vpack.c.bf16 %v867, %v863
        %v1068 = vpack.c.bf16 %v868, %v864
        %v1069 = vpack.c.bf16 %v869, %v865
        %v1070 = vpack.c.bf16 %v870, %v866
        %v1071 = vpack.c.bf16 %v875, %v871
        %v1072 = vpack.c.bf16 %v876, %v872
        %v1073 = vpack.c.bf16 %v877, %v873
        %v1074 = vpack.c.bf16 %v878, %v874
        %v1075 = vpack.c.bf16 %v883, %v879
        %v1076 = vpack.c.bf16 %v884, %v880
        %v1077 = vpack.c.bf16 %v885, %v881
        %v1078 = vpack.c.bf16 %v886, %v882
        %v1079 = vpack.c.bf16 %v891, %v887
        %v1080 = vpack.c.bf16 %v892, %v888
        %v1081 = vpack.c.bf16 %v893, %v889
        %v1082 = vpack.c.bf16 %v894, %v890
        %v1083 = vpack.c.bf16 %v899, %v895
        %v1084 = vpack.c.bf16 %v900, %v896
        %v1085 = vpack.c.bf16 %v901, %v897
        %v1086 = vpack.c.bf16 %v902, %v898
        %v1087 = vpack.c.bf16 %v907, %v903
        %v1088 = vpack.c.bf16 %v908, %v904
        %v1089 = vpack.c.bf16 %v909, %v905
        %v1090 = vpack.c.bf16 %v910, %v906
        %v1091 = vpack.c.bf16 %v915, %v911
        %v1092 = vpack.c.bf16 %v916, %v912
        %v1093 = vpack.c.bf16 %v917, %v913
        %v1094 = vpack.c.bf16 %v918, %v914
        %v1095 = vpack.c.bf16 %v923, %v919
        %v1096 = vpack.c.bf16 %v924, %v920
        %v1097 = vpack.c.bf16 %v925, %v921
        %v1098 = vpack.c.bf16 %v926, %v922
        %v1099 = vpack.c.bf16 %v931, %v927
        %v1100 = vpack.c.bf16 %v932, %v928
        %v1101 = vpack.c.bf16 %v933, %v929
        %v1102 = vpack.c.bf16 %v934, %v930
        %v1103 = vpack.c.bf16 %v939, %v935
        %v1104 = vpack.c.bf16 %v940, %v936
        %v1105 = vpack.c.bf16 %v941, %v937
        %v1106 = vpack.c.bf16 %v942, %v938
        %v1107 = vpack.c.bf16 %v947, %v943
        %v1108 = vpack.c.bf16 %v948, %v944
        %v1109 = vpack.c.bf16 %v949, %v945
        %v1110 = vpack.c.bf16 %v950, %v946
        %v1111 = vpack.c.bf16 %v955, %v951
        %v1112 = vpack.c.bf16 %v956, %v952
        %v1113 = vpack.c.bf16 %v957, %v953
        %v1114 = vpack.c.bf16 %v958, %v954
        %v1115 = vpack.c.bf16 %v963, %v959
        %v1116 = vpack.c.bf16 %v964, %v960
        %v1117 = vpack.c.bf16 %v965, %v961
        %v1118 = vpack.c.bf16 %v966, %v962
        %v1119 = vpack.c.bf16 %v971, %v967
        %v1120 = vpack.c.bf16 %v972, %v968
        %v1121 = vpack.c.bf16 %v973, %v969
        %v1122 = vpack.c.bf16 %v974, %v970
        %v1123 = vpack.c.bf16 %v979, %v975
        %v1124 = vpack.c.bf16 %v980, %v976
        %v1125 = vpack.c.bf16 %v981, %v977
        %v1126 = vpack.c.bf16 %v982, %v978
        %v1127 = vpack.c.bf16 %v987, %v983
        %v1128 = vpack.c.bf16 %v988, %v984
        %v1129 = vpack.c.bf16 %v989, %v985
        %v1130 = vpack.c.bf16 %v990, %v986
        %v1131 = vpack.c.bf16 %v995, %v991
        %v1132 = vpack.c.bf16 %v996, %v992
        %v1133 = vpack.c.bf16 %v997, %v993
        %v1134 = vpack.c.bf16 %v998, %v994
        %v1135 = vpack.c.bf16 %v1003, %v999
        %v1136 = vpack.c.bf16 %v1004, %v1000
        %v1137 = vpack.c.bf16 %v1005, %v1001
        %v1138 = vpack.c.bf16 %v1006, %v1002
        %v1139 = vpack.c.bf16 %v1011, %v1007
        %v1140 = vpack.c.bf16 %v1012, %v1008
        %v1141 = vpack.c.bf16 %v1013, %v1009
        %v1142 = vpack.c.bf16 %v1014, %v1010
        %v1143 = vld [vmem:[%s210] sm:$0xff]
        %v1144 = vld [vmem:[%s210 + $0x8] sm:$0xff]
        %v1145 = vld [vmem:[%s210 + $0x10] sm:$0xff]
        %v1146 = vld [vmem:[%s210 + $0x18] sm:$0xff]
        %v1147 = vld [vmem:[%s210 + $0x20] sm:$0xff]
        %v1148 = vld [vmem:[%s210 + $0x28] sm:$0xff]
        %v1149 = vld [vmem:[%s210 + $0x30] sm:$0xff]
        %v1150 = vld [vmem:[%s210 + $0x38] sm:$0xff]
        %v1151 = vld [vmem:[%s210 + $0x40] sm:$0xff]
        %v1152 = vld [vmem:[%s210 + $0x48] sm:$0xff]
        %v1153 = vld [vmem:[%s210 + $0x50] sm:$0xff]
        %v1154 = vld [vmem:[%s210 + $0x58] sm:$0xff]
        %v1155 = vld [vmem:[%s210 + $0x60] sm:$0xff]
        %v1156 = vld [vmem:[%s210 + $0x68] sm:$0xff]
        %v1157 = vld [vmem:[%s210 + $0x70] sm:$0xff]
        %v1158 = vld [vmem:[%s210 + $0x78] sm:$0xff]
        %v1159 = vld [vmem:[%s210 + $0x80] sm:$0xff]
        %v1160 = vld [vmem:[%s210 + $0x88] sm:$0xff]
        %v1161 = vld [vmem:[%s210 + $0x90] sm:$0xff]
        %v1162 = vld [vmem:[%s210 + $0x98] sm:$0xff]
        %v1163 = vld [vmem:[%s210 + $0xa0] sm:$0xff]
        %v1164 = vld [vmem:[%s210 + $0xa8] sm:$0xff]
        %v1165 = vld [vmem:[%s210 + $0xb0] sm:$0xff]
        %v1166 = vld [vmem:[%s210 + $0xb8] sm:$0xff]
        %v1167 = vld [vmem:[%s210 + $0xc0] sm:$0xff]
        %v1168 = vld [vmem:[%s210 + $0xc8] sm:$0xff]
        %v1169 = vld [vmem:[%s210 + $0xd0] sm:$0xff]
        %v1170 = vld [vmem:[%s210 + $0xd8] sm:$0xff]
        %v1171 = vld [vmem:[%s210 + $0xe0] sm:$0xff]
        %v1172 = vld [vmem:[%s210 + $0xe8] sm:$0xff]
        %v1173 = vld [vmem:[%s210 + $0xf0] sm:$0xff]
        %v1174 = vld [vmem:[%s210 + $0xf8] sm:$0xff]
        %v1175 = vld [vmem:[%s210 + $0x100] sm:$0xff]
        %v1176 = vld [vmem:[%s210 + $0x108] sm:$0xff]
        %v1177 = vld [vmem:[%s210 + $0x110] sm:$0xff]
        %v1178 = vld [vmem:[%s210 + $0x118] sm:$0xff]
        %v1179 = vld [vmem:[%s210 + $0x120] sm:$0xff]
        %v1180 = vld [vmem:[%s210 + $0x128] sm:$0xff]
        %v1181 = vld [vmem:[%s210 + $0x130] sm:$0xff]
        %v1182 = vld [vmem:[%s210 + $0x138] sm:$0xff]
        %v1183 = vld [vmem:[%s210 + $0x140] sm:$0xff]
        %v1184 = vld [vmem:[%s210 + $0x148] sm:$0xff]
        %v1185 = vld [vmem:[%s210 + $0x150] sm:$0xff]
        %v1186 = vld [vmem:[%s210 + $0x158] sm:$0xff]
        %v1187 = vld [vmem:[%s210 + $0x160] sm:$0xff]
        %v1188 = vld [vmem:[%s210 + $0x168] sm:$0xff]
        %v1189 = vld [vmem:[%s210 + $0x170] sm:$0xff]
        %v1190 = vld [vmem:[%s210 + $0x178] sm:$0xff]
        %v1191 = vld [vmem:[%s210 + $0x180] sm:$0xff]
        %v1192 = vld [vmem:[%s210 + $0x188] sm:$0xff]
        %v1193 = vld [vmem:[%s210 + $0x190] sm:$0xff]
        %v1194 = vld [vmem:[%s210 + $0x198] sm:$0xff]
        %v1195 = vld [vmem:[%s210 + $0x1a0] sm:$0xff]
        %v1196 = vld [vmem:[%s210 + $0x1a8] sm:$0xff]
        %v1197 = vld [vmem:[%s210 + $0x1b0] sm:$0xff]
        %v1198 = vld [vmem:[%s210 + $0x1b8] sm:$0xff]
        %v1199 = vld [vmem:[%s210 + $0x1c0] sm:$0xff]
        %v1200 = vld [vmem:[%s210 + $0x1c8] sm:$0xff]
        %v1201 = vld [vmem:[%s210 + $0x1d0] sm:$0xff]
        %v1202 = vld [vmem:[%s210 + $0x1d8] sm:$0xff]
        %v1203 = vld [vmem:[%s210 + $0x1e0] sm:$0xff]
        %v1204 = vld [vmem:[%s210 + $0x1e8] sm:$0xff]
        %v1205 = vld [vmem:[%s210 + $0x1f0] sm:$0xff]
        %v1206 = vld [vmem:[%s210 + $0x1f8] sm:$0xff]
        %v1207 = vld [vmem:[%s210 + $0x200] sm:$0xff]
        %v1208 = vld [vmem:[%s210 + $0x208] sm:$0xff]
        %v1209 = vld [vmem:[%s210 + $0x210] sm:$0xff]
        %v1210 = vld [vmem:[%s210 + $0x218] sm:$0xff]
        %v1211 = vld [vmem:[%s210 + $0x220] sm:$0xff]
        %v1212 = vld [vmem:[%s210 + $0x228] sm:$0xff]
        %v1213 = vld [vmem:[%s210 + $0x230] sm:$0xff]
        %v1214 = vld [vmem:[%s210 + $0x238] sm:$0xff]
        %v1215 = vld [vmem:[%s210 + $0x240] sm:$0xff]
        %v1216 = vld [vmem:[%s210 + $0x248] sm:$0xff]
        %v1217 = vld [vmem:[%s210 + $0x250] sm:$0xff]
        %v1218 = vld [vmem:[%s210 + $0x258] sm:$0xff]
        %v1219 = vld [vmem:[%s210 + $0x260] sm:$0xff]
        %v1220 = vld [vmem:[%s210 + $0x268] sm:$0xff]
        %v1221 = vld [vmem:[%s210 + $0x270] sm:$0xff]
        %v1222 = vld [vmem:[%s210 + $0x278] sm:$0xff]
        %v1223 = vld [vmem:[%s210 + $0x280] sm:$0xff]
        %v1224 = vld [vmem:[%s210 + $0x288] sm:$0xff]
        %v1225 = vld [vmem:[%s210 + $0x290] sm:$0xff]
        %v1226 = vld [vmem:[%s210 + $0x298] sm:$0xff]
        %v1227 = vld [vmem:[%s210 + $0x2a0] sm:$0xff]
        %v1228 = vld [vmem:[%s210 + $0x2a8] sm:$0xff]
        %v1229 = vld [vmem:[%s210 + $0x2b0] sm:$0xff]
        %v1230 = vld [vmem:[%s210 + $0x2b8] sm:$0xff]
        %v1231 = vld [vmem:[%s210 + $0x2c0] sm:$0xff]
        %v1232 = vld [vmem:[%s210 + $0x2c8] sm:$0xff]
        %v1233 = vld [vmem:[%s210 + $0x2d0] sm:$0xff]
        %v1234 = vld [vmem:[%s210 + $0x2d8] sm:$0xff]
        %v1235 = vld [vmem:[%s210 + $0x2e0] sm:$0xff]
        %v1236 = vld [vmem:[%s210 + $0x2e8] sm:$0xff]
        %v1237 = vld [vmem:[%s210 + $0x2f0] sm:$0xff]
        %v1238 = vld [vmem:[%s210 + $0x2f8] sm:$0xff]
        %v1239 = vld [vmem:[%s210 + $0x300] sm:$0xff]
        %v1240 = vld [vmem:[%s210 + $0x308] sm:$0xff]
        %v1241 = vld [vmem:[%s210 + $0x310] sm:$0xff]
        %v1242 = vld [vmem:[%s210 + $0x318] sm:$0xff]
        %v1243 = vld [vmem:[%s210 + $0x320] sm:$0xff]
        %v1244 = vld [vmem:[%s210 + $0x328] sm:$0xff]
        %v1245 = vld [vmem:[%s210 + $0x330] sm:$0xff]
        %v1246 = vld [vmem:[%s210 + $0x338] sm:$0xff]
        %v1247 = vld [vmem:[%s210 + $0x340] sm:$0xff]
        %v1248 = vld [vmem:[%s210 + $0x348] sm:$0xff]
        %v1249 = vld [vmem:[%s210 + $0x350] sm:$0xff]
        %v1250 = vld [vmem:[%s210 + $0x358] sm:$0xff]
        %v1251 = vld [vmem:[%s210 + $0x360] sm:$0xff]
        %v1252 = vld [vmem:[%s210 + $0x368] sm:$0xff]
        %v1253 = vld [vmem:[%s210 + $0x370] sm:$0xff]
        %v1254 = vld [vmem:[%s210 + $0x378] sm:$0xff]
        %v1255 = vld [vmem:[%s210 + $0x380] sm:$0xff]
        %v1256 = vld [vmem:[%s210 + $0x388] sm:$0xff]
        %v1257 = vld [vmem:[%s210 + $0x390] sm:$0xff]
        %v1258 = vld [vmem:[%s210 + $0x398] sm:$0xff]
        %v1259 = vld [vmem:[%s210 + $0x3a0] sm:$0xff]
        %v1260 = vld [vmem:[%s210 + $0x3a8] sm:$0xff]
        %v1261 = vld [vmem:[%s210 + $0x3b0] sm:$0xff]
        %v1262 = vld [vmem:[%s210 + $0x3b8] sm:$0xff]
        %v1263 = vld [vmem:[%s210 + $0x3c0] sm:$0xff]
        %v1264 = vld [vmem:[%s210 + $0x3c8] sm:$0xff]
        %v1265 = vld [vmem:[%s210 + $0x3d0] sm:$0xff]
        %v1266 = vld [vmem:[%s210 + $0x3d8] sm:$0xff]
        %v1267 = vld [vmem:[%s210 + $0x3e0] sm:$0xff]
        %v1268 = vld [vmem:[%s210 + $0x3e8] sm:$0xff]
        %v1269 = vld [vmem:[%s210 + $0x3f0] sm:$0xff]
        %v1270 = vld [vmem:[%s210 + $0x3f8] sm:$0xff]
        %v1399 = vunpack.c.l.b16 %v1143
        %v1400 = vunpack.c.h.b16 %v1143
        %v1401 = vunpack.c.l.b16 %v1144
        %v1402 = vunpack.c.h.b16 %v1144
        %v1403 = vunpack.c.l.b16 %v1145
        %v1404 = vunpack.c.h.b16 %v1145
        %v1405 = vunpack.c.l.b16 %v1146
        %v1406 = vunpack.c.h.b16 %v1146
        %v1407 = vunpack.c.l.b16 %v1147
        %v1408 = vunpack.c.h.b16 %v1147
        %v1409 = vunpack.c.l.b16 %v1148
        %v1410 = vunpack.c.h.b16 %v1148
        %v1411 = vunpack.c.l.b16 %v1149
        %v1412 = vunpack.c.h.b16 %v1149
        %v1413 = vunpack.c.l.b16 %v1150
        %v1414 = vunpack.c.h.b16 %v1150
        %v1415 = vunpack.c.l.b16 %v1151
        %v1416 = vunpack.c.h.b16 %v1151
        %v1417 = vunpack.c.l.b16 %v1152
        %v1418 = vunpack.c.h.b16 %v1152
        %v1419 = vunpack.c.l.b16 %v1153
        %v1420 = vunpack.c.h.b16 %v1153
        %v1421 = vunpack.c.l.b16 %v1154
        %v1422 = vunpack.c.h.b16 %v1154
        %v1423 = vunpack.c.l.b16 %v1155
        %v1424 = vunpack.c.h.b16 %v1155
        %v1425 = vunpack.c.l.b16 %v1156
        %v1426 = vunpack.c.h.b16 %v1156
        %v1427 = vunpack.c.l.b16 %v1157
        %v1428 = vunpack.c.h.b16 %v1157
        %v1429 = vunpack.c.l.b16 %v1158
        %v1430 = vunpack.c.h.b16 %v1158
        %v1431 = vunpack.c.l.b16 %v1159
        %v1432 = vunpack.c.h.b16 %v1159
        %v1433 = vunpack.c.l.b16 %v1160
        %v1434 = vunpack.c.h.b16 %v1160
        %v1435 = vunpack.c.l.b16 %v1161
        %v1436 = vunpack.c.h.b16 %v1161
        %v1437 = vunpack.c.l.b16 %v1162
        %v1438 = vunpack.c.h.b16 %v1162
        %v1439 = vunpack.c.l.b16 %v1163
        %v1440 = vunpack.c.h.b16 %v1163
        %v1441 = vunpack.c.l.b16 %v1164
        %v1442 = vunpack.c.h.b16 %v1164
        %v1443 = vunpack.c.l.b16 %v1165
        %v1444 = vunpack.c.h.b16 %v1165
        %v1445 = vunpack.c.l.b16 %v1166
        %v1446 = vunpack.c.h.b16 %v1166
        %v1447 = vunpack.c.l.b16 %v1167
        %v1448 = vunpack.c.h.b16 %v1167
        %v1449 = vunpack.c.l.b16 %v1168
        %v1450 = vunpack.c.h.b16 %v1168
        %v1451 = vunpack.c.l.b16 %v1169
        %v1452 = vunpack.c.h.b16 %v1169
        %v1453 = vunpack.c.l.b16 %v1170
        %v1454 = vunpack.c.h.b16 %v1170
        %v1455 = vunpack.c.l.b16 %v1171
        %v1456 = vunpack.c.h.b16 %v1171
        %v1457 = vunpack.c.l.b16 %v1172
        %v1458 = vunpack.c.h.b16 %v1172
        %v1459 = vunpack.c.l.b16 %v1173
        %v1460 = vunpack.c.h.b16 %v1173
        %v1461 = vunpack.c.l.b16 %v1174
        %v1462 = vunpack.c.h.b16 %v1174
        %v1463 = vunpack.c.l.b16 %v1175
        %v1464 = vunpack.c.h.b16 %v1175
        %v1465 = vunpack.c.l.b16 %v1176
        %v1466 = vunpack.c.h.b16 %v1176
        %v1467 = vunpack.c.l.b16 %v1177
        %v1468 = vunpack.c.h.b16 %v1177
        %v1469 = vunpack.c.l.b16 %v1178
        %v1470 = vunpack.c.h.b16 %v1178
        %v1471 = vunpack.c.l.b16 %v1179
        %v1472 = vunpack.c.h.b16 %v1179
        %v1473 = vunpack.c.l.b16 %v1180
        %v1474 = vunpack.c.h.b16 %v1180
        %v1475 = vunpack.c.l.b16 %v1181
        %v1476 = vunpack.c.h.b16 %v1181
        %v1477 = vunpack.c.l.b16 %v1182
        %v1478 = vunpack.c.h.b16 %v1182
        %v1479 = vunpack.c.l.b16 %v1183
        %v1480 = vunpack.c.h.b16 %v1183
        %v1481 = vunpack.c.l.b16 %v1184
        %v1482 = vunpack.c.h.b16 %v1184
        %v1483 = vunpack.c.l.b16 %v1185
        %v1484 = vunpack.c.h.b16 %v1185
        %v1485 = vunpack.c.l.b16 %v1186
        %v1486 = vunpack.c.h.b16 %v1186
        %v1487 = vunpack.c.l.b16 %v1187
        %v1488 = vunpack.c.h.b16 %v1187
        %v1489 = vunpack.c.l.b16 %v1188
        %v1490 = vunpack.c.h.b16 %v1188
        %v1491 = vunpack.c.l.b16 %v1189
        %v1492 = vunpack.c.h.b16 %v1189
        %v1493 = vunpack.c.l.b16 %v1190
        %v1494 = vunpack.c.h.b16 %v1190
        %v1495 = vunpack.c.l.b16 %v1191
        %v1496 = vunpack.c.h.b16 %v1191
        %v1497 = vunpack.c.l.b16 %v1192
        %v1498 = vunpack.c.h.b16 %v1192
        %v1499 = vunpack.c.l.b16 %v1193
        %v1500 = vunpack.c.h.b16 %v1193
        %v1501 = vunpack.c.l.b16 %v1194
        %v1502 = vunpack.c.h.b16 %v1194
        %v1503 = vunpack.c.l.b16 %v1195
        %v1504 = vunpack.c.h.b16 %v1195
        %v1505 = vunpack.c.l.b16 %v1196
        %v1506 = vunpack.c.h.b16 %v1196
        %v1507 = vunpack.c.l.b16 %v1197
        %v1508 = vunpack.c.h.b16 %v1197
        %v1509 = vunpack.c.l.b16 %v1198
        %v1510 = vunpack.c.h.b16 %v1198
        %v1511 = vunpack.c.l.b16 %v1199
        %v1512 = vunpack.c.h.b16 %v1199
        %v1513 = vunpack.c.l.b16 %v1200
        %v1514 = vunpack.c.h.b16 %v1200
        %v1515 = vunpack.c.l.b16 %v1201
        %v1516 = vunpack.c.h.b16 %v1201
        %v1517 = vunpack.c.l.b16 %v1202
        %v1518 = vunpack.c.h.b16 %v1202
        %v1519 = vunpack.c.l.b16 %v1203
        %v1520 = vunpack.c.h.b16 %v1203
        %v1521 = vunpack.c.l.b16 %v1204
        %v1522 = vunpack.c.h.b16 %v1204
        %v1523 = vunpack.c.l.b16 %v1205
        %v1524 = vunpack.c.h.b16 %v1205
        %v1525 = vunpack.c.l.b16 %v1206
        %v1526 = vunpack.c.h.b16 %v1206
        %v1527 = vunpack.c.l.b16 %v1207
        %v1528 = vunpack.c.h.b16 %v1207
        %v1529 = vunpack.c.l.b16 %v1208
        %v1530 = vunpack.c.h.b16 %v1208
        %v1531 = vunpack.c.l.b16 %v1209
        %v1532 = vunpack.c.h.b16 %v1209
        %v1533 = vunpack.c.l.b16 %v1210
        %v1534 = vunpack.c.h.b16 %v1210
        %v1535 = vunpack.c.l.b16 %v1211
        %v1536 = vunpack.c.h.b16 %v1211
        %v1537 = vunpack.c.l.b16 %v1212
        %v1538 = vunpack.c.h.b16 %v1212
        %v1539 = vunpack.c.l.b16 %v1213
        %v1540 = vunpack.c.h.b16 %v1213
        %v1541 = vunpack.c.l.b16 %v1214
        %v1542 = vunpack.c.h.b16 %v1214
        %v1543 = vunpack.c.l.b16 %v1215
        %v1544 = vunpack.c.h.b16 %v1215
        %v1545 = vunpack.c.l.b16 %v1216
        %v1546 = vunpack.c.h.b16 %v1216
        %v1547 = vunpack.c.l.b16 %v1217
        %v1548 = vunpack.c.h.b16 %v1217
        %v1549 = vunpack.c.l.b16 %v1218
        %v1550 = vunpack.c.h.b16 %v1218
        %v1551 = vunpack.c.l.b16 %v1219
        %v1552 = vunpack.c.h.b16 %v1219
        %v1553 = vunpack.c.l.b16 %v1220
        %v1554 = vunpack.c.h.b16 %v1220
        %v1555 = vunpack.c.l.b16 %v1221
        %v1556 = vunpack.c.h.b16 %v1221
        %v1557 = vunpack.c.l.b16 %v1222
        %v1558 = vunpack.c.h.b16 %v1222
        %v1559 = vunpack.c.l.b16 %v1223
        %v1560 = vunpack.c.h.b16 %v1223
        %v1561 = vunpack.c.l.b16 %v1224
        %v1562 = vunpack.c.h.b16 %v1224
        %v1563 = vunpack.c.l.b16 %v1225
        %v1564 = vunpack.c.h.b16 %v1225
        %v1565 = vunpack.c.l.b16 %v1226
        %v1566 = vunpack.c.h.b16 %v1226
        %v1567 = vunpack.c.l.b16 %v1227
        %v1568 = vunpack.c.h.b16 %v1227
        %v1569 = vunpack.c.l.b16 %v1228
        %v1570 = vunpack.c.h.b16 %v1228
        %v1571 = vunpack.c.l.b16 %v1229
        %v1572 = vunpack.c.h.b16 %v1229
        %v1573 = vunpack.c.l.b16 %v1230
        %v1574 = vunpack.c.h.b16 %v1230
        %v1575 = vunpack.c.l.b16 %v1231
        %v1576 = vunpack.c.h.b16 %v1231
        %v1577 = vunpack.c.l.b16 %v1232
        %v1578 = vunpack.c.h.b16 %v1232
        %v1579 = vunpack.c.l.b16 %v1233
        %v1580 = vunpack.c.h.b16 %v1233
        %v1581 = vunpack.c.l.b16 %v1234
        %v1582 = vunpack.c.h.b16 %v1234
        %v1583 = vunpack.c.l.b16 %v1235
        %v1584 = vunpack.c.h.b16 %v1235
        %v1585 = vunpack.c.l.b16 %v1236
        %v1586 = vunpack.c.h.b16 %v1236
        %v1587 = vunpack.c.l.b16 %v1237
        %v1588 = vunpack.c.h.b16 %v1237
        %v1589 = vunpack.c.l.b16 %v1238
        %v1590 = vunpack.c.h.b16 %v1238
        %v1591 = vunpack.c.l.b16 %v1239
        %v1592 = vunpack.c.h.b16 %v1239
        %v1593 = vunpack.c.l.b16 %v1240
        %v1594 = vunpack.c.h.b16 %v1240
        %v1595 = vunpack.c.l.b16 %v1241
        %v1596 = vunpack.c.h.b16 %v1241
        %v1597 = vunpack.c.l.b16 %v1242
        %v1598 = vunpack.c.h.b16 %v1242
        %v1599 = vunpack.c.l.b16 %v1243
        %v1600 = vunpack.c.h.b16 %v1243
        %v1601 = vunpack.c.l.b16 %v1244
        %v1602 = vunpack.c.h.b16 %v1244
        %v1603 = vunpack.c.l.b16 %v1245
        %v1604 = vunpack.c.h.b16 %v1245
        %v1605 = vunpack.c.l.b16 %v1246
        %v1606 = vunpack.c.h.b16 %v1246
        %v1607 = vunpack.c.l.b16 %v1247
        %v1608 = vunpack.c.h.b16 %v1247
        %v1609 = vunpack.c.l.b16 %v1248
        %v1610 = vunpack.c.h.b16 %v1248
        %v1611 = vunpack.c.l.b16 %v1249
        %v1612 = vunpack.c.h.b16 %v1249
        %v1613 = vunpack.c.l.b16 %v1250
        %v1614 = vunpack.c.h.b16 %v1250
        %v1615 = vunpack.c.l.b16 %v1251
        %v1616 = vunpack.c.h.b16 %v1251
        %v1617 = vunpack.c.l.b16 %v1252
        %v1618 = vunpack.c.h.b16 %v1252
        %v1619 = vunpack.c.l.b16 %v1253
        %v1620 = vunpack.c.h.b16 %v1253
        %v1621 = vunpack.c.l.b16 %v1254
        %v1622 = vunpack.c.h.b16 %v1254
        %v1623 = vunpack.c.l.b16 %v1255
        %v1624 = vunpack.c.h.b16 %v1255
        %v1625 = vunpack.c.l.b16 %v1256
        %v1626 = vunpack.c.h.b16 %v1256
        %v1627 = vunpack.c.l.b16 %v1257
        %v1628 = vunpack.c.h.b16 %v1257
        %v1629 = vunpack.c.l.b16 %v1258
        %v1630 = vunpack.c.h.b16 %v1258
        %v1631 = vunpack.c.l.b16 %v1259
        %v1632 = vunpack.c.h.b16 %v1259
        %v1633 = vunpack.c.l.b16 %v1260
        %v1634 = vunpack.c.h.b16 %v1260
        %v1635 = vunpack.c.l.b16 %v1261
        %v1636 = vunpack.c.h.b16 %v1261
        %v1637 = vunpack.c.l.b16 %v1262
        %v1638 = vunpack.c.h.b16 %v1262
        %v1639 = vunpack.c.l.b16 %v1263
        %v1640 = vunpack.c.h.b16 %v1263
        %v1641 = vunpack.c.l.b16 %v1264
        %v1642 = vunpack.c.h.b16 %v1264
        %v1643 = vunpack.c.l.b16 %v1265
        %v1644 = vunpack.c.h.b16 %v1265
        %v1645 = vunpack.c.l.b16 %v1266
        %v1646 = vunpack.c.h.b16 %v1266
        %v1647 = vunpack.c.l.b16 %v1267
        %v1648 = vunpack.c.h.b16 %v1267
        %v1649 = vunpack.c.l.b16 %v1268
        %v1650 = vunpack.c.h.b16 %v1268
        %v1651 = vunpack.c.l.b16 %v1269
        %v1652 = vunpack.c.h.b16 %v1269
        %v1653 = vunpack.c.l.b16 %v1270
        %v1654 = vunpack.c.h.b16 %v1270
        %v1655 = vpack.c.b16 %v1403, %v1399
        %v1656 = vpack.c.b16 %v1404, %v1400
        %v1657 = vpack.c.b16 %v1405, %v1401
        %v1658 = vpack.c.b16 %v1406, %v1402
        %v1659 = vpack.c.b16 %v1411, %v1407
        %v1660 = vpack.c.b16 %v1412, %v1408
        %v1661 = vpack.c.b16 %v1413, %v1409
        %v1662 = vpack.c.b16 %v1414, %v1410
        %v1663 = vpack.c.b16 %v1419, %v1415
        %v1664 = vpack.c.b16 %v1420, %v1416
        %v1665 = vpack.c.b16 %v1421, %v1417
        %v1666 = vpack.c.b16 %v1422, %v1418
        %v1667 = vpack.c.b16 %v1427, %v1423
        %v1668 = vpack.c.b16 %v1428, %v1424
        %v1669 = vpack.c.b16 %v1429, %v1425
        %v1670 = vpack.c.b16 %v1430, %v1426
        %v1671 = vpack.c.b16 %v1435, %v1431
        %v1672 = vpack.c.b16 %v1436, %v1432
        %v1673 = vpack.c.b16 %v1437, %v1433
        %v1674 = vpack.c.b16 %v1438, %v1434
        %v1675 = vpack.c.b16 %v1443, %v1439
        %v1676 = vpack.c.b16 %v1444, %v1440
        %v1677 = vpack.c.b16 %v1445, %v1441
        %v1678 = vpack.c.b16 %v1446, %v1442
        %v1679 = vpack.c.b16 %v1451, %v1447
        %v1680 = vpack.c.b16 %v1452, %v1448
        %v1681 = vpack.c.b16 %v1453, %v1449
        %v1682 = vpack.c.b16 %v1454, %v1450
        %v1683 = vpack.c.b16 %v1459, %v1455
        %v1684 = vpack.c.b16 %v1460, %v1456
        %v1685 = vpack.c.b16 %v1461, %v1457
        %v1686 = vpack.c.b16 %v1462, %v1458
        %v1687 = vpack.c.b16 %v1467, %v1463
        %v1688 = vpack.c.b16 %v1468, %v1464
        %v1689 = vpack.c.b16 %v1469, %v1465
        %v1690 = vpack.c.b16 %v1470, %v1466
        %v1691 = vpack.c.b16 %v1475, %v1471
        %v1692 = vpack.c.b16 %v1476, %v1472
        %v1693 = vpack.c.b16 %v1477, %v1473
        %v1694 = vpack.c.b16 %v1478, %v1474
        %v1695 = vpack.c.b16 %v1483, %v1479
        %v1696 = vpack.c.b16 %v1484, %v1480
        %v1697 = vpack.c.b16 %v1485, %v1481
        %v1698 = vpack.c.b16 %v1486, %v1482
        %v1699 = vpack.c.b16 %v1491, %v1487
        %v1700 = vpack.c.b16 %v1492, %v1488
        %v1701 = vpack.c.b16 %v1493, %v1489
        %v1702 = vpack.c.b16 %v1494, %v1490
        %v1703 = vpack.c.b16 %v1499, %v1495
        %v1704 = vpack.c.b16 %v1500, %v1496
        %v1705 = vpack.c.b16 %v1501, %v1497
        %v1706 = vpack.c.b16 %v1502, %v1498
        %v1707 = vpack.c.b16 %v1507, %v1503
        %v1708 = vpack.c.b16 %v1508, %v1504
        %v1709 = vpack.c.b16 %v1509, %v1505
        %v1710 = vpack.c.b16 %v1510, %v1506
        %v1711 = vpack.c.b16 %v1515, %v1511
        %v1712 = vpack.c.b16 %v1516, %v1512
        %v1713 = vpack.c.b16 %v1517, %v1513
        %v1714 = vpack.c.b16 %v1518, %v1514
        %v1715 = vpack.c.b16 %v1523, %v1519
        %v1716 = vpack.c.b16 %v1524, %v1520
        %v1717 = vpack.c.b16 %v1525, %v1521
        %v1718 = vpack.c.b16 %v1526, %v1522
        %v1719 = vpack.c.b16 %v1531, %v1527
        %v1720 = vpack.c.b16 %v1532, %v1528
        %v1721 = vpack.c.b16 %v1533, %v1529
        %v1722 = vpack.c.b16 %v1534, %v1530
        %v1723 = vpack.c.b16 %v1539, %v1535
        %v1724 = vpack.c.b16 %v1540, %v1536
        %v1725 = vpack.c.b16 %v1541, %v1537
        %v1726 = vpack.c.b16 %v1542, %v1538
        %v1727 = vpack.c.b16 %v1547, %v1543
        %v1728 = vpack.c.b16 %v1548, %v1544
        %v1729 = vpack.c.b16 %v1549, %v1545
        %v1730 = vpack.c.b16 %v1550, %v1546
        %v1731 = vpack.c.b16 %v1555, %v1551
        %v1732 = vpack.c.b16 %v1556, %v1552
        %v1733 = vpack.c.b16 %v1557, %v1553
        %v1734 = vpack.c.b16 %v1558, %v1554
        %v1735 = vpack.c.b16 %v1563, %v1559
        %v1736 = vpack.c.b16 %v1564, %v1560
        %v1737 = vpack.c.b16 %v1565, %v1561
        %v1738 = vpack.c.b16 %v1566, %v1562
        %v1739 = vpack.c.b16 %v1571, %v1567
        %v1740 = vpack.c.b16 %v1572, %v1568
        %v1741 = vpack.c.b16 %v1573, %v1569
        %v1742 = vpack.c.b16 %v1574, %v1570
        %v1743 = vpack.c.b16 %v1579, %v1575
        %v1744 = vpack.c.b16 %v1580, %v1576
        %v1745 = vpack.c.b16 %v1581, %v1577
        %v1746 = vpack.c.b16 %v1582, %v1578
        %v1747 = vpack.c.b16 %v1587, %v1583
        %v1748 = vpack.c.b16 %v1588, %v1584
        %v1749 = vpack.c.b16 %v1589, %v1585
        %v1750 = vpack.c.b16 %v1590, %v1586
        %v1751 = vpack.c.b16 %v1595, %v1591
        %v1752 = vpack.c.b16 %v1596, %v1592
        %v1753 = vpack.c.b16 %v1597, %v1593
        %v1754 = vpack.c.b16 %v1598, %v1594
        %v1755 = vpack.c.b16 %v1603, %v1599
        %v1756 = vpack.c.b16 %v1604, %v1600
        %v1757 = vpack.c.b16 %v1605, %v1601
        %v1758 = vpack.c.b16 %v1606, %v1602
        %v1759 = vpack.c.b16 %v1611, %v1607
        %v1760 = vpack.c.b16 %v1612, %v1608
        %v1761 = vpack.c.b16 %v1613, %v1609
        %v1762 = vpack.c.b16 %v1614, %v1610
        %v1763 = vpack.c.b16 %v1619, %v1615
        %v1764 = vpack.c.b16 %v1620, %v1616
        %v1765 = vpack.c.b16 %v1621, %v1617
        %v1766 = vpack.c.b16 %v1622, %v1618
        %v1767 = vpack.c.b16 %v1627, %v1623
        %v1768 = vpack.c.b16 %v1628, %v1624
        %v1769 = vpack.c.b16 %v1629, %v1625
        %v1770 = vpack.c.b16 %v1630, %v1626
        %v1771 = vpack.c.b16 %v1635, %v1631
        %v1772 = vpack.c.b16 %v1636, %v1632
        %v1773 = vpack.c.b16 %v1637, %v1633
        %v1774 = vpack.c.b16 %v1638, %v1634
        %v1775 = vpack.c.b16 %v1643, %v1639
        %v1776 = vpack.c.b16 %v1644, %v1640
        %v1777 = vpack.c.b16 %v1645, %v1641
        %v1778 = vpack.c.b16 %v1646, %v1642
        %v1779 = vpack.c.b16 %v1651, %v1647
        %v1780 = vpack.c.b16 %v1652, %v1648
        %v1781 = vpack.c.b16 %v1653, %v1649
        %v1782 = vpack.c.b16 %v1654, %v1650
        %1911 = vmatpush.bf16.msra.mxu0 %v1683
        %1912 = vmatpush.bf16.msra.mxu0 %v1679
        %1913 = vmatpush.bf16.msra.mxu0 %v1675
        %1914 = vmatpush.bf16.msra.mxu0 %v1671
        %1915 = vmatpush.bf16.msra.mxu0 %v1667
        %1916 = vmatpush.bf16.msra.mxu0 %v1663
        %1917 = vmatpush.bf16.msra.mxu0 %v1659
        %1918 = vmatpush.bf16.msra.mxu0 %v1655
        %1919 = vmatmul.bf16.gmra.mxu0 %v1015
        %v1920 = vpop.f32.mrf.mxu0
        %v1921 = vadd.f32 0.0, %v1920
        %v1922 = vpop.f32.mrf.mxu0
        %v1923 = vadd.f32 0.0, %v1922
        %1924 = vmatmul.bf16.gmra.mxu0 %v1019
        %v1925 = vpop.f32.mrf.mxu0
        %v1926 = vadd.f32 0.0, %v1925
        %v1927 = vpop.f32.mrf.mxu0
        %v1928 = vadd.f32 0.0, %v1927
        %1929 = vmatmul.bf16.gmra.mxu0 %v1023
        %v1930 = vpop.f32.mrf.mxu0
        %v1931 = vadd.f32 0.0, %v1930
        %v1932 = vpop.f32.mrf.mxu0
        %v1933 = vadd.f32 0.0, %v1932
        %1934 = vmatmul.bf16.gmra.mxu0 %v1027
        %v1935 = vpop.f32.mrf.mxu0
        %v1936 = vadd.f32 0.0, %v1935
        %v1937 = vpop.f32.mrf.mxu0
        %v1938 = vadd.f32 0.0, %v1937
        %1939 = vmatmul.bf16.gmra.mxu0 %v1031
        %v1940 = vpop.f32.mrf.mxu0
        %v1941 = vadd.f32 0.0, %v1940
        %v1942 = vpop.f32.mrf.mxu0
        %v1943 = vadd.f32 0.0, %v1942
        %1944 = vmatmul.bf16.gmra.mxu0 %v1035
        %v1945 = vpop.f32.mrf.mxu0
        %v1946 = vadd.f32 0.0, %v1945
        %v1947 = vpop.f32.mrf.mxu0
        %v1948 = vadd.f32 0.0, %v1947
        %1949 = vmatmul.bf16.gmra.mxu0 %v1039
        %v1950 = vpop.f32.mrf.mxu0
        %v1951 = vadd.f32 0.0, %v1950
        %v1952 = vpop.f32.mrf.mxu0
        %v1953 = vadd.f32 0.0, %v1952
        %1954 = vmatmul.bf16.gmra.mxu0 %v1043
        %v1955 = vpop.f32.mrf.mxu0
        %v1956 = vadd.f32 0.0, %v1955
        %v1957 = vpop.f32.mrf.mxu0
        %v1958 = vadd.f32 0.0, %v1957
        %1959 = vmatmul.bf16.gmra.mxu0 %v1047
        %v1960 = vpop.f32.mrf.mxu0
        %v1961 = vadd.f32 0.0, %v1960
        %v1962 = vpop.f32.mrf.mxu0
        %v1963 = vadd.f32 0.0, %v1962
        %1964 = vmatmul.bf16.gmra.mxu0 %v1051
        %v1965 = vpop.f32.mrf.mxu0
        %v1966 = vadd.f32 0.0, %v1965
        %v1967 = vpop.f32.mrf.mxu0
        %v1968 = vadd.f32 0.0, %v1967
        %1969 = vmatmul.bf16.gmra.mxu0 %v1055
        %v1970 = vpop.f32.mrf.mxu0
        %v1971 = vadd.f32 0.0, %v1970
        %v1972 = vpop.f32.mrf.mxu0
        %v1973 = vadd.f32 0.0, %v1972
        %1974 = vmatmul.bf16.gmra.mxu0 %v1059
        %v1975 = vpop.f32.mrf.mxu0
        %v1976 = vadd.f32 0.0, %v1975
        %v1977 = vpop.f32.mrf.mxu0
        %v1978 = vadd.f32 0.0, %v1977
        %1979 = vmatmul.bf16.gmra.mxu0 %v1063
        %v1980 = vpop.f32.mrf.mxu0
        %v1981 = vadd.f32 0.0, %v1980
        %v1982 = vpop.f32.mrf.mxu0
        %v1983 = vadd.f32 0.0, %v1982
        %1984 = vmatmul.bf16.gmra.mxu0 %v1067
        %v1985 = vpop.f32.mrf.mxu0
        %v1986 = vadd.f32 0.0, %v1985
        %v1987 = vpop.f32.mrf.mxu0
        %v1988 = vadd.f32 0.0, %v1987
        %1989 = vmatmul.bf16.gmra.mxu0 %v1071
        %v1990 = vpop.f32.mrf.mxu0
        %v1991 = vadd.f32 0.0, %v1990
        %v1992 = vpop.f32.mrf.mxu0
        %v1993 = vadd.f32 0.0, %v1992
        %1994 = vmatmul.bf16.gmra.mxu0 %v1075
        %v1995 = vpop.f32.mrf.mxu0
        %v1996 = vadd.f32 0.0, %v1995
        %v1997 = vpop.f32.mrf.mxu0
        %v1998 = vadd.f32 0.0, %v1997
        %1999 = vmatmul.bf16.gmra.mxu0 %v1079
        %v2000 = vpop.f32.mrf.mxu0
        %v2001 = vadd.f32 0.0, %v2000
        %v2002 = vpop.f32.mrf.mxu0
        %v2003 = vadd.f32 0.0, %v2002
        %2004 = vmatmul.bf16.gmra.mxu0 %v1083
        %v2005 = vpop.f32.mrf.mxu0
        %v2006 = vadd.f32 0.0, %v2005
        %v2007 = vpop.f32.mrf.mxu0
        %v2008 = vadd.f32 0.0, %v2007
        %2009 = vmatmul.bf16.gmra.mxu0 %v1087
        %v2010 = vpop.f32.mrf.mxu0
        %v2011 = vadd.f32 0.0, %v2010
        %v2012 = vpop.f32.mrf.mxu0
        %v2013 = vadd.f32 0.0, %v2012
        %2014 = vmatmul.bf16.gmra.mxu0 %v1091
        %v2015 = vpop.f32.mrf.mxu0
        %v2016 = vadd.f32 0.0, %v2015
        %v2017 = vpop.f32.mrf.mxu0
        %v2018 = vadd.f32 0.0, %v2017
        %2019 = vmatmul.bf16.gmra.mxu0 %v1095
        %v2020 = vpop.f32.mrf.mxu0
        %v2021 = vadd.f32 0.0, %v2020
        %v2022 = vpop.f32.mrf.mxu0
        %v2023 = vadd.f32 0.0, %v2022
        %2024 = vmatmul.bf16.gmra.mxu0 %v1099
        %v2025 = vpop.f32.mrf.mxu0
        %v2026 = vadd.f32 0.0, %v2025
        %v2027 = vpop.f32.mrf.mxu0
        %v2028 = vadd.f32 0.0, %v2027
        %2029 = vmatmul.bf16.gmra.mxu0 %v1103
        %v2030 = vpop.f32.mrf.mxu0
        %v2031 = vadd.f32 0.0, %v2030
        %v2032 = vpop.f32.mrf.mxu0
        %v2033 = vadd.f32 0.0, %v2032
        %2034 = vmatmul.bf16.gmra.mxu0 %v1107
        %v2035 = vpop.f32.mrf.mxu0
        %v2036 = vadd.f32 0.0, %v2035
        %v2037 = vpop.f32.mrf.mxu0
        %v2038 = vadd.f32 0.0, %v2037
        %2039 = vmatmul.bf16.gmra.mxu0 %v1111
        %v2040 = vpop.f32.mrf.mxu0
        %v2041 = vadd.f32 0.0, %v2040
        %v2042 = vpop.f32.mrf.mxu0
        %v2043 = vadd.f32 0.0, %v2042
        %2044 = vmatmul.bf16.gmra.mxu0 %v1115
        %v2045 = vpop.f32.mrf.mxu0
        %v2046 = vadd.f32 0.0, %v2045
        %v2047 = vpop.f32.mrf.mxu0
        %v2048 = vadd.f32 0.0, %v2047
        %2049 = vmatmul.bf16.gmra.mxu0 %v1119
        %v2050 = vpop.f32.mrf.mxu0
        %v2051 = vadd.f32 0.0, %v2050
        %v2052 = vpop.f32.mrf.mxu0
        %v2053 = vadd.f32 0.0, %v2052
        %2054 = vmatmul.bf16.gmra.mxu0 %v1123
        %v2055 = vpop.f32.mrf.mxu0
        %v2056 = vadd.f32 0.0, %v2055
        %v2057 = vpop.f32.mrf.mxu0
        %v2058 = vadd.f32 0.0, %v2057
        %2059 = vmatmul.bf16.gmra.mxu0 %v1127
        %v2060 = vpop.f32.mrf.mxu0
        %v2061 = vadd.f32 0.0, %v2060
        %v2062 = vpop.f32.mrf.mxu0
        %v2063 = vadd.f32 0.0, %v2062
        %2064 = vmatmul.bf16.gmra.mxu0 %v1131
        %v2065 = vpop.f32.mrf.mxu0
        %v2066 = vadd.f32 0.0, %v2065
        %v2067 = vpop.f32.mrf.mxu0
        %v2068 = vadd.f32 0.0, %v2067
        %2069 = vmatmul.bf16.gmra.mxu0 %v1135
        %v2070 = vpop.f32.mrf.mxu0
        %v2071 = vadd.f32 0.0, %v2070
        %v2072 = vpop.f32.mrf.mxu0
        %v2073 = vadd.f32 0.0, %v2072
        %2074 = vmatmul.bf16.gmra.mxu0 %v1139
        %v2075 = vpop.f32.mrf.mxu0
        %v2076 = vadd.f32 0.0, %v2075
        %v2077 = vpop.f32.mrf.mxu0
        %v2078 = vadd.f32 0.0, %v2077
        %2079 = vdwg.mxu0
        %2080 = vmatpush.bf16.msra.mxu0 %v1715
        %2081 = vmatpush.bf16.msra.mxu0 %v1711
        %2082 = vmatpush.bf16.msra.mxu0 %v1707
        %2083 = vmatpush.bf16.msra.mxu0 %v1703
        %2084 = vmatpush.bf16.msra.mxu0 %v1699
        %2085 = vmatpush.bf16.msra.mxu0 %v1695
        %2086 = vmatpush.bf16.msra.mxu0 %v1691
        %2087 = vmatpush.bf16.msra.mxu0 %v1687
        %2088 = vmatmul.bf16.gmra.mxu0 %v1016
        %v2089 = vpop.f32.mrf.mxu0
        %v2090 = vadd.f32 %v1921, %v2089
        %v2091 = vpop.f32.mrf.mxu0
        %v2092 = vadd.f32 %v1923, %v2091
        %2093 = vmatmul.bf16.gmra.mxu0 %v1020
        %v2094 = vpop.f32.mrf.mxu0
        %v2095 = vadd.f32 %v1926, %v2094
        %v2096 = vpop.f32.mrf.mxu0
        %v2097 = vadd.f32 %v1928, %v2096
        %2098 = vmatmul.bf16.gmra.mxu0 %v1024
        %v2099 = vpop.f32.mrf.mxu0
        %v2100 = vadd.f32 %v1931, %v2099
        %v2101 = vpop.f32.mrf.mxu0
        %v2102 = vadd.f32 %v1933, %v2101
        %2103 = vmatmul.bf16.gmra.mxu0 %v1028
        %v2104 = vpop.f32.mrf.mxu0
        %v2105 = vadd.f32 %v1936, %v2104
        %v2106 = vpop.f32.mrf.mxu0
        %v2107 = vadd.f32 %v1938, %v2106
        %2108 = vmatmul.bf16.gmra.mxu0 %v1032
        %v2109 = vpop.f32.mrf.mxu0
        %v2110 = vadd.f32 %v1941, %v2109
        %v2111 = vpop.f32.mrf.mxu0
        %v2112 = vadd.f32 %v1943, %v2111
        %2113 = vmatmul.bf16.gmra.mxu0 %v1036
        %v2114 = vpop.f32.mrf.mxu0
        %v2115 = vadd.f32 %v1946, %v2114
        %v2116 = vpop.f32.mrf.mxu0
        %v2117 = vadd.f32 %v1948, %v2116
        %2118 = vmatmul.bf16.gmra.mxu0 %v1040
        %v2119 = vpop.f32.mrf.mxu0
        %v2120 = vadd.f32 %v1951, %v2119
        %v2121 = vpop.f32.mrf.mxu0
        %v2122 = vadd.f32 %v1953, %v2121
        %2123 = vmatmul.bf16.gmra.mxu0 %v1044
        %v2124 = vpop.f32.mrf.mxu0
        %v2125 = vadd.f32 %v1956, %v2124
        %v2126 = vpop.f32.mrf.mxu0
        %v2127 = vadd.f32 %v1958, %v2126
        %2128 = vmatmul.bf16.gmra.mxu0 %v1048
        %v2129 = vpop.f32.mrf.mxu0
        %v2130 = vadd.f32 %v1961, %v2129
        %v2131 = vpop.f32.mrf.mxu0
        %v2132 = vadd.f32 %v1963, %v2131
        %2133 = vmatmul.bf16.gmra.mxu0 %v1052
        %v2134 = vpop.f32.mrf.mxu0
        %v2135 = vadd.f32 %v1966, %v2134
        %v2136 = vpop.f32.mrf.mxu0
        %v2137 = vadd.f32 %v1968, %v2136
        %2138 = vmatmul.bf16.gmra.mxu0 %v1056
        %v2139 = vpop.f32.mrf.mxu0
        %v2140 = vadd.f32 %v1971, %v2139
        %v2141 = vpop.f32.mrf.mxu0
        %v2142 = vadd.f32 %v1973, %v2141
        %2143 = vmatmul.bf16.gmra.mxu0 %v1060
        %v2144 = vpop.f32.mrf.mxu0
        %v2145 = vadd.f32 %v1976, %v2144
        %v2146 = vpop.f32.mrf.mxu0
        %v2147 = vadd.f32 %v1978, %v2146
        %2148 = vmatmul.bf16.gmra.mxu0 %v1064
        %v2149 = vpop.f32.mrf.mxu0
        %v2150 = vadd.f32 %v1981, %v2149
        %v2151 = vpop.f32.mrf.mxu0
        %v2152 = vadd.f32 %v1983, %v2151
        %2153 = vmatmul.bf16.gmra.mxu0 %v1068
        %v2154 = vpop.f32.mrf.mxu0
        %v2155 = vadd.f32 %v1986, %v2154
        %v2156 = vpop.f32.mrf.mxu0
        %v2157 = vadd.f32 %v1988, %v2156
        %2158 = vmatmul.bf16.gmra.mxu0 %v1072
        %v2159 = vpop.f32.mrf.mxu0
        %v2160 = vadd.f32 %v1991, %v2159
        %v2161 = vpop.f32.mrf.mxu0
        %v2162 = vadd.f32 %v1993, %v2161
        %2163 = vmatmul.bf16.gmra.mxu0 %v1076
        %v2164 = vpop.f32.mrf.mxu0
        %v2165 = vadd.f32 %v1996, %v2164
        %v2166 = vpop.f32.mrf.mxu0
        %v2167 = vadd.f32 %v1998, %v2166
        %2168 = vmatmul.bf16.gmra.mxu0 %v1080
        %v2169 = vpop.f32.mrf.mxu0
        %v2170 = vadd.f32 %v2001, %v2169
        %v2171 = vpop.f32.mrf.mxu0
        %v2172 = vadd.f32 %v2003, %v2171
        %2173 = vmatmul.bf16.gmra.mxu0 %v1084
        %v2174 = vpop.f32.mrf.mxu0
        %v2175 = vadd.f32 %v2006, %v2174
        %v2176 = vpop.f32.mrf.mxu0
        %v2177 = vadd.f32 %v2008, %v2176
        %2178 = vmatmul.bf16.gmra.mxu0 %v1088
        %v2179 = vpop.f32.mrf.mxu0
        %v2180 = vadd.f32 %v2011, %v2179
        %v2181 = vpop.f32.mrf.mxu0
        %v2182 = vadd.f32 %v2013, %v2181
        %2183 = vmatmul.bf16.gmra.mxu0 %v1092
        %v2184 = vpop.f32.mrf.mxu0
        %v2185 = vadd.f32 %v2016, %v2184
        %v2186 = vpop.f32.mrf.mxu0
        %v2187 = vadd.f32 %v2018, %v2186
        %2188 = vmatmul.bf16.gmra.mxu0 %v1096
        %v2189 = vpop.f32.mrf.mxu0
        %v2190 = vadd.f32 %v2021, %v2189
        %v2191 = vpop.f32.mrf.mxu0
        %v2192 = vadd.f32 %v2023, %v2191
        %2193 = vmatmul.bf16.gmra.mxu0 %v1100
        %v2194 = vpop.f32.mrf.mxu0
        %v2195 = vadd.f32 %v2026, %v2194
        %v2196 = vpop.f32.mrf.mxu0
        %v2197 = vadd.f32 %v2028, %v2196
        %2198 = vmatmul.bf16.gmra.mxu0 %v1104
        %v2199 = vpop.f32.mrf.mxu0
        %v2200 = vadd.f32 %v2031, %v2199
        %v2201 = vpop.f32.mrf.mxu0
        %v2202 = vadd.f32 %v2033, %v2201
        %2203 = vmatmul.bf16.gmra.mxu0 %v1108
        %v2204 = vpop.f32.mrf.mxu0
        %v2205 = vadd.f32 %v2036, %v2204
        %v2206 = vpop.f32.mrf.mxu0
        %v2207 = vadd.f32 %v2038, %v2206
        %2208 = vmatmul.bf16.gmra.mxu0 %v1112
        %v2209 = vpop.f32.mrf.mxu0
        %v2210 = vadd.f32 %v2041, %v2209
        %v2211 = vpop.f32.mrf.mxu0
        %v2212 = vadd.f32 %v2043, %v2211
        %2213 = vmatmul.bf16.gmra.mxu0 %v1116
        %v2214 = vpop.f32.mrf.mxu0
        %v2215 = vadd.f32 %v2046, %v2214
        %v2216 = vpop.f32.mrf.mxu0
        %v2217 = vadd.f32 %v2048, %v2216
        %2218 = vmatmul.bf16.gmra.mxu0 %v1120
        %v2219 = vpop.f32.mrf.mxu0
        %v2220 = vadd.f32 %v2051, %v2219
        %v2221 = vpop.f32.mrf.mxu0
        %v2222 = vadd.f32 %v2053, %v2221
        %2223 = vmatmul.bf16.gmra.mxu0 %v1124
        %v2224 = vpop.f32.mrf.mxu0
        %v2225 = vadd.f32 %v2056, %v2224
        %v2226 = vpop.f32.mrf.mxu0
        %v2227 = vadd.f32 %v2058, %v2226
        %2228 = vmatmul.bf16.gmra.mxu0 %v1128
        %v2229 = vpop.f32.mrf.mxu0
        %v2230 = vadd.f32 %v2061, %v2229
        %v2231 = vpop.f32.mrf.mxu0
        %v2232 = vadd.f32 %v2063, %v2231
        %2233 = vmatmul.bf16.gmra.mxu0 %v1132
        %v2234 = vpop.f32.mrf.mxu0
        %v2235 = vadd.f32 %v2066, %v2234
        %v2236 = vpop.f32.mrf.mxu0
        %v2237 = vadd.f32 %v2068, %v2236
        %2238 = vmatmul.bf16.gmra.mxu0 %v1136
        %v2239 = vpop.f32.mrf.mxu0
        %v2240 = vadd.f32 %v2071, %v2239
        %v2241 = vpop.f32.mrf.mxu0
        %v2242 = vadd.f32 %v2073, %v2241
        %2243 = vmatmul.bf16.gmra.mxu0 %v1140
        %v2244 = vpop.f32.mrf.mxu0
        %v2245 = vadd.f32 %v2076, %v2244
        %v2246 = vpop.f32.mrf.mxu0
        %v2247 = vadd.f32 %v2078, %v2246
        %2248 = vdwg.mxu0
        %2249 = vmatpush.bf16.msra.mxu0 %v1747
        %2250 = vmatpush.bf16.msra.mxu0 %v1743
        %2251 = vmatpush.bf16.msra.mxu0 %v1739
        %2252 = vmatpush.bf16.msra.mxu0 %v1735
        %2253 = vmatpush.bf16.msra.mxu0 %v1731
        %2254 = vmatpush.bf16.msra.mxu0 %v1727
        %2255 = vmatpush.bf16.msra.mxu0 %v1723
        %2256 = vmatpush.bf16.msra.mxu0 %v1719
        %2257 = vmatmul.bf16.gmra.mxu0 %v1017
        %v2258 = vpop.f32.mrf.mxu0
        %v2259 = vadd.f32 %v2090, %v2258
        %v2260 = vpop.f32.mrf.mxu0
        %v2261 = vadd.f32 %v2092, %v2260
        %2262 = vmatmul.bf16.gmra.mxu0 %v1021
        %v2263 = vpop.f32.mrf.mxu0
        %v2264 = vadd.f32 %v2095, %v2263
        %v2265 = vpop.f32.mrf.mxu0
        %v2266 = vadd.f32 %v2097, %v2265
        %2267 = vmatmul.bf16.gmra.mxu0 %v1025
        %v2268 = vpop.f32.mrf.mxu0
        %v2269 = vadd.f32 %v2100, %v2268
        %v2270 = vpop.f32.mrf.mxu0
        %v2271 = vadd.f32 %v2102, %v2270
        %2272 = vmatmul.bf16.gmra.mxu0 %v1029
        %v2273 = vpop.f32.mrf.mxu0
        %v2274 = vadd.f32 %v2105, %v2273
        %v2275 = vpop.f32.mrf.mxu0
        %v2276 = vadd.f32 %v2107, %v2275
        %2277 = vmatmul.bf16.gmra.mxu0 %v1033
        %v2278 = vpop.f32.mrf.mxu0
        %v2279 = vadd.f32 %v2110, %v2278
        %v2280 = vpop.f32.mrf.mxu0
        %v2281 = vadd.f32 %v2112, %v2280
        %2282 = vmatmul.bf16.gmra.mxu0 %v1037
        %v2283 = vpop.f32.mrf.mxu0
        %v2284 = vadd.f32 %v2115, %v2283
        %v2285 = vpop.f32.mrf.mxu0
        %v2286 = vadd.f32 %v2117, %v2285
        %2287 = vmatmul.bf16.gmra.mxu0 %v1041
        %v2288 = vpop.f32.mrf.mxu0
        %v2289 = vadd.f32 %v2120, %v2288
        %v2290 = vpop.f32.mrf.mxu0
        %v2291 = vadd.f32 %v2122, %v2290
        %2292 = vmatmul.bf16.gmra.mxu0 %v1045
        %v2293 = vpop.f32.mrf.mxu0
        %v2294 = vadd.f32 %v2125, %v2293
        %v2295 = vpop.f32.mrf.mxu0
        %v2296 = vadd.f32 %v2127, %v2295
        %2297 = vmatmul.bf16.gmra.mxu0 %v1049
        %v2298 = vpop.f32.mrf.mxu0
        %v2299 = vadd.f32 %v2130, %v2298
        %v2300 = vpop.f32.mrf.mxu0
        %v2301 = vadd.f32 %v2132, %v2300
        %2302 = vmatmul.bf16.gmra.mxu0 %v1053
        %v2303 = vpop.f32.mrf.mxu0
        %v2304 = vadd.f32 %v2135, %v2303
        %v2305 = vpop.f32.mrf.mxu0
        %v2306 = vadd.f32 %v2137, %v2305
        %2307 = vmatmul.bf16.gmra.mxu0 %v1057
        %v2308 = vpop.f32.mrf.mxu0
        %v2309 = vadd.f32 %v2140, %v2308
        %v2310 = vpop.f32.mrf.mxu0
        %v2311 = vadd.f32 %v2142, %v2310
        %2312 = vmatmul.bf16.gmra.mxu0 %v1061
        %v2313 = vpop.f32.mrf.mxu0
        %v2314 = vadd.f32 %v2145, %v2313
        %v2315 = vpop.f32.mrf.mxu0
        %v2316 = vadd.f32 %v2147, %v2315
        %2317 = vmatmul.bf16.gmra.mxu0 %v1065
        %v2318 = vpop.f32.mrf.mxu0
        %v2319 = vadd.f32 %v2150, %v2318
        %v2320 = vpop.f32.mrf.mxu0
        %v2321 = vadd.f32 %v2152, %v2320
        %2322 = vmatmul.bf16.gmra.mxu0 %v1069
        %v2323 = vpop.f32.mrf.mxu0
        %v2324 = vadd.f32 %v2155, %v2323
        %v2325 = vpop.f32.mrf.mxu0
        %v2326 = vadd.f32 %v2157, %v2325
        %2327 = vmatmul.bf16.gmra.mxu0 %v1073
        %v2328 = vpop.f32.mrf.mxu0
        %v2329 = vadd.f32 %v2160, %v2328
        %v2330 = vpop.f32.mrf.mxu0
        %v2331 = vadd.f32 %v2162, %v2330
        %2332 = vmatmul.bf16.gmra.mxu0 %v1077
        %v2333 = vpop.f32.mrf.mxu0
        %v2334 = vadd.f32 %v2165, %v2333
        %v2335 = vpop.f32.mrf.mxu0
        %v2336 = vadd.f32 %v2167, %v2335
        %2337 = vmatmul.bf16.gmra.mxu0 %v1081
        %v2338 = vpop.f32.mrf.mxu0
        %v2339 = vadd.f32 %v2170, %v2338
        %v2340 = vpop.f32.mrf.mxu0
        %v2341 = vadd.f32 %v2172, %v2340
        %2342 = vmatmul.bf16.gmra.mxu0 %v1085
        %v2343 = vpop.f32.mrf.mxu0
        %v2344 = vadd.f32 %v2175, %v2343
        %v2345 = vpop.f32.mrf.mxu0
        %v2346 = vadd.f32 %v2177, %v2345
        %2347 = vmatmul.bf16.gmra.mxu0 %v1089
        %v2348 = vpop.f32.mrf.mxu0
        %v2349 = vadd.f32 %v2180, %v2348
        %v2350 = vpop.f32.mrf.mxu0
        %v2351 = vadd.f32 %v2182, %v2350
        %2352 = vmatmul.bf16.gmra.mxu0 %v1093
        %v2353 = vpop.f32.mrf.mxu0
        %v2354 = vadd.f32 %v2185, %v2353
        %v2355 = vpop.f32.mrf.mxu0
        %v2356 = vadd.f32 %v2187, %v2355
        %2357 = vmatmul.bf16.gmra.mxu0 %v1097
        %v2358 = vpop.f32.mrf.mxu0
        %v2359 = vadd.f32 %v2190, %v2358
        %v2360 = vpop.f32.mrf.mxu0
        %v2361 = vadd.f32 %v2192, %v2360
        %2362 = vmatmul.bf16.gmra.mxu0 %v1101
        %v2363 = vpop.f32.mrf.mxu0
        %v2364 = vadd.f32 %v2195, %v2363
        %v2365 = vpop.f32.mrf.mxu0
        %v2366 = vadd.f32 %v2197, %v2365
        %2367 = vmatmul.bf16.gmra.mxu0 %v1105
        %v2368 = vpop.f32.mrf.mxu0
        %v2369 = vadd.f32 %v2200, %v2368
        %v2370 = vpop.f32.mrf.mxu0
        %v2371 = vadd.f32 %v2202, %v2370
        %2372 = vmatmul.bf16.gmra.mxu0 %v1109
        %v2373 = vpop.f32.mrf.mxu0
        %v2374 = vadd.f32 %v2205, %v2373
        %v2375 = vpop.f32.mrf.mxu0
        %v2376 = vadd.f32 %v2207, %v2375
        %2377 = vmatmul.bf16.gmra.mxu0 %v1113
        %v2378 = vpop.f32.mrf.mxu0
        %v2379 = vadd.f32 %v2210, %v2378
        %v2380 = vpop.f32.mrf.mxu0
        %v2381 = vadd.f32 %v2212, %v2380
        %2382 = vmatmul.bf16.gmra.mxu0 %v1117
        %v2383 = vpop.f32.mrf.mxu0
        %v2384 = vadd.f32 %v2215, %v2383
        %v2385 = vpop.f32.mrf.mxu0
        %v2386 = vadd.f32 %v2217, %v2385
        %2387 = vmatmul.bf16.gmra.mxu0 %v1121
        %v2388 = vpop.f32.mrf.mxu0
        %v2389 = vadd.f32 %v2220, %v2388
        %v2390 = vpop.f32.mrf.mxu0
        %v2391 = vadd.f32 %v2222, %v2390
        %2392 = vmatmul.bf16.gmra.mxu0 %v1125
        %v2393 = vpop.f32.mrf.mxu0
        %v2394 = vadd.f32 %v2225, %v2393
        %v2395 = vpop.f32.mrf.mxu0
        %v2396 = vadd.f32 %v2227, %v2395
        %2397 = vmatmul.bf16.gmra.mxu0 %v1129
        %v2398 = vpop.f32.mrf.mxu0
        %v2399 = vadd.f32 %v2230, %v2398
        %v2400 = vpop.f32.mrf.mxu0
        %v2401 = vadd.f32 %v2232, %v2400
        %2402 = vmatmul.bf16.gmra.mxu0 %v1133
        %v2403 = vpop.f32.mrf.mxu0
        %v2404 = vadd.f32 %v2235, %v2403
        %v2405 = vpop.f32.mrf.mxu0
        %v2406 = vadd.f32 %v2237, %v2405
        %2407 = vmatmul.bf16.gmra.mxu0 %v1137
        %v2408 = vpop.f32.mrf.mxu0
        %v2409 = vadd.f32 %v2240, %v2408
        %v2410 = vpop.f32.mrf.mxu0
        %v2411 = vadd.f32 %v2242, %v2410
        %2412 = vmatmul.bf16.gmra.mxu0 %v1141
        %v2413 = vpop.f32.mrf.mxu0
        %v2414 = vadd.f32 %v2245, %v2413
        %v2415 = vpop.f32.mrf.mxu0
        %v2416 = vadd.f32 %v2247, %v2415
        %2417 = vdwg.mxu0
        %2418 = vmatpush.bf16.msra.mxu0 %v1779
        %2419 = vmatpush.bf16.msra.mxu0 %v1775
        %2420 = vmatpush.bf16.msra.mxu0 %v1771
        %2421 = vmatpush.bf16.msra.mxu0 %v1767
        %2422 = vmatpush.bf16.msra.mxu0 %v1763
        %2423 = vmatpush.bf16.msra.mxu0 %v1759
        %2424 = vmatpush.bf16.msra.mxu0 %v1755
        %2425 = vmatpush.bf16.msra.mxu0 %v1751
        %2426 = vmatmul.bf16.gmra.mxu0 %v1018
        %v2427 = vpop.f32.mrf.mxu0
        %v2428 = vadd.f32 %v2259, %v2427
        %v2429 = vpop.f32.mrf.mxu0
        %v2430 = vadd.f32 %v2261, %v2429
        %2431 = vmatmul.bf16.gmra.mxu0 %v1022
        %v2432 = vpop.f32.mrf.mxu0
        %v2433 = vadd.f32 %v2264, %v2432
        %v2434 = vpop.f32.mrf.mxu0
        %v2435 = vadd.f32 %v2266, %v2434
        %2436 = vmatmul.bf16.gmra.mxu0 %v1026
        %v2437 = vpop.f32.mrf.mxu0
        %v2438 = vadd.f32 %v2269, %v2437
        %v2439 = vpop.f32.mrf.mxu0
        %v2440 = vadd.f32 %v2271, %v2439
        %2441 = vmatmul.bf16.gmra.mxu0 %v1030
        %v2442 = vpop.f32.mrf.mxu0
        %v2443 = vadd.f32 %v2274, %v2442
        %v2444 = vpop.f32.mrf.mxu0
        %v2445 = vadd.f32 %v2276, %v2444
        %2446 = vmatmul.bf16.gmra.mxu0 %v1034
        %v2447 = vpop.f32.mrf.mxu0
        %v2448 = vadd.f32 %v2279, %v2447
        %v2449 = vpop.f32.mrf.mxu0
        %v2450 = vadd.f32 %v2281, %v2449
        %2451 = vmatmul.bf16.gmra.mxu0 %v1038
        %v2452 = vpop.f32.mrf.mxu0
        %v2453 = vadd.f32 %v2284, %v2452
        %v2454 = vpop.f32.mrf.mxu0
        %v2455 = vadd.f32 %v2286, %v2454
        %2456 = vmatmul.bf16.gmra.mxu0 %v1042
        %v2457 = vpop.f32.mrf.mxu0
        %v2458 = vadd.f32 %v2289, %v2457
        %v2459 = vpop.f32.mrf.mxu0
        %v2460 = vadd.f32 %v2291, %v2459
        %2461 = vmatmul.bf16.gmra.mxu0 %v1046
        %v2462 = vpop.f32.mrf.mxu0
        %v2463 = vadd.f32 %v2294, %v2462
        %v2464 = vpop.f32.mrf.mxu0
        %v2465 = vadd.f32 %v2296, %v2464
        %2466 = vmatmul.bf16.gmra.mxu0 %v1050
        %v2467 = vpop.f32.mrf.mxu0
        %v2468 = vadd.f32 %v2299, %v2467
        %v2469 = vpop.f32.mrf.mxu0
        %v2470 = vadd.f32 %v2301, %v2469
        %2471 = vmatmul.bf16.gmra.mxu0 %v1054
        %v2472 = vpop.f32.mrf.mxu0
        %v2473 = vadd.f32 %v2304, %v2472
        %v2474 = vpop.f32.mrf.mxu0
        %v2475 = vadd.f32 %v2306, %v2474
        %2476 = vmatmul.bf16.gmra.mxu0 %v1058
        %v2477 = vpop.f32.mrf.mxu0
        %v2478 = vadd.f32 %v2309, %v2477
        %v2479 = vpop.f32.mrf.mxu0
        %v2480 = vadd.f32 %v2311, %v2479
        %2481 = vmatmul.bf16.gmra.mxu0 %v1062
        %v2482 = vpop.f32.mrf.mxu0
        %v2483 = vadd.f32 %v2314, %v2482
        %v2484 = vpop.f32.mrf.mxu0
        %v2485 = vadd.f32 %v2316, %v2484
        %2486 = vmatmul.bf16.gmra.mxu0 %v1066
        %v2487 = vpop.f32.mrf.mxu0
        %v2488 = vadd.f32 %v2319, %v2487
        %v2489 = vpop.f32.mrf.mxu0
        %v2490 = vadd.f32 %v2321, %v2489
        %2491 = vmatmul.bf16.gmra.mxu0 %v1070
        %v2492 = vpop.f32.mrf.mxu0
        %v2493 = vadd.f32 %v2324, %v2492
        %v2494 = vpop.f32.mrf.mxu0
        %v2495 = vadd.f32 %v2326, %v2494
        %2496 = vmatmul.bf16.gmra.mxu0 %v1074
        %v2497 = vpop.f32.mrf.mxu0
        %v2498 = vadd.f32 %v2329, %v2497
        %v2499 = vpop.f32.mrf.mxu0
        %v2500 = vadd.f32 %v2331, %v2499
        %2501 = vmatmul.bf16.gmra.mxu0 %v1078
        %v2502 = vpop.f32.mrf.mxu0
        %v2503 = vadd.f32 %v2334, %v2502
        %v2504 = vpop.f32.mrf.mxu0
        %v2505 = vadd.f32 %v2336, %v2504
        %2506 = vmatmul.bf16.gmra.mxu0 %v1082
        %v2507 = vpop.f32.mrf.mxu0
        %v2508 = vadd.f32 %v2339, %v2507
        %v2509 = vpop.f32.mrf.mxu0
        %v2510 = vadd.f32 %v2341, %v2509
        %2511 = vmatmul.bf16.gmra.mxu0 %v1086
        %v2512 = vpop.f32.mrf.mxu0
        %v2513 = vadd.f32 %v2344, %v2512
        %v2514 = vpop.f32.mrf.mxu0
        %v2515 = vadd.f32 %v2346, %v2514
        %2516 = vmatmul.bf16.gmra.mxu0 %v1090
        %v2517 = vpop.f32.mrf.mxu0
        %v2518 = vadd.f32 %v2349, %v2517
        %v2519 = vpop.f32.mrf.mxu0
        %v2520 = vadd.f32 %v2351, %v2519
        %2521 = vmatmul.bf16.gmra.mxu0 %v1094
        %v2522 = vpop.f32.mrf.mxu0
        %v2523 = vadd.f32 %v2354, %v2522
        %v2524 = vpop.f32.mrf.mxu0
        %v2525 = vadd.f32 %v2356, %v2524
        %2526 = vmatmul.bf16.gmra.mxu0 %v1098
        %v2527 = vpop.f32.mrf.mxu0
        %v2528 = vadd.f32 %v2359, %v2527
        %v2529 = vpop.f32.mrf.mxu0
        %v2530 = vadd.f32 %v2361, %v2529
        %2531 = vmatmul.bf16.gmra.mxu0 %v1102
        %v2532 = vpop.f32.mrf.mxu0
        %v2533 = vadd.f32 %v2364, %v2532
        %v2534 = vpop.f32.mrf.mxu0
        %v2535 = vadd.f32 %v2366, %v2534
        %2536 = vmatmul.bf16.gmra.mxu0 %v1106
        %v2537 = vpop.f32.mrf.mxu0
        %v2538 = vadd.f32 %v2369, %v2537
        %v2539 = vpop.f32.mrf.mxu0
        %v2540 = vadd.f32 %v2371, %v2539
        %2541 = vmatmul.bf16.gmra.mxu0 %v1110
        %v2542 = vpop.f32.mrf.mxu0
        %v2543 = vadd.f32 %v2374, %v2542
        %v2544 = vpop.f32.mrf.mxu0
        %v2545 = vadd.f32 %v2376, %v2544
        %2546 = vmatmul.bf16.gmra.mxu0 %v1114
        %v2547 = vpop.f32.mrf.mxu0
        %v2548 = vadd.f32 %v2379, %v2547
        %v2549 = vpop.f32.mrf.mxu0
        %v2550 = vadd.f32 %v2381, %v2549
        %2551 = vmatmul.bf16.gmra.mxu0 %v1118
        %v2552 = vpop.f32.mrf.mxu0
        %v2553 = vadd.f32 %v2384, %v2552
        %v2554 = vpop.f32.mrf.mxu0
        %v2555 = vadd.f32 %v2386, %v2554
        %2556 = vmatmul.bf16.gmra.mxu0 %v1122
        %v2557 = vpop.f32.mrf.mxu0
        %v2558 = vadd.f32 %v2389, %v2557
        %v2559 = vpop.f32.mrf.mxu0
        %v2560 = vadd.f32 %v2391, %v2559
        %2561 = vmatmul.bf16.gmra.mxu0 %v1126
        %v2562 = vpop.f32.mrf.mxu0
        %v2563 = vadd.f32 %v2394, %v2562
        %v2564 = vpop.f32.mrf.mxu0
        %v2565 = vadd.f32 %v2396, %v2564
        %2566 = vmatmul.bf16.gmra.mxu0 %v1130
        %v2567 = vpop.f32.mrf.mxu0
        %v2568 = vadd.f32 %v2399, %v2567
        %v2569 = vpop.f32.mrf.mxu0
        %v2570 = vadd.f32 %v2401, %v2569
        %2571 = vmatmul.bf16.gmra.mxu0 %v1134
        %v2572 = vpop.f32.mrf.mxu0
        %v2573 = vadd.f32 %v2404, %v2572
        %v2574 = vpop.f32.mrf.mxu0
        %v2575 = vadd.f32 %v2406, %v2574
        %2576 = vmatmul.bf16.gmra.mxu0 %v1138
        %v2577 = vpop.f32.mrf.mxu0
        %v2578 = vadd.f32 %v2409, %v2577
        %v2579 = vpop.f32.mrf.mxu0
        %v2580 = vadd.f32 %v2411, %v2579
        %2581 = vmatmul.bf16.gmra.mxu0 %v1142
        %v2582 = vpop.f32.mrf.mxu0
        %v2583 = vadd.f32 %v2414, %v2582
        %v2584 = vpop.f32.mrf.mxu0
        %v2585 = vadd.f32 %v2416, %v2584
        %2586 = vdwg.mxu0
        %2587 = vmatpush.bf16.msra.mxu0 %v1684
        %2588 = vmatpush.bf16.msra.mxu0 %v1680
        %2589 = vmatpush.bf16.msra.mxu0 %v1676
        %2590 = vmatpush.bf16.msra.mxu0 %v1672
        %2591 = vmatpush.bf16.msra.mxu0 %v1668
        %2592 = vmatpush.bf16.msra.mxu0 %v1664
        %2593 = vmatpush.bf16.msra.mxu0 %v1660
        %2594 = vmatpush.bf16.msra.mxu0 %v1656
        %2595 = vmatmul.bf16.gmra.mxu0 %v1015
        %v2596 = vpop.f32.mrf.mxu0
        %v2597 = vadd.f32 0.0, %v2596
        %v2598 = vpop.f32.mrf.mxu0
        %v2599 = vadd.f32 0.0, %v2598
        %2600 = vmatmul.bf16.gmra.mxu0 %v1019
        %v2601 = vpop.f32.mrf.mxu0
        %v2602 = vadd.f32 0.0, %v2601
        %v2603 = vpop.f32.mrf.mxu0
        %v2604 = vadd.f32 0.0, %v2603
        %2605 = vmatmul.bf16.gmra.mxu0 %v1023
        %v2606 = vpop.f32.mrf.mxu0
        %v2607 = vadd.f32 0.0, %v2606
        %v2608 = vpop.f32.mrf.mxu0
        %v2609 = vadd.f32 0.0, %v2608
        %2610 = vmatmul.bf16.gmra.mxu0 %v1027
        %v2611 = vpop.f32.mrf.mxu0
        %v2612 = vadd.f32 0.0, %v2611
        %v2613 = vpop.f32.mrf.mxu0
        %v2614 = vadd.f32 0.0, %v2613
        %2615 = vmatmul.bf16.gmra.mxu0 %v1031
        %v2616 = vpop.f32.mrf.mxu0
        %v2617 = vadd.f32 0.0, %v2616
        %v2618 = vpop.f32.mrf.mxu0
        %v2619 = vadd.f32 0.0, %v2618
        %2620 = vmatmul.bf16.gmra.mxu0 %v1035
        %v2621 = vpop.f32.mrf.mxu0
        %v2622 = vadd.f32 0.0, %v2621
        %v2623 = vpop.f32.mrf.mxu0
        %v2624 = vadd.f32 0.0, %v2623
        %2625 = vmatmul.bf16.gmra.mxu0 %v1039
        %v2626 = vpop.f32.mrf.mxu0
        %v2627 = vadd.f32 0.0, %v2626
        %v2628 = vpop.f32.mrf.mxu0
        %v2629 = vadd.f32 0.0, %v2628
        %2630 = vmatmul.bf16.gmra.mxu0 %v1043
        %v2631 = vpop.f32.mrf.mxu0
        %v2632 = vadd.f32 0.0, %v2631
        %v2633 = vpop.f32.mrf.mxu0
        %v2634 = vadd.f32 0.0, %v2633
        %2635 = vmatmul.bf16.gmra.mxu0 %v1047
        %v2636 = vpop.f32.mrf.mxu0
        %v2637 = vadd.f32 0.0, %v2636
        %v2638 = vpop.f32.mrf.mxu0
        %v2639 = vadd.f32 0.0, %v2638
        %2640 = vmatmul.bf16.gmra.mxu0 %v1051
        %v2641 = vpop.f32.mrf.mxu0
        %v2642 = vadd.f32 0.0, %v2641
        %v2643 = vpop.f32.mrf.mxu0
        %v2644 = vadd.f32 0.0, %v2643
        %2645 = vmatmul.bf16.gmra.mxu0 %v1055
        %v2646 = vpop.f32.mrf.mxu0
        %v2647 = vadd.f32 0.0, %v2646
        %v2648 = vpop.f32.mrf.mxu0
        %v2649 = vadd.f32 0.0, %v2648
        %2650 = vmatmul.bf16.gmra.mxu0 %v1059
        %v2651 = vpop.f32.mrf.mxu0
        %v2652 = vadd.f32 0.0, %v2651
        %v2653 = vpop.f32.mrf.mxu0
        %v2654 = vadd.f32 0.0, %v2653
        %2655 = vmatmul.bf16.gmra.mxu0 %v1063
        %v2656 = vpop.f32.mrf.mxu0
        %v2657 = vadd.f32 0.0, %v2656
        %v2658 = vpop.f32.mrf.mxu0
        %v2659 = vadd.f32 0.0, %v2658
        %2660 = vmatmul.bf16.gmra.mxu0 %v1067
        %v2661 = vpop.f32.mrf.mxu0
        %v2662 = vadd.f32 0.0, %v2661
        %v2663 = vpop.f32.mrf.mxu0
        %v2664 = vadd.f32 0.0, %v2663
        %2665 = vmatmul.bf16.gmra.mxu0 %v1071
        %v2666 = vpop.f32.mrf.mxu0
        %v2667 = vadd.f32 0.0, %v2666
        %v2668 = vpop.f32.mrf.mxu0
        %v2669 = vadd.f32 0.0, %v2668
        %2670 = vmatmul.bf16.gmra.mxu0 %v1075
        %v2671 = vpop.f32.mrf.mxu0
        %v2672 = vadd.f32 0.0, %v2671
        %v2673 = vpop.f32.mrf.mxu0
        %v2674 = vadd.f32 0.0, %v2673
        %2675 = vmatmul.bf16.gmra.mxu0 %v1079
        %v2676 = vpop.f32.mrf.mxu0
        %v2677 = vadd.f32 0.0, %v2676
        %v2678 = vpop.f32.mrf.mxu0
        %v2679 = vadd.f32 0.0, %v2678
        %2680 = vmatmul.bf16.gmra.mxu0 %v1083
        %v2681 = vpop.f32.mrf.mxu0
        %v2682 = vadd.f32 0.0, %v2681
        %v2683 = vpop.f32.mrf.mxu0
        %v2684 = vadd.f32 0.0, %v2683
        %2685 = vmatmul.bf16.gmra.mxu0 %v1087
        %v2686 = vpop.f32.mrf.mxu0
        %v2687 = vadd.f32 0.0, %v2686
        %v2688 = vpop.f32.mrf.mxu0
        %v2689 = vadd.f32 0.0, %v2688
        %2690 = vmatmul.bf16.gmra.mxu0 %v1091
        %v2691 = vpop.f32.mrf.mxu0
        %v2692 = vadd.f32 0.0, %v2691
        %v2693 = vpop.f32.mrf.mxu0
        %v2694 = vadd.f32 0.0, %v2693
        %2695 = vmatmul.bf16.gmra.mxu0 %v1095
        %v2696 = vpop.f32.mrf.mxu0
        %v2697 = vadd.f32 0.0, %v2696
        %v2698 = vpop.f32.mrf.mxu0
        %v2699 = vadd.f32 0.0, %v2698
        %2700 = vmatmul.bf16.gmra.mxu0 %v1099
        %v2701 = vpop.f32.mrf.mxu0
        %v2702 = vadd.f32 0.0, %v2701
        %v2703 = vpop.f32.mrf.mxu0
        %v2704 = vadd.f32 0.0, %v2703
        %2705 = vmatmul.bf16.gmra.mxu0 %v1103
        %v2706 = vpop.f32.mrf.mxu0
        %v2707 = vadd.f32 0.0, %v2706
        %v2708 = vpop.f32.mrf.mxu0
        %v2709 = vadd.f32 0.0, %v2708
        %2710 = vmatmul.bf16.gmra.mxu0 %v1107
        %v2711 = vpop.f32.mrf.mxu0
        %v2712 = vadd.f32 0.0, %v2711
        %v2713 = vpop.f32.mrf.mxu0
        %v2714 = vadd.f32 0.0, %v2713
        %2715 = vmatmul.bf16.gmra.mxu0 %v1111
        %v2716 = vpop.f32.mrf.mxu0
        %v2717 = vadd.f32 0.0, %v2716
        %v2718 = vpop.f32.mrf.mxu0
        %v2719 = vadd.f32 0.0, %v2718
        %2720 = vmatmul.bf16.gmra.mxu0 %v1115
        %v2721 = vpop.f32.mrf.mxu0
        %v2722 = vadd.f32 0.0, %v2721
        %v2723 = vpop.f32.mrf.mxu0
        %v2724 = vadd.f32 0.0, %v2723
        %2725 = vmatmul.bf16.gmra.mxu0 %v1119
        %v2726 = vpop.f32.mrf.mxu0
        %v2727 = vadd.f32 0.0, %v2726
        %v2728 = vpop.f32.mrf.mxu0
        %v2729 = vadd.f32 0.0, %v2728
        %2730 = vmatmul.bf16.gmra.mxu0 %v1123
        %v2731 = vpop.f32.mrf.mxu0
        %v2732 = vadd.f32 0.0, %v2731
        %v2733 = vpop.f32.mrf.mxu0
        %v2734 = vadd.f32 0.0, %v2733
        %2735 = vmatmul.bf16.gmra.mxu0 %v1127
        %v2736 = vpop.f32.mrf.mxu0
        %v2737 = vadd.f32 0.0, %v2736
        %v2738 = vpop.f32.mrf.mxu0
        %v2739 = vadd.f32 0.0, %v2738
        %2740 = vmatmul.bf16.gmra.mxu0 %v1131
        %v2741 = vpop.f32.mrf.mxu0
        %v2742 = vadd.f32 0.0, %v2741
        %v2743 = vpop.f32.mrf.mxu0
        %v2744 = vadd.f32 0.0, %v2743
        %2745 = vmatmul.bf16.gmra.mxu0 %v1135
        %v2746 = vpop.f32.mrf.mxu0
        %v2747 = vadd.f32 0.0, %v2746
        %v2748 = vpop.f32.mrf.mxu0
        %v2749 = vadd.f32 0.0, %v2748
        %2750 = vmatmul.bf16.gmra.mxu0 %v1139
        %v2751 = vpop.f32.mrf.mxu0
        %v2752 = vadd.f32 0.0, %v2751
        %v2753 = vpop.f32.mrf.mxu0
        %v2754 = vadd.f32 0.0, %v2753
        %2755 = vdwg.mxu0
        %2756 = vmatpush.bf16.msra.mxu0 %v1716
        %2757 = vmatpush.bf16.msra.mxu0 %v1712
        %2758 = vmatpush.bf16.msra.mxu0 %v1708
        %2759 = vmatpush.bf16.msra.mxu0 %v1704
        %2760 = vmatpush.bf16.msra.mxu0 %v1700
        %2761 = vmatpush.bf16.msra.mxu0 %v1696
        %2762 = vmatpush.bf16.msra.mxu0 %v1692
        %2763 = vmatpush.bf16.msra.mxu0 %v1688
        %2764 = vmatmul.bf16.gmra.mxu0 %v1016
        %v2765 = vpop.f32.mrf.mxu0
        %v2766 = vadd.f32 %v2597, %v2765
        %v2767 = vpop.f32.mrf.mxu0
        %v2768 = vadd.f32 %v2599, %v2767
        %2769 = vmatmul.bf16.gmra.mxu0 %v1020
        %v2770 = vpop.f32.mrf.mxu0
        %v2771 = vadd.f32 %v2602, %v2770
        %v2772 = vpop.f32.mrf.mxu0
        %v2773 = vadd.f32 %v2604, %v2772
        %2774 = vmatmul.bf16.gmra.mxu0 %v1024
        %v2775 = vpop.f32.mrf.mxu0
        %v2776 = vadd.f32 %v2607, %v2775
        %v2777 = vpop.f32.mrf.mxu0
        %v2778 = vadd.f32 %v2609, %v2777
        %2779 = vmatmul.bf16.gmra.mxu0 %v1028
        %v2780 = vpop.f32.mrf.mxu0
        %v2781 = vadd.f32 %v2612, %v2780
        %v2782 = vpop.f32.mrf.mxu0
        %v2783 = vadd.f32 %v2614, %v2782
        %2784 = vmatmul.bf16.gmra.mxu0 %v1032
        %v2785 = vpop.f32.mrf.mxu0
        %v2786 = vadd.f32 %v2617, %v2785
        %v2787 = vpop.f32.mrf.mxu0
        %v2788 = vadd.f32 %v2619, %v2787
        %2789 = vmatmul.bf16.gmra.mxu0 %v1036
        %v2790 = vpop.f32.mrf.mxu0
        %v2791 = vadd.f32 %v2622, %v2790
        %v2792 = vpop.f32.mrf.mxu0
        %v2793 = vadd.f32 %v2624, %v2792
        %2794 = vmatmul.bf16.gmra.mxu0 %v1040
        %v2795 = vpop.f32.mrf.mxu0
        %v2796 = vadd.f32 %v2627, %v2795
        %v2797 = vpop.f32.mrf.mxu0
        %v2798 = vadd.f32 %v2629, %v2797
        %2799 = vmatmul.bf16.gmra.mxu0 %v1044
        %v2800 = vpop.f32.mrf.mxu0
        %v2801 = vadd.f32 %v2632, %v2800
        %v2802 = vpop.f32.mrf.mxu0
        %v2803 = vadd.f32 %v2634, %v2802
        %2804 = vmatmul.bf16.gmra.mxu0 %v1048
        %v2805 = vpop.f32.mrf.mxu0
        %v2806 = vadd.f32 %v2637, %v2805
        %v2807 = vpop.f32.mrf.mxu0
        %v2808 = vadd.f32 %v2639, %v2807
        %2809 = vmatmul.bf16.gmra.mxu0 %v1052
        %v2810 = vpop.f32.mrf.mxu0
        %v2811 = vadd.f32 %v2642, %v2810
        %v2812 = vpop.f32.mrf.mxu0
        %v2813 = vadd.f32 %v2644, %v2812
        %2814 = vmatmul.bf16.gmra.mxu0 %v1056
        %v2815 = vpop.f32.mrf.mxu0
        %v2816 = vadd.f32 %v2647, %v2815
        %v2817 = vpop.f32.mrf.mxu0
        %v2818 = vadd.f32 %v2649, %v2817
        %2819 = vmatmul.bf16.gmra.mxu0 %v1060
        %v2820 = vpop.f32.mrf.mxu0
        %v2821 = vadd.f32 %v2652, %v2820
        %v2822 = vpop.f32.mrf.mxu0
        %v2823 = vadd.f32 %v2654, %v2822
        %2824 = vmatmul.bf16.gmra.mxu0 %v1064
        %v2825 = vpop.f32.mrf.mxu0
        %v2826 = vadd.f32 %v2657, %v2825
        %v2827 = vpop.f32.mrf.mxu0
        %v2828 = vadd.f32 %v2659, %v2827
        %2829 = vmatmul.bf16.gmra.mxu0 %v1068
        %v2830 = vpop.f32.mrf.mxu0
        %v2831 = vadd.f32 %v2662, %v2830
        %v2832 = vpop.f32.mrf.mxu0
        %v2833 = vadd.f32 %v2664, %v2832
        %2834 = vmatmul.bf16.gmra.mxu0 %v1072
        %v2835 = vpop.f32.mrf.mxu0
        %v2836 = vadd.f32 %v2667, %v2835
        %v2837 = vpop.f32.mrf.mxu0
        %v2838 = vadd.f32 %v2669, %v2837
        %2839 = vmatmul.bf16.gmra.mxu0 %v1076
        %v2840 = vpop.f32.mrf.mxu0
        %v2841 = vadd.f32 %v2672, %v2840
        %v2842 = vpop.f32.mrf.mxu0
        %v2843 = vadd.f32 %v2674, %v2842
        %2844 = vmatmul.bf16.gmra.mxu0 %v1080
        %v2845 = vpop.f32.mrf.mxu0
        %v2846 = vadd.f32 %v2677, %v2845
        %v2847 = vpop.f32.mrf.mxu0
        %v2848 = vadd.f32 %v2679, %v2847
        %2849 = vmatmul.bf16.gmra.mxu0 %v1084
        %v2850 = vpop.f32.mrf.mxu0
        %v2851 = vadd.f32 %v2682, %v2850
        %v2852 = vpop.f32.mrf.mxu0
        %v2853 = vadd.f32 %v2684, %v2852
        %2854 = vmatmul.bf16.gmra.mxu0 %v1088
        %v2855 = vpop.f32.mrf.mxu0
        %v2856 = vadd.f32 %v2687, %v2855
        %v2857 = vpop.f32.mrf.mxu0
        %v2858 = vadd.f32 %v2689, %v2857
        %2859 = vmatmul.bf16.gmra.mxu0 %v1092
        %v2860 = vpop.f32.mrf.mxu0
        %v2861 = vadd.f32 %v2692, %v2860
        %v2862 = vpop.f32.mrf.mxu0
        %v2863 = vadd.f32 %v2694, %v2862
        %2864 = vmatmul.bf16.gmra.mxu0 %v1096
        %v2865 = vpop.f32.mrf.mxu0
        %v2866 = vadd.f32 %v2697, %v2865
        %v2867 = vpop.f32.mrf.mxu0
        %v2868 = vadd.f32 %v2699, %v2867
        %2869 = vmatmul.bf16.gmra.mxu0 %v1100
        %v2870 = vpop.f32.mrf.mxu0
        %v2871 = vadd.f32 %v2702, %v2870
        %v2872 = vpop.f32.mrf.mxu0
        %v2873 = vadd.f32 %v2704, %v2872
        %2874 = vmatmul.bf16.gmra.mxu0 %v1104
        %v2875 = vpop.f32.mrf.mxu0
        %v2876 = vadd.f32 %v2707, %v2875
        %v2877 = vpop.f32.mrf.mxu0
        %v2878 = vadd.f32 %v2709, %v2877
        %2879 = vmatmul.bf16.gmra.mxu0 %v1108
        %v2880 = vpop.f32.mrf.mxu0
        %v2881 = vadd.f32 %v2712, %v2880
        %v2882 = vpop.f32.mrf.mxu0
        %v2883 = vadd.f32 %v2714, %v2882
        %2884 = vmatmul.bf16.gmra.mxu0 %v1112
        %v2885 = vpop.f32.mrf.mxu0
        %v2886 = vadd.f32 %v2717, %v2885
        %v2887 = vpop.f32.mrf.mxu0
        %v2888 = vadd.f32 %v2719, %v2887
        %2889 = vmatmul.bf16.gmra.mxu0 %v1116
        %v2890 = vpop.f32.mrf.mxu0
        %v2891 = vadd.f32 %v2722, %v2890
        %v2892 = vpop.f32.mrf.mxu0
        %v2893 = vadd.f32 %v2724, %v2892
        %2894 = vmatmul.bf16.gmra.mxu0 %v1120
        %v2895 = vpop.f32.mrf.mxu0
        %v2896 = vadd.f32 %v2727, %v2895
        %v2897 = vpop.f32.mrf.mxu0
        %v2898 = vadd.f32 %v2729, %v2897
        %2899 = vmatmul.bf16.gmra.mxu0 %v1124
        %v2900 = vpop.f32.mrf.mxu0
        %v2901 = vadd.f32 %v2732, %v2900
        %v2902 = vpop.f32.mrf.mxu0
        %v2903 = vadd.f32 %v2734, %v2902
        %2904 = vmatmul.bf16.gmra.mxu0 %v1128
        %v2905 = vpop.f32.mrf.mxu0
        %v2906 = vadd.f32 %v2737, %v2905
        %v2907 = vpop.f32.mrf.mxu0
        %v2908 = vadd.f32 %v2739, %v2907
        %2909 = vmatmul.bf16.gmra.mxu0 %v1132
        %v2910 = vpop.f32.mrf.mxu0
        %v2911 = vadd.f32 %v2742, %v2910
        %v2912 = vpop.f32.mrf.mxu0
        %v2913 = vadd.f32 %v2744, %v2912
        %2914 = vmatmul.bf16.gmra.mxu0 %v1136
        %v2915 = vpop.f32.mrf.mxu0
        %v2916 = vadd.f32 %v2747, %v2915
        %v2917 = vpop.f32.mrf.mxu0
        %v2918 = vadd.f32 %v2749, %v2917
        %2919 = vmatmul.bf16.gmra.mxu0 %v1140
        %v2920 = vpop.f32.mrf.mxu0
        %v2921 = vadd.f32 %v2752, %v2920
        %v2922 = vpop.f32.mrf.mxu0
        %v2923 = vadd.f32 %v2754, %v2922
        %2924 = vdwg.mxu0
        %2925 = vmatpush.bf16.msra.mxu0 %v1748
        %2926 = vmatpush.bf16.msra.mxu0 %v1744
        %2927 = vmatpush.bf16.msra.mxu0 %v1740
        %2928 = vmatpush.bf16.msra.mxu0 %v1736
        %2929 = vmatpush.bf16.msra.mxu0 %v1732
        %2930 = vmatpush.bf16.msra.mxu0 %v1728
        %2931 = vmatpush.bf16.msra.mxu0 %v1724
        %2932 = vmatpush.bf16.msra.mxu0 %v1720
        %2933 = vmatmul.bf16.gmra.mxu0 %v1017
        %v2934 = vpop.f32.mrf.mxu0
        %v2935 = vadd.f32 %v2766, %v2934
        %v2936 = vpop.f32.mrf.mxu0
        %v2937 = vadd.f32 %v2768, %v2936
        %2938 = vmatmul.bf16.gmra.mxu0 %v1021
        %v2939 = vpop.f32.mrf.mxu0
        %v2940 = vadd.f32 %v2771, %v2939
        %v2941 = vpop.f32.mrf.mxu0
        %v2942 = vadd.f32 %v2773, %v2941
        %2943 = vmatmul.bf16.gmra.mxu0 %v1025
        %v2944 = vpop.f32.mrf.mxu0
        %v2945 = vadd.f32 %v2776, %v2944
        %v2946 = vpop.f32.mrf.mxu0
        %v2947 = vadd.f32 %v2778, %v2946
        %2948 = vmatmul.bf16.gmra.mxu0 %v1029
        %v2949 = vpop.f32.mrf.mxu0
        %v2950 = vadd.f32 %v2781, %v2949
        %v2951 = vpop.f32.mrf.mxu0
        %v2952 = vadd.f32 %v2783, %v2951
        %2953 = vmatmul.bf16.gmra.mxu0 %v1033
        %v2954 = vpop.f32.mrf.mxu0
        %v2955 = vadd.f32 %v2786, %v2954
        %v2956 = vpop.f32.mrf.mxu0
        %v2957 = vadd.f32 %v2788, %v2956
        %2958 = vmatmul.bf16.gmra.mxu0 %v1037
        %v2959 = vpop.f32.mrf.mxu0
        %v2960 = vadd.f32 %v2791, %v2959
        %v2961 = vpop.f32.mrf.mxu0
        %v2962 = vadd.f32 %v2793, %v2961
        %2963 = vmatmul.bf16.gmra.mxu0 %v1041
        %v2964 = vpop.f32.mrf.mxu0
        %v2965 = vadd.f32 %v2796, %v2964
        %v2966 = vpop.f32.mrf.mxu0
        %v2967 = vadd.f32 %v2798, %v2966
        %2968 = vmatmul.bf16.gmra.mxu0 %v1045
        %v2969 = vpop.f32.mrf.mxu0
        %v2970 = vadd.f32 %v2801, %v2969
        %v2971 = vpop.f32.mrf.mxu0
        %v2972 = vadd.f32 %v2803, %v2971
        %2973 = vmatmul.bf16.gmra.mxu0 %v1049
        %v2974 = vpop.f32.mrf.mxu0
        %v2975 = vadd.f32 %v2806, %v2974
        %v2976 = vpop.f32.mrf.mxu0
        %v2977 = vadd.f32 %v2808, %v2976
        %2978 = vmatmul.bf16.gmra.mxu0 %v1053
        %v2979 = vpop.f32.mrf.mxu0
        %v2980 = vadd.f32 %v2811, %v2979
        %v2981 = vpop.f32.mrf.mxu0
        %v2982 = vadd.f32 %v2813, %v2981
        %2983 = vmatmul.bf16.gmra.mxu0 %v1057
        %v2984 = vpop.f32.mrf.mxu0
        %v2985 = vadd.f32 %v2816, %v2984
        %v2986 = vpop.f32.mrf.mxu0
        %v2987 = vadd.f32 %v2818, %v2986
        %2988 = vmatmul.bf16.gmra.mxu0 %v1061
        %v2989 = vpop.f32.mrf.mxu0
        %v2990 = vadd.f32 %v2821, %v2989
        %v2991 = vpop.f32.mrf.mxu0
        %v2992 = vadd.f32 %v2823, %v2991
        %2993 = vmatmul.bf16.gmra.mxu0 %v1065
        %v2994 = vpop.f32.mrf.mxu0
        %v2995 = vadd.f32 %v2826, %v2994
        %v2996 = vpop.f32.mrf.mxu0
        %v2997 = vadd.f32 %v2828, %v2996
        %2998 = vmatmul.bf16.gmra.mxu0 %v1069
        %v2999 = vpop.f32.mrf.mxu0
        %v3000 = vadd.f32 %v2831, %v2999
        %v3001 = vpop.f32.mrf.mxu0
        %v3002 = vadd.f32 %v2833, %v3001
        %3003 = vmatmul.bf16.gmra.mxu0 %v1073
        %v3004 = vpop.f32.mrf.mxu0
        %v3005 = vadd.f32 %v2836, %v3004
        %v3006 = vpop.f32.mrf.mxu0
        %v3007 = vadd.f32 %v2838, %v3006
        %3008 = vmatmul.bf16.gmra.mxu0 %v1077
        %v3009 = vpop.f32.mrf.mxu0
        %v3010 = vadd.f32 %v2841, %v3009
        %v3011 = vpop.f32.mrf.mxu0
        %v3012 = vadd.f32 %v2843, %v3011
        %3013 = vmatmul.bf16.gmra.mxu0 %v1081
        %v3014 = vpop.f32.mrf.mxu0
        %v3015 = vadd.f32 %v2846, %v3014
        %v3016 = vpop.f32.mrf.mxu0
        %v3017 = vadd.f32 %v2848, %v3016
        %3018 = vmatmul.bf16.gmra.mxu0 %v1085
        %v3019 = vpop.f32.mrf.mxu0
        %v3020 = vadd.f32 %v2851, %v3019
        %v3021 = vpop.f32.mrf.mxu0
        %v3022 = vadd.f32 %v2853, %v3021
        %3023 = vmatmul.bf16.gmra.mxu0 %v1089
        %v3024 = vpop.f32.mrf.mxu0
        %v3025 = vadd.f32 %v2856, %v3024
        %v3026 = vpop.f32.mrf.mxu0
        %v3027 = vadd.f32 %v2858, %v3026
        %3028 = vmatmul.bf16.gmra.mxu0 %v1093
        %v3029 = vpop.f32.mrf.mxu0
        %v3030 = vadd.f32 %v2861, %v3029
        %v3031 = vpop.f32.mrf.mxu0
        %v3032 = vadd.f32 %v2863, %v3031
        %3033 = vmatmul.bf16.gmra.mxu0 %v1097
        %v3034 = vpop.f32.mrf.mxu0
        %v3035 = vadd.f32 %v2866, %v3034
        %v3036 = vpop.f32.mrf.mxu0
        %v3037 = vadd.f32 %v2868, %v3036
        %3038 = vmatmul.bf16.gmra.mxu0 %v1101
        %v3039 = vpop.f32.mrf.mxu0
        %v3040 = vadd.f32 %v2871, %v3039
        %v3041 = vpop.f32.mrf.mxu0
        %v3042 = vadd.f32 %v2873, %v3041
        %3043 = vmatmul.bf16.gmra.mxu0 %v1105
        %v3044 = vpop.f32.mrf.mxu0
        %v3045 = vadd.f32 %v2876, %v3044
        %v3046 = vpop.f32.mrf.mxu0
        %v3047 = vadd.f32 %v2878, %v3046
        %3048 = vmatmul.bf16.gmra.mxu0 %v1109
        %v3049 = vpop.f32.mrf.mxu0
        %v3050 = vadd.f32 %v2881, %v3049
        %v3051 = vpop.f32.mrf.mxu0
        %v3052 = vadd.f32 %v2883, %v3051
        %3053 = vmatmul.bf16.gmra.mxu0 %v1113
        %v3054 = vpop.f32.mrf.mxu0
        %v3055 = vadd.f32 %v2886, %v3054
        %v3056 = vpop.f32.mrf.mxu0
        %v3057 = vadd.f32 %v2888, %v3056
        %3058 = vmatmul.bf16.gmra.mxu0 %v1117
        %v3059 = vpop.f32.mrf.mxu0
        %v3060 = vadd.f32 %v2891, %v3059
        %v3061 = vpop.f32.mrf.mxu0
        %v3062 = vadd.f32 %v2893, %v3061
        %3063 = vmatmul.bf16.gmra.mxu0 %v1121
        %v3064 = vpop.f32.mrf.mxu0
        %v3065 = vadd.f32 %v2896, %v3064
        %v3066 = vpop.f32.mrf.mxu0
        %v3067 = vadd.f32 %v2898, %v3066
        %3068 = vmatmul.bf16.gmra.mxu0 %v1125
        %v3069 = vpop.f32.mrf.mxu0
        %v3070 = vadd.f32 %v2901, %v3069
        %v3071 = vpop.f32.mrf.mxu0
        %v3072 = vadd.f32 %v2903, %v3071
        %3073 = vmatmul.bf16.gmra.mxu0 %v1129
        %v3074 = vpop.f32.mrf.mxu0
        %v3075 = vadd.f32 %v2906, %v3074
        %v3076 = vpop.f32.mrf.mxu0
        %v3077 = vadd.f32 %v2908, %v3076
        %3078 = vmatmul.bf16.gmra.mxu0 %v1133
        %v3079 = vpop.f32.mrf.mxu0
        %v3080 = vadd.f32 %v2911, %v3079
        %v3081 = vpop.f32.mrf.mxu0
        %v3082 = vadd.f32 %v2913, %v3081
        %3083 = vmatmul.bf16.gmra.mxu0 %v1137
        %v3084 = vpop.f32.mrf.mxu0
        %v3085 = vadd.f32 %v2916, %v3084
        %v3086 = vpop.f32.mrf.mxu0
        %v3087 = vadd.f32 %v2918, %v3086
        %3088 = vmatmul.bf16.gmra.mxu0 %v1141
        %v3089 = vpop.f32.mrf.mxu0
        %v3090 = vadd.f32 %v2921, %v3089
        %v3091 = vpop.f32.mrf.mxu0
        %v3092 = vadd.f32 %v2923, %v3091
        %3093 = vdwg.mxu0
        %3094 = vmatpush.bf16.msra.mxu0 %v1780
        %3095 = vmatpush.bf16.msra.mxu0 %v1776
        %3096 = vmatpush.bf16.msra.mxu0 %v1772
        %3097 = vmatpush.bf16.msra.mxu0 %v1768
        %3098 = vmatpush.bf16.msra.mxu0 %v1764
        %3099 = vmatpush.bf16.msra.mxu0 %v1760
        %3100 = vmatpush.bf16.msra.mxu0 %v1756
        %3101 = vmatpush.bf16.msra.mxu0 %v1752
        %3102 = vmatmul.bf16.gmra.mxu0 %v1018
        %v3103 = vpop.f32.mrf.mxu0
        %v3104 = vadd.f32 %v2935, %v3103
        %v3105 = vpop.f32.mrf.mxu0
        %v3106 = vadd.f32 %v2937, %v3105
        %3107 = vmatmul.bf16.gmra.mxu0 %v1022
        %v3108 = vpop.f32.mrf.mxu0
        %v3109 = vadd.f32 %v2940, %v3108
        %v3110 = vpop.f32.mrf.mxu0
        %v3111 = vadd.f32 %v2942, %v3110
        %3112 = vmatmul.bf16.gmra.mxu0 %v1026
        %v3113 = vpop.f32.mrf.mxu0
        %v3114 = vadd.f32 %v2945, %v3113
        %v3115 = vpop.f32.mrf.mxu0
        %v3116 = vadd.f32 %v2947, %v3115
        %3117 = vmatmul.bf16.gmra.mxu0 %v1030
        %v3118 = vpop.f32.mrf.mxu0
        %v3119 = vadd.f32 %v2950, %v3118
        %v3120 = vpop.f32.mrf.mxu0
        %v3121 = vadd.f32 %v2952, %v3120
        %3122 = vmatmul.bf16.gmra.mxu0 %v1034
        %v3123 = vpop.f32.mrf.mxu0
        %v3124 = vadd.f32 %v2955, %v3123
        %v3125 = vpop.f32.mrf.mxu0
        %v3126 = vadd.f32 %v2957, %v3125
        %3127 = vmatmul.bf16.gmra.mxu0 %v1038
        %v3128 = vpop.f32.mrf.mxu0
        %v3129 = vadd.f32 %v2960, %v3128
        %v3130 = vpop.f32.mrf.mxu0
        %v3131 = vadd.f32 %v2962, %v3130
        %3132 = vmatmul.bf16.gmra.mxu0 %v1042
        %v3133 = vpop.f32.mrf.mxu0
        %v3134 = vadd.f32 %v2965, %v3133
        %v3135 = vpop.f32.mrf.mxu0
        %v3136 = vadd.f32 %v2967, %v3135
        %3137 = vmatmul.bf16.gmra.mxu0 %v1046
        %v3138 = vpop.f32.mrf.mxu0
        %v3139 = vadd.f32 %v2970, %v3138
        %v3140 = vpop.f32.mrf.mxu0
        %v3141 = vadd.f32 %v2972, %v3140
        %3142 = vmatmul.bf16.gmra.mxu0 %v1050
        %v3143 = vpop.f32.mrf.mxu0
        %v3144 = vadd.f32 %v2975, %v3143
        %v3145 = vpop.f32.mrf.mxu0
        %v3146 = vadd.f32 %v2977, %v3145
        %3147 = vmatmul.bf16.gmra.mxu0 %v1054
        %v3148 = vpop.f32.mrf.mxu0
        %v3149 = vadd.f32 %v2980, %v3148
        %v3150 = vpop.f32.mrf.mxu0
        %v3151 = vadd.f32 %v2982, %v3150
        %3152 = vmatmul.bf16.gmra.mxu0 %v1058
        %v3153 = vpop.f32.mrf.mxu0
        %v3154 = vadd.f32 %v2985, %v3153
        %v3155 = vpop.f32.mrf.mxu0
        %v3156 = vadd.f32 %v2987, %v3155
        %3157 = vmatmul.bf16.gmra.mxu0 %v1062
        %v3158 = vpop.f32.mrf.mxu0
        %v3159 = vadd.f32 %v2990, %v3158
        %v3160 = vpop.f32.mrf.mxu0
        %v3161 = vadd.f32 %v2992, %v3160
        %3162 = vmatmul.bf16.gmra.mxu0 %v1066
        %v3163 = vpop.f32.mrf.mxu0
        %v3164 = vadd.f32 %v2995, %v3163
        %v3165 = vpop.f32.mrf.mxu0
        %v3166 = vadd.f32 %v2997, %v3165
        %3167 = vmatmul.bf16.gmra.mxu0 %v1070
        %v3168 = vpop.f32.mrf.mxu0
        %v3169 = vadd.f32 %v3000, %v3168
        %v3170 = vpop.f32.mrf.mxu0
        %v3171 = vadd.f32 %v3002, %v3170
        %3172 = vmatmul.bf16.gmra.mxu0 %v1074
        %v3173 = vpop.f32.mrf.mxu0
        %v3174 = vadd.f32 %v3005, %v3173
        %v3175 = vpop.f32.mrf.mxu0
        %v3176 = vadd.f32 %v3007, %v3175
        %3177 = vmatmul.bf16.gmra.mxu0 %v1078
        %v3178 = vpop.f32.mrf.mxu0
        %v3179 = vadd.f32 %v3010, %v3178
        %v3180 = vpop.f32.mrf.mxu0
        %v3181 = vadd.f32 %v3012, %v3180
        %3182 = vmatmul.bf16.gmra.mxu0 %v1082
        %v3183 = vpop.f32.mrf.mxu0
        %v3184 = vadd.f32 %v3015, %v3183
        %v3185 = vpop.f32.mrf.mxu0
        %v3186 = vadd.f32 %v3017, %v3185
        %3187 = vmatmul.bf16.gmra.mxu0 %v1086
        %v3188 = vpop.f32.mrf.mxu0
        %v3189 = vadd.f32 %v3020, %v3188
        %v3190 = vpop.f32.mrf.mxu0
        %v3191 = vadd.f32 %v3022, %v3190
        %3192 = vmatmul.bf16.gmra.mxu0 %v1090
        %v3193 = vpop.f32.mrf.mxu0
        %v3194 = vadd.f32 %v3025, %v3193
        %v3195 = vpop.f32.mrf.mxu0
        %v3196 = vadd.f32 %v3027, %v3195
        %3197 = vmatmul.bf16.gmra.mxu0 %v1094
        %v3198 = vpop.f32.mrf.mxu0
        %v3199 = vadd.f32 %v3030, %v3198
        %v3200 = vpop.f32.mrf.mxu0
        %v3201 = vadd.f32 %v3032, %v3200
        %3202 = vmatmul.bf16.gmra.mxu0 %v1098
        %v3203 = vpop.f32.mrf.mxu0
        %v3204 = vadd.f32 %v3035, %v3203
        %v3205 = vpop.f32.mrf.mxu0
        %v3206 = vadd.f32 %v3037, %v3205
        %3207 = vmatmul.bf16.gmra.mxu0 %v1102
        %v3208 = vpop.f32.mrf.mxu0
        %v3209 = vadd.f32 %v3040, %v3208
        %v3210 = vpop.f32.mrf.mxu0
        %v3211 = vadd.f32 %v3042, %v3210
        %3212 = vmatmul.bf16.gmra.mxu0 %v1106
        %v3213 = vpop.f32.mrf.mxu0
        %v3214 = vadd.f32 %v3045, %v3213
        %v3215 = vpop.f32.mrf.mxu0
        %v3216 = vadd.f32 %v3047, %v3215
        %3217 = vmatmul.bf16.gmra.mxu0 %v1110
        %v3218 = vpop.f32.mrf.mxu0
        %v3219 = vadd.f32 %v3050, %v3218
        %v3220 = vpop.f32.mrf.mxu0
        %v3221 = vadd.f32 %v3052, %v3220
        %3222 = vmatmul.bf16.gmra.mxu0 %v1114
        %v3223 = vpop.f32.mrf.mxu0
        %v3224 = vadd.f32 %v3055, %v3223
        %v3225 = vpop.f32.mrf.mxu0
        %v3226 = vadd.f32 %v3057, %v3225
        %3227 = vmatmul.bf16.gmra.mxu0 %v1118
        %v3228 = vpop.f32.mrf.mxu0
        %v3229 = vadd.f32 %v3060, %v3228
        %v3230 = vpop.f32.mrf.mxu0
        %v3231 = vadd.f32 %v3062, %v3230
        %3232 = vmatmul.bf16.gmra.mxu0 %v1122
        %v3233 = vpop.f32.mrf.mxu0
        %v3234 = vadd.f32 %v3065, %v3233
        %v3235 = vpop.f32.mrf.mxu0
        %v3236 = vadd.f32 %v3067, %v3235
        %3237 = vmatmul.bf16.gmra.mxu0 %v1126
        %v3238 = vpop.f32.mrf.mxu0
        %v3239 = vadd.f32 %v3070, %v3238
        %v3240 = vpop.f32.mrf.mxu0
        %v3241 = vadd.f32 %v3072, %v3240
        %3242 = vmatmul.bf16.gmra.mxu0 %v1130
        %v3243 = vpop.f32.mrf.mxu0
        %v3244 = vadd.f32 %v3075, %v3243
        %v3245 = vpop.f32.mrf.mxu0
        %v3246 = vadd.f32 %v3077, %v3245
        %3247 = vmatmul.bf16.gmra.mxu0 %v1134
        %v3248 = vpop.f32.mrf.mxu0
        %v3249 = vadd.f32 %v3080, %v3248
        %v3250 = vpop.f32.mrf.mxu0
        %v3251 = vadd.f32 %v3082, %v3250
        %3252 = vmatmul.bf16.gmra.mxu0 %v1138
        %v3253 = vpop.f32.mrf.mxu0
        %v3254 = vadd.f32 %v3085, %v3253
        %v3255 = vpop.f32.mrf.mxu0
        %v3256 = vadd.f32 %v3087, %v3255
        %3257 = vmatmul.bf16.gmra.mxu0 %v1142
        %v3258 = vpop.f32.mrf.mxu0
        %v3259 = vadd.f32 %v3090, %v3258
        %v3260 = vpop.f32.mrf.mxu0
        %v3261 = vadd.f32 %v3092, %v3260
        %3262 = vdwg.mxu0
        %3263 = vmatpush.bf16.msra.mxu0 %v1685
        %3264 = vmatpush.bf16.msra.mxu0 %v1681
        %3265 = vmatpush.bf16.msra.mxu0 %v1677
        %3266 = vmatpush.bf16.msra.mxu0 %v1673
        %3267 = vmatpush.bf16.msra.mxu0 %v1669
        %3268 = vmatpush.bf16.msra.mxu0 %v1665
        %3269 = vmatpush.bf16.msra.mxu0 %v1661
        %3270 = vmatpush.bf16.msra.mxu0 %v1657
        %3271 = vmatmul.bf16.gmra.mxu0 %v1015
        %v3272 = vpop.f32.mrf.mxu0
        %v3273 = vadd.f32 0.0, %v3272
        %v3274 = vpop.f32.mrf.mxu0
        %v3275 = vadd.f32 0.0, %v3274
        %3276 = vmatmul.bf16.gmra.mxu0 %v1019
        %v3277 = vpop.f32.mrf.mxu0
        %v3278 = vadd.f32 0.0, %v3277
        %v3279 = vpop.f32.mrf.mxu0
        %v3280 = vadd.f32 0.0, %v3279
        %3281 = vmatmul.bf16.gmra.mxu0 %v1023
        %v3282 = vpop.f32.mrf.mxu0
        %v3283 = vadd.f32 0.0, %v3282
        %v3284 = vpop.f32.mrf.mxu0
        %v3285 = vadd.f32 0.0, %v3284
        %3286 = vmatmul.bf16.gmra.mxu0 %v1027
        %v3287 = vpop.f32.mrf.mxu0
        %v3288 = vadd.f32 0.0, %v3287
        %v3289 = vpop.f32.mrf.mxu0
        %v3290 = vadd.f32 0.0, %v3289
        %3291 = vmatmul.bf16.gmra.mxu0 %v1031
        %v3292 = vpop.f32.mrf.mxu0
        %v3293 = vadd.f32 0.0, %v3292
        %v3294 = vpop.f32.mrf.mxu0
        %v3295 = vadd.f32 0.0, %v3294
        %3296 = vmatmul.bf16.gmra.mxu0 %v1035
        %v3297 = vpop.f32.mrf.mxu0
        %v3298 = vadd.f32 0.0, %v3297
        %v3299 = vpop.f32.mrf.mxu0
        %v3300 = vadd.f32 0.0, %v3299
        %3301 = vmatmul.bf16.gmra.mxu0 %v1039
        %v3302 = vpop.f32.mrf.mxu0
        %v3303 = vadd.f32 0.0, %v3302
        %v3304 = vpop.f32.mrf.mxu0
        %v3305 = vadd.f32 0.0, %v3304
        %3306 = vmatmul.bf16.gmra.mxu0 %v1043
        %v3307 = vpop.f32.mrf.mxu0
        %v3308 = vadd.f32 0.0, %v3307
        %v3309 = vpop.f32.mrf.mxu0
        %v3310 = vadd.f32 0.0, %v3309
        %3311 = vmatmul.bf16.gmra.mxu0 %v1047
        %v3312 = vpop.f32.mrf.mxu0
        %v3313 = vadd.f32 0.0, %v3312
        %v3314 = vpop.f32.mrf.mxu0
        %v3315 = vadd.f32 0.0, %v3314
        %3316 = vmatmul.bf16.gmra.mxu0 %v1051
        %v3317 = vpop.f32.mrf.mxu0
        %v3318 = vadd.f32 0.0, %v3317
        %v3319 = vpop.f32.mrf.mxu0
        %v3320 = vadd.f32 0.0, %v3319
        %3321 = vmatmul.bf16.gmra.mxu0 %v1055
        %v3322 = vpop.f32.mrf.mxu0
        %v3323 = vadd.f32 0.0, %v3322
        %v3324 = vpop.f32.mrf.mxu0
        %v3325 = vadd.f32 0.0, %v3324
        %3326 = vmatmul.bf16.gmra.mxu0 %v1059
        %v3327 = vpop.f32.mrf.mxu0
        %v3328 = vadd.f32 0.0, %v3327
        %v3329 = vpop.f32.mrf.mxu0
        %v3330 = vadd.f32 0.0, %v3329
        %3331 = vmatmul.bf16.gmra.mxu0 %v1063
        %v3332 = vpop.f32.mrf.mxu0
        %v3333 = vadd.f32 0.0, %v3332
        %v3334 = vpop.f32.mrf.mxu0
        %v3335 = vadd.f32 0.0, %v3334
        %3336 = vmatmul.bf16.gmra.mxu0 %v1067
        %v3337 = vpop.f32.mrf.mxu0
        %v3338 = vadd.f32 0.0, %v3337
        %v3339 = vpop.f32.mrf.mxu0
        %v3340 = vadd.f32 0.0, %v3339
        %3341 = vmatmul.bf16.gmra.mxu0 %v1071
        %v3342 = vpop.f32.mrf.mxu0
        %v3343 = vadd.f32 0.0, %v3342
        %v3344 = vpop.f32.mrf.mxu0
        %v3345 = vadd.f32 0.0, %v3344
        %3346 = vmatmul.bf16.gmra.mxu0 %v1075
        %v3347 = vpop.f32.mrf.mxu0
        %v3348 = vadd.f32 0.0, %v3347
        %v3349 = vpop.f32.mrf.mxu0
        %v3350 = vadd.f32 0.0, %v3349
        %3351 = vmatmul.bf16.gmra.mxu0 %v1079
        %v3352 = vpop.f32.mrf.mxu0
        %v3353 = vadd.f32 0.0, %v3352
        %v3354 = vpop.f32.mrf.mxu0
        %v3355 = vadd.f32 0.0, %v3354
        %3356 = vmatmul.bf16.gmra.mxu0 %v1083
        %v3357 = vpop.f32.mrf.mxu0
        %v3358 = vadd.f32 0.0, %v3357
        %v3359 = vpop.f32.mrf.mxu0
        %v3360 = vadd.f32 0.0, %v3359
        %3361 = vmatmul.bf16.gmra.mxu0 %v1087
        %v3362 = vpop.f32.mrf.mxu0
        %v3363 = vadd.f32 0.0, %v3362
        %v3364 = vpop.f32.mrf.mxu0
        %v3365 = vadd.f32 0.0, %v3364
        %3366 = vmatmul.bf16.gmra.mxu0 %v1091
        %v3367 = vpop.f32.mrf.mxu0
        %v3368 = vadd.f32 0.0, %v3367
        %v3369 = vpop.f32.mrf.mxu0
        %v3370 = vadd.f32 0.0, %v3369
        %3371 = vmatmul.bf16.gmra.mxu0 %v1095
        %v3372 = vpop.f32.mrf.mxu0
        %v3373 = vadd.f32 0.0, %v3372
        %v3374 = vpop.f32.mrf.mxu0
        %v3375 = vadd.f32 0.0, %v3374
        %3376 = vmatmul.bf16.gmra.mxu0 %v1099
        %v3377 = vpop.f32.mrf.mxu0
        %v3378 = vadd.f32 0.0, %v3377
        %v3379 = vpop.f32.mrf.mxu0
        %v3380 = vadd.f32 0.0, %v3379
        %3381 = vmatmul.bf16.gmra.mxu0 %v1103
        %v3382 = vpop.f32.mrf.mxu0
        %v3383 = vadd.f32 0.0, %v3382
        %v3384 = vpop.f32.mrf.mxu0
        %v3385 = vadd.f32 0.0, %v3384
        %3386 = vmatmul.bf16.gmra.mxu0 %v1107
        %v3387 = vpop.f32.mrf.mxu0
        %v3388 = vadd.f32 0.0, %v3387
        %v3389 = vpop.f32.mrf.mxu0
        %v3390 = vadd.f32 0.0, %v3389
        %3391 = vmatmul.bf16.gmra.mxu0 %v1111
        %v3392 = vpop.f32.mrf.mxu0
        %v3393 = vadd.f32 0.0, %v3392
        %v3394 = vpop.f32.mrf.mxu0
        %v3395 = vadd.f32 0.0, %v3394
        %3396 = vmatmul.bf16.gmra.mxu0 %v1115
        %v3397 = vpop.f32.mrf.mxu0
        %v3398 = vadd.f32 0.0, %v3397
        %v3399 = vpop.f32.mrf.mxu0
        %v3400 = vadd.f32 0.0, %v3399
        %3401 = vmatmul.bf16.gmra.mxu0 %v1119
        %v3402 = vpop.f32.mrf.mxu0
        %v3403 = vadd.f32 0.0, %v3402
        %v3404 = vpop.f32.mrf.mxu0
        %v3405 = vadd.f32 0.0, %v3404
        %3406 = vmatmul.bf16.gmra.mxu0 %v1123
        %v3407 = vpop.f32.mrf.mxu0
        %v3408 = vadd.f32 0.0, %v3407
        %v3409 = vpop.f32.mrf.mxu0
        %v3410 = vadd.f32 0.0, %v3409
        %3411 = vmatmul.bf16.gmra.mxu0 %v1127
        %v3412 = vpop.f32.mrf.mxu0
        %v3413 = vadd.f32 0.0, %v3412
        %v3414 = vpop.f32.mrf.mxu0
        %v3415 = vadd.f32 0.0, %v3414
        %3416 = vmatmul.bf16.gmra.mxu0 %v1131
        %v3417 = vpop.f32.mrf.mxu0
        %v3418 = vadd.f32 0.0, %v3417
        %v3419 = vpop.f32.mrf.mxu0
        %v3420 = vadd.f32 0.0, %v3419
        %3421 = vmatmul.bf16.gmra.mxu0 %v1135
        %v3422 = vpop.f32.mrf.mxu0
        %v3423 = vadd.f32 0.0, %v3422
        %v3424 = vpop.f32.mrf.mxu0
        %v3425 = vadd.f32 0.0, %v3424
        %3426 = vmatmul.bf16.gmra.mxu0 %v1139
        %v3427 = vpop.f32.mrf.mxu0
        %v3428 = vadd.f32 0.0, %v3427
        %v3429 = vpop.f32.mrf.mxu0
        %v3430 = vadd.f32 0.0, %v3429
        %3431 = vdwg.mxu0
        %3432 = vmatpush.bf16.msra.mxu0 %v1717
        %3433 = vmatpush.bf16.msra.mxu0 %v1713
        %3434 = vmatpush.bf16.msra.mxu0 %v1709
        %3435 = vmatpush.bf16.msra.mxu0 %v1705
        %3436 = vmatpush.bf16.msra.mxu0 %v1701
        %3437 = vmatpush.bf16.msra.mxu0 %v1697
        %3438 = vmatpush.bf16.msra.mxu0 %v1693
        %3439 = vmatpush.bf16.msra.mxu0 %v1689
        %3440 = vmatmul.bf16.gmra.mxu0 %v1016
        %v3441 = vpop.f32.mrf.mxu0
        %v3442 = vadd.f32 %v3273, %v3441
        %v3443 = vpop.f32.mrf.mxu0
        %v3444 = vadd.f32 %v3275, %v3443
        %3445 = vmatmul.bf16.gmra.mxu0 %v1020
        %v3446 = vpop.f32.mrf.mxu0
        %v3447 = vadd.f32 %v3278, %v3446
        %v3448 = vpop.f32.mrf.mxu0
        %v3449 = vadd.f32 %v3280, %v3448
        %3450 = vmatmul.bf16.gmra.mxu0 %v1024
        %v3451 = vpop.f32.mrf.mxu0
        %v3452 = vadd.f32 %v3283, %v3451
        %v3453 = vpop.f32.mrf.mxu0
        %v3454 = vadd.f32 %v3285, %v3453
        %3455 = vmatmul.bf16.gmra.mxu0 %v1028
        %v3456 = vpop.f32.mrf.mxu0
        %v3457 = vadd.f32 %v3288, %v3456
        %v3458 = vpop.f32.mrf.mxu0
        %v3459 = vadd.f32 %v3290, %v3458
        %3460 = vmatmul.bf16.gmra.mxu0 %v1032
        %v3461 = vpop.f32.mrf.mxu0
        %v3462 = vadd.f32 %v3293, %v3461
        %v3463 = vpop.f32.mrf.mxu0
        %v3464 = vadd.f32 %v3295, %v3463
        %3465 = vmatmul.bf16.gmra.mxu0 %v1036
        %v3466 = vpop.f32.mrf.mxu0
        %v3467 = vadd.f32 %v3298, %v3466
        %v3468 = vpop.f32.mrf.mxu0
        %v3469 = vadd.f32 %v3300, %v3468
        %3470 = vmatmul.bf16.gmra.mxu0 %v1040
        %v3471 = vpop.f32.mrf.mxu0
        %v3472 = vadd.f32 %v3303, %v3471
        %v3473 = vpop.f32.mrf.mxu0
        %v3474 = vadd.f32 %v3305, %v3473
        %3475 = vmatmul.bf16.gmra.mxu0 %v1044
        %v3476 = vpop.f32.mrf.mxu0
        %v3477 = vadd.f32 %v3308, %v3476
        %v3478 = vpop.f32.mrf.mxu0
        %v3479 = vadd.f32 %v3310, %v3478
        %3480 = vmatmul.bf16.gmra.mxu0 %v1048
        %v3481 = vpop.f32.mrf.mxu0
        %v3482 = vadd.f32 %v3313, %v3481
        %v3483 = vpop.f32.mrf.mxu0
        %v3484 = vadd.f32 %v3315, %v3483
        %3485 = vmatmul.bf16.gmra.mxu0 %v1052
        %v3486 = vpop.f32.mrf.mxu0
        %v3487 = vadd.f32 %v3318, %v3486
        %v3488 = vpop.f32.mrf.mxu0
        %v3489 = vadd.f32 %v3320, %v3488
        %3490 = vmatmul.bf16.gmra.mxu0 %v1056
        %v3491 = vpop.f32.mrf.mxu0
        %v3492 = vadd.f32 %v3323, %v3491
        %v3493 = vpop.f32.mrf.mxu0
        %v3494 = vadd.f32 %v3325, %v3493
        %3495 = vmatmul.bf16.gmra.mxu0 %v1060
        %v3496 = vpop.f32.mrf.mxu0
        %v3497 = vadd.f32 %v3328, %v3496
        %v3498 = vpop.f32.mrf.mxu0
        %v3499 = vadd.f32 %v3330, %v3498
        %3500 = vmatmul.bf16.gmra.mxu0 %v1064
        %v3501 = vpop.f32.mrf.mxu0
        %v3502 = vadd.f32 %v3333, %v3501
        %v3503 = vpop.f32.mrf.mxu0
        %v3504 = vadd.f32 %v3335, %v3503
        %3505 = vmatmul.bf16.gmra.mxu0 %v1068
        %v3506 = vpop.f32.mrf.mxu0
        %v3507 = vadd.f32 %v3338, %v3506
        %v3508 = vpop.f32.mrf.mxu0
        %v3509 = vadd.f32 %v3340, %v3508
        %3510 = vmatmul.bf16.gmra.mxu0 %v1072
        %v3511 = vpop.f32.mrf.mxu0
        %v3512 = vadd.f32 %v3343, %v3511
        %v3513 = vpop.f32.mrf.mxu0
        %v3514 = vadd.f32 %v3345, %v3513
        %3515 = vmatmul.bf16.gmra.mxu0 %v1076
        %v3516 = vpop.f32.mrf.mxu0
        %v3517 = vadd.f32 %v3348, %v3516
        %v3518 = vpop.f32.mrf.mxu0
        %v3519 = vadd.f32 %v3350, %v3518
        %3520 = vmatmul.bf16.gmra.mxu0 %v1080
        %v3521 = vpop.f32.mrf.mxu0
        %v3522 = vadd.f32 %v3353, %v3521
        %v3523 = vpop.f32.mrf.mxu0
        %v3524 = vadd.f32 %v3355, %v3523
        %3525 = vmatmul.bf16.gmra.mxu0 %v1084
        %v3526 = vpop.f32.mrf.mxu0
        %v3527 = vadd.f32 %v3358, %v3526
        %v3528 = vpop.f32.mrf.mxu0
        %v3529 = vadd.f32 %v3360, %v3528
        %3530 = vmatmul.bf16.gmra.mxu0 %v1088
        %v3531 = vpop.f32.mrf.mxu0
        %v3532 = vadd.f32 %v3363, %v3531
        %v3533 = vpop.f32.mrf.mxu0
        %v3534 = vadd.f32 %v3365, %v3533
        %3535 = vmatmul.bf16.gmra.mxu0 %v1092
        %v3536 = vpop.f32.mrf.mxu0
        %v3537 = vadd.f32 %v3368, %v3536
        %v3538 = vpop.f32.mrf.mxu0
        %v3539 = vadd.f32 %v3370, %v3538
        %3540 = vmatmul.bf16.gmra.mxu0 %v1096
        %v3541 = vpop.f32.mrf.mxu0
        %v3542 = vadd.f32 %v3373, %v3541
        %v3543 = vpop.f32.mrf.mxu0
        %v3544 = vadd.f32 %v3375, %v3543
        %3545 = vmatmul.bf16.gmra.mxu0 %v1100
        %v3546 = vpop.f32.mrf.mxu0
        %v3547 = vadd.f32 %v3378, %v3546
        %v3548 = vpop.f32.mrf.mxu0
        %v3549 = vadd.f32 %v3380, %v3548
        %3550 = vmatmul.bf16.gmra.mxu0 %v1104
        %v3551 = vpop.f32.mrf.mxu0
        %v3552 = vadd.f32 %v3383, %v3551
        %v3553 = vpop.f32.mrf.mxu0
        %v3554 = vadd.f32 %v3385, %v3553
        %3555 = vmatmul.bf16.gmra.mxu0 %v1108
        %v3556 = vpop.f32.mrf.mxu0
        %v3557 = vadd.f32 %v3388, %v3556
        %v3558 = vpop.f32.mrf.mxu0
        %v3559 = vadd.f32 %v3390, %v3558
        %3560 = vmatmul.bf16.gmra.mxu0 %v1112
        %v3561 = vpop.f32.mrf.mxu0
        %v3562 = vadd.f32 %v3393, %v3561
        %v3563 = vpop.f32.mrf.mxu0
        %v3564 = vadd.f32 %v3395, %v3563
        %3565 = vmatmul.bf16.gmra.mxu0 %v1116
        %v3566 = vpop.f32.mrf.mxu0
        %v3567 = vadd.f32 %v3398, %v3566
        %v3568 = vpop.f32.mrf.mxu0
        %v3569 = vadd.f32 %v3400, %v3568
        %3570 = vmatmul.bf16.gmra.mxu0 %v1120
        %v3571 = vpop.f32.mrf.mxu0
        %v3572 = vadd.f32 %v3403, %v3571
        %v3573 = vpop.f32.mrf.mxu0
        %v3574 = vadd.f32 %v3405, %v3573
        %3575 = vmatmul.bf16.gmra.mxu0 %v1124
        %v3576 = vpop.f32.mrf.mxu0
        %v3577 = vadd.f32 %v3408, %v3576
        %v3578 = vpop.f32.mrf.mxu0
        %v3579 = vadd.f32 %v3410, %v3578
        %3580 = vmatmul.bf16.gmra.mxu0 %v1128
        %v3581 = vpop.f32.mrf.mxu0
        %v3582 = vadd.f32 %v3413, %v3581
        %v3583 = vpop.f32.mrf.mxu0
        %v3584 = vadd.f32 %v3415, %v3583
        %3585 = vmatmul.bf16.gmra.mxu0 %v1132
        %v3586 = vpop.f32.mrf.mxu0
        %v3587 = vadd.f32 %v3418, %v3586
        %v3588 = vpop.f32.mrf.mxu0
        %v3589 = vadd.f32 %v3420, %v3588
        %3590 = vmatmul.bf16.gmra.mxu0 %v1136
        %v3591 = vpop.f32.mrf.mxu0
        %v3592 = vadd.f32 %v3423, %v3591
        %v3593 = vpop.f32.mrf.mxu0
        %v3594 = vadd.f32 %v3425, %v3593
        %3595 = vmatmul.bf16.gmra.mxu0 %v1140
        %v3596 = vpop.f32.mrf.mxu0
        %v3597 = vadd.f32 %v3428, %v3596
        %v3598 = vpop.f32.mrf.mxu0
        %v3599 = vadd.f32 %v3430, %v3598
        %3600 = vdwg.mxu0
        %3601 = vmatpush.bf16.msra.mxu0 %v1749
        %3602 = vmatpush.bf16.msra.mxu0 %v1745
        %3603 = vmatpush.bf16.msra.mxu0 %v1741
        %3604 = vmatpush.bf16.msra.mxu0 %v1737
        %3605 = vmatpush.bf16.msra.mxu0 %v1733
        %3606 = vmatpush.bf16.msra.mxu0 %v1729
        %3607 = vmatpush.bf16.msra.mxu0 %v1725
        %3608 = vmatpush.bf16.msra.mxu0 %v1721
        %3609 = vmatmul.bf16.gmra.mxu0 %v1017
        %v3610 = vpop.f32.mrf.mxu0
        %v3611 = vadd.f32 %v3442, %v3610
        %v3612 = vpop.f32.mrf.mxu0
        %v3613 = vadd.f32 %v3444, %v3612
        %3614 = vmatmul.bf16.gmra.mxu0 %v1021
        %v3615 = vpop.f32.mrf.mxu0
        %v3616 = vadd.f32 %v3447, %v3615
        %v3617 = vpop.f32.mrf.mxu0
        %v3618 = vadd.f32 %v3449, %v3617
        %3619 = vmatmul.bf16.gmra.mxu0 %v1025
        %v3620 = vpop.f32.mrf.mxu0
        %v3621 = vadd.f32 %v3452, %v3620
        %v3622 = vpop.f32.mrf.mxu0
        %v3623 = vadd.f32 %v3454, %v3622
        %3624 = vmatmul.bf16.gmra.mxu0 %v1029
        %v3625 = vpop.f32.mrf.mxu0
        %v3626 = vadd.f32 %v3457, %v3625
        %v3627 = vpop.f32.mrf.mxu0
        %v3628 = vadd.f32 %v3459, %v3627
        %3629 = vmatmul.bf16.gmra.mxu0 %v1033
        %v3630 = vpop.f32.mrf.mxu0
        %v3631 = vadd.f32 %v3462, %v3630
        %v3632 = vpop.f32.mrf.mxu0
        %v3633 = vadd.f32 %v3464, %v3632
        %3634 = vmatmul.bf16.gmra.mxu0 %v1037
        %v3635 = vpop.f32.mrf.mxu0
        %v3636 = vadd.f32 %v3467, %v3635
        %v3637 = vpop.f32.mrf.mxu0
        %v3638 = vadd.f32 %v3469, %v3637
        %3639 = vmatmul.bf16.gmra.mxu0 %v1041
        %v3640 = vpop.f32.mrf.mxu0
        %v3641 = vadd.f32 %v3472, %v3640
        %v3642 = vpop.f32.mrf.mxu0
        %v3643 = vadd.f32 %v3474, %v3642
        %3644 = vmatmul.bf16.gmra.mxu0 %v1045
        %v3645 = vpop.f32.mrf.mxu0
        %v3646 = vadd.f32 %v3477, %v3645
        %v3647 = vpop.f32.mrf.mxu0
        %v3648 = vadd.f32 %v3479, %v3647
        %3649 = vmatmul.bf16.gmra.mxu0 %v1049
        %v3650 = vpop.f32.mrf.mxu0
        %v3651 = vadd.f32 %v3482, %v3650
        %v3652 = vpop.f32.mrf.mxu0
        %v3653 = vadd.f32 %v3484, %v3652
        %3654 = vmatmul.bf16.gmra.mxu0 %v1053
        %v3655 = vpop.f32.mrf.mxu0
        %v3656 = vadd.f32 %v3487, %v3655
        %v3657 = vpop.f32.mrf.mxu0
        %v3658 = vadd.f32 %v3489, %v3657
        %3659 = vmatmul.bf16.gmra.mxu0 %v1057
        %v3660 = vpop.f32.mrf.mxu0
        %v3661 = vadd.f32 %v3492, %v3660
        %v3662 = vpop.f32.mrf.mxu0
        %v3663 = vadd.f32 %v3494, %v3662
        %3664 = vmatmul.bf16.gmra.mxu0 %v1061
        %v3665 = vpop.f32.mrf.mxu0
        %v3666 = vadd.f32 %v3497, %v3665
        %v3667 = vpop.f32.mrf.mxu0
        %v3668 = vadd.f32 %v3499, %v3667
        %3669 = vmatmul.bf16.gmra.mxu0 %v1065
        %v3670 = vpop.f32.mrf.mxu0
        %v3671 = vadd.f32 %v3502, %v3670
        %v3672 = vpop.f32.mrf.mxu0
        %v3673 = vadd.f32 %v3504, %v3672
        %3674 = vmatmul.bf16.gmra.mxu0 %v1069
        %v3675 = vpop.f32.mrf.mxu0
        %v3676 = vadd.f32 %v3507, %v3675
        %v3677 = vpop.f32.mrf.mxu0
        %v3678 = vadd.f32 %v3509, %v3677
        %3679 = vmatmul.bf16.gmra.mxu0 %v1073
        %v3680 = vpop.f32.mrf.mxu0
        %v3681 = vadd.f32 %v3512, %v3680
        %v3682 = vpop.f32.mrf.mxu0
        %v3683 = vadd.f32 %v3514, %v3682
        %3684 = vmatmul.bf16.gmra.mxu0 %v1077
        %v3685 = vpop.f32.mrf.mxu0
        %v3686 = vadd.f32 %v3517, %v3685
        %v3687 = vpop.f32.mrf.mxu0
        %v3688 = vadd.f32 %v3519, %v3687
        %3689 = vmatmul.bf16.gmra.mxu0 %v1081
        %v3690 = vpop.f32.mrf.mxu0
        %v3691 = vadd.f32 %v3522, %v3690
        %v3692 = vpop.f32.mrf.mxu0
        %v3693 = vadd.f32 %v3524, %v3692
        %3694 = vmatmul.bf16.gmra.mxu0 %v1085
        %v3695 = vpop.f32.mrf.mxu0
        %v3696 = vadd.f32 %v3527, %v3695
        %v3697 = vpop.f32.mrf.mxu0
        %v3698 = vadd.f32 %v3529, %v3697
        %3699 = vmatmul.bf16.gmra.mxu0 %v1089
        %v3700 = vpop.f32.mrf.mxu0
        %v3701 = vadd.f32 %v3532, %v3700
        %v3702 = vpop.f32.mrf.mxu0
        %v3703 = vadd.f32 %v3534, %v3702
        %3704 = vmatmul.bf16.gmra.mxu0 %v1093
        %v3705 = vpop.f32.mrf.mxu0
        %v3706 = vadd.f32 %v3537, %v3705
        %v3707 = vpop.f32.mrf.mxu0
        %v3708 = vadd.f32 %v3539, %v3707
        %3709 = vmatmul.bf16.gmra.mxu0 %v1097
        %v3710 = vpop.f32.mrf.mxu0
        %v3711 = vadd.f32 %v3542, %v3710
        %v3712 = vpop.f32.mrf.mxu0
        %v3713 = vadd.f32 %v3544, %v3712
        %3714 = vmatmul.bf16.gmra.mxu0 %v1101
        %v3715 = vpop.f32.mrf.mxu0
        %v3716 = vadd.f32 %v3547, %v3715
        %v3717 = vpop.f32.mrf.mxu0
        %v3718 = vadd.f32 %v3549, %v3717
        %3719 = vmatmul.bf16.gmra.mxu0 %v1105
        %v3720 = vpop.f32.mrf.mxu0
        %v3721 = vadd.f32 %v3552, %v3720
        %v3722 = vpop.f32.mrf.mxu0
        %v3723 = vadd.f32 %v3554, %v3722
        %3724 = vmatmul.bf16.gmra.mxu0 %v1109
        %v3725 = vpop.f32.mrf.mxu0
        %v3726 = vadd.f32 %v3557, %v3725
        %v3727 = vpop.f32.mrf.mxu0
        %v3728 = vadd.f32 %v3559, %v3727
        %3729 = vmatmul.bf16.gmra.mxu0 %v1113
        %v3730 = vpop.f32.mrf.mxu0
        %v3731 = vadd.f32 %v3562, %v3730
        %v3732 = vpop.f32.mrf.mxu0
        %v3733 = vadd.f32 %v3564, %v3732
        %3734 = vmatmul.bf16.gmra.mxu0 %v1117
        %v3735 = vpop.f32.mrf.mxu0
        %v3736 = vadd.f32 %v3567, %v3735
        %v3737 = vpop.f32.mrf.mxu0
        %v3738 = vadd.f32 %v3569, %v3737
        %3739 = vmatmul.bf16.gmra.mxu0 %v1121
        %v3740 = vpop.f32.mrf.mxu0
        %v3741 = vadd.f32 %v3572, %v3740
        %v3742 = vpop.f32.mrf.mxu0
        %v3743 = vadd.f32 %v3574, %v3742
        %3744 = vmatmul.bf16.gmra.mxu0 %v1125
        %v3745 = vpop.f32.mrf.mxu0
        %v3746 = vadd.f32 %v3577, %v3745
        %v3747 = vpop.f32.mrf.mxu0
        %v3748 = vadd.f32 %v3579, %v3747
        %3749 = vmatmul.bf16.gmra.mxu0 %v1129
        %v3750 = vpop.f32.mrf.mxu0
        %v3751 = vadd.f32 %v3582, %v3750
        %v3752 = vpop.f32.mrf.mxu0
        %v3753 = vadd.f32 %v3584, %v3752
        %3754 = vmatmul.bf16.gmra.mxu0 %v1133
        %v3755 = vpop.f32.mrf.mxu0
        %v3756 = vadd.f32 %v3587, %v3755
        %v3757 = vpop.f32.mrf.mxu0
        %v3758 = vadd.f32 %v3589, %v3757
        %3759 = vmatmul.bf16.gmra.mxu0 %v1137
        %v3760 = vpop.f32.mrf.mxu0
        %v3761 = vadd.f32 %v3592, %v3760
        %v3762 = vpop.f32.mrf.mxu0
        %v3763 = vadd.f32 %v3594, %v3762
        %3764 = vmatmul.bf16.gmra.mxu0 %v1141
        %v3765 = vpop.f32.mrf.mxu0
        %v3766 = vadd.f32 %v3597, %v3765
        %v3767 = vpop.f32.mrf.mxu0
        %v3768 = vadd.f32 %v3599, %v3767
        %3769 = vdwg.mxu0
        %3770 = vmatpush.bf16.msra.mxu0 %v1781
        %3771 = vmatpush.bf16.msra.mxu0 %v1777
        %3772 = vmatpush.bf16.msra.mxu0 %v1773
        %3773 = vmatpush.bf16.msra.mxu0 %v1769
        %3774 = vmatpush.bf16.msra.mxu0 %v1765
        %3775 = vmatpush.bf16.msra.mxu0 %v1761
        %3776 = vmatpush.bf16.msra.mxu0 %v1757
        %3777 = vmatpush.bf16.msra.mxu0 %v1753
        %3778 = vmatmul.bf16.gmra.mxu0 %v1018
        %v3779 = vpop.f32.mrf.mxu0
        %v3780 = vadd.f32 %v3611, %v3779
        %v3781 = vpop.f32.mrf.mxu0
        %v3782 = vadd.f32 %v3613, %v3781
        %3783 = vmatmul.bf16.gmra.mxu0 %v1022
        %v3784 = vpop.f32.mrf.mxu0
        %v3785 = vadd.f32 %v3616, %v3784
        %v3786 = vpop.f32.mrf.mxu0
        %v3787 = vadd.f32 %v3618, %v3786
        %3788 = vmatmul.bf16.gmra.mxu0 %v1026
        %v3789 = vpop.f32.mrf.mxu0
        %v3790 = vadd.f32 %v3621, %v3789
        %v3791 = vpop.f32.mrf.mxu0
        %v3792 = vadd.f32 %v3623, %v3791
        %3793 = vmatmul.bf16.gmra.mxu0 %v1030
        %v3794 = vpop.f32.mrf.mxu0
        %v3795 = vadd.f32 %v3626, %v3794
        %v3796 = vpop.f32.mrf.mxu0
        %v3797 = vadd.f32 %v3628, %v3796
        %3798 = vmatmul.bf16.gmra.mxu0 %v1034
        %v3799 = vpop.f32.mrf.mxu0
        %v3800 = vadd.f32 %v3631, %v3799
        %v3801 = vpop.f32.mrf.mxu0
        %v3802 = vadd.f32 %v3633, %v3801
        %3803 = vmatmul.bf16.gmra.mxu0 %v1038
        %v3804 = vpop.f32.mrf.mxu0
        %v3805 = vadd.f32 %v3636, %v3804
        %v3806 = vpop.f32.mrf.mxu0
        %v3807 = vadd.f32 %v3638, %v3806
        %3808 = vmatmul.bf16.gmra.mxu0 %v1042
        %v3809 = vpop.f32.mrf.mxu0
        %v3810 = vadd.f32 %v3641, %v3809
        %v3811 = vpop.f32.mrf.mxu0
        %v3812 = vadd.f32 %v3643, %v3811
        %3813 = vmatmul.bf16.gmra.mxu0 %v1046
        %v3814 = vpop.f32.mrf.mxu0
        %v3815 = vadd.f32 %v3646, %v3814
        %v3816 = vpop.f32.mrf.mxu0
        %v3817 = vadd.f32 %v3648, %v3816
        %3818 = vmatmul.bf16.gmra.mxu0 %v1050
        %v3819 = vpop.f32.mrf.mxu0
        %v3820 = vadd.f32 %v3651, %v3819
        %v3821 = vpop.f32.mrf.mxu0
        %v3822 = vadd.f32 %v3653, %v3821
        %3823 = vmatmul.bf16.gmra.mxu0 %v1054
        %v3824 = vpop.f32.mrf.mxu0
        %v3825 = vadd.f32 %v3656, %v3824
        %v3826 = vpop.f32.mrf.mxu0
        %v3827 = vadd.f32 %v3658, %v3826
        %3828 = vmatmul.bf16.gmra.mxu0 %v1058
        %v3829 = vpop.f32.mrf.mxu0
        %v3830 = vadd.f32 %v3661, %v3829
        %v3831 = vpop.f32.mrf.mxu0
        %v3832 = vadd.f32 %v3663, %v3831
        %3833 = vmatmul.bf16.gmra.mxu0 %v1062
        %v3834 = vpop.f32.mrf.mxu0
        %v3835 = vadd.f32 %v3666, %v3834
        %v3836 = vpop.f32.mrf.mxu0
        %v3837 = vadd.f32 %v3668, %v3836
        %3838 = vmatmul.bf16.gmra.mxu0 %v1066
        %v3839 = vpop.f32.mrf.mxu0
        %v3840 = vadd.f32 %v3671, %v3839
        %v3841 = vpop.f32.mrf.mxu0
        %v3842 = vadd.f32 %v3673, %v3841
        %3843 = vmatmul.bf16.gmra.mxu0 %v1070
        %v3844 = vpop.f32.mrf.mxu0
        %v3845 = vadd.f32 %v3676, %v3844
        %v3846 = vpop.f32.mrf.mxu0
        %v3847 = vadd.f32 %v3678, %v3846
        %3848 = vmatmul.bf16.gmra.mxu0 %v1074
        %v3849 = vpop.f32.mrf.mxu0
        %v3850 = vadd.f32 %v3681, %v3849
        %v3851 = vpop.f32.mrf.mxu0
        %v3852 = vadd.f32 %v3683, %v3851
        %3853 = vmatmul.bf16.gmra.mxu0 %v1078
        %v3854 = vpop.f32.mrf.mxu0
        %v3855 = vadd.f32 %v3686, %v3854
        %v3856 = vpop.f32.mrf.mxu0
        %v3857 = vadd.f32 %v3688, %v3856
        %3858 = vmatmul.bf16.gmra.mxu0 %v1082
        %v3859 = vpop.f32.mrf.mxu0
        %v3860 = vadd.f32 %v3691, %v3859
        %v3861 = vpop.f32.mrf.mxu0
        %v3862 = vadd.f32 %v3693, %v3861
        %3863 = vmatmul.bf16.gmra.mxu0 %v1086
        %v3864 = vpop.f32.mrf.mxu0
        %v3865 = vadd.f32 %v3696, %v3864
        %v3866 = vpop.f32.mrf.mxu0
        %v3867 = vadd.f32 %v3698, %v3866
        %3868 = vmatmul.bf16.gmra.mxu0 %v1090
        %v3869 = vpop.f32.mrf.mxu0
        %v3870 = vadd.f32 %v3701, %v3869
        %v3871 = vpop.f32.mrf.mxu0
        %v3872 = vadd.f32 %v3703, %v3871
        %3873 = vmatmul.bf16.gmra.mxu0 %v1094
        %v3874 = vpop.f32.mrf.mxu0
        %v3875 = vadd.f32 %v3706, %v3874
        %v3876 = vpop.f32.mrf.mxu0
        %v3877 = vadd.f32 %v3708, %v3876
        %3878 = vmatmul.bf16.gmra.mxu0 %v1098
        %v3879 = vpop.f32.mrf.mxu0
        %v3880 = vadd.f32 %v3711, %v3879
        %v3881 = vpop.f32.mrf.mxu0
        %v3882 = vadd.f32 %v3713, %v3881
        %3883 = vmatmul.bf16.gmra.mxu0 %v1102
        %v3884 = vpop.f32.mrf.mxu0
        %v3885 = vadd.f32 %v3716, %v3884
        %v3886 = vpop.f32.mrf.mxu0
        %v3887 = vadd.f32 %v3718, %v3886
        %3888 = vmatmul.bf16.gmra.mxu0 %v1106
        %v3889 = vpop.f32.mrf.mxu0
        %v3890 = vadd.f32 %v3721, %v3889
        %v3891 = vpop.f32.mrf.mxu0
        %v3892 = vadd.f32 %v3723, %v3891
        %3893 = vmatmul.bf16.gmra.mxu0 %v1110
        %v3894 = vpop.f32.mrf.mxu0
        %v3895 = vadd.f32 %v3726, %v3894
        %v3896 = vpop.f32.mrf.mxu0
        %v3897 = vadd.f32 %v3728, %v3896
        %3898 = vmatmul.bf16.gmra.mxu0 %v1114
        %v3899 = vpop.f32.mrf.mxu0
        %v3900 = vadd.f32 %v3731, %v3899
        %v3901 = vpop.f32.mrf.mxu0
        %v3902 = vadd.f32 %v3733, %v3901
        %3903 = vmatmul.bf16.gmra.mxu0 %v1118
        %v3904 = vpop.f32.mrf.mxu0
        %v3905 = vadd.f32 %v3736, %v3904
        %v3906 = vpop.f32.mrf.mxu0
        %v3907 = vadd.f32 %v3738, %v3906
        %3908 = vmatmul.bf16.gmra.mxu0 %v1122
        %v3909 = vpop.f32.mrf.mxu0
        %v3910 = vadd.f32 %v3741, %v3909
        %v3911 = vpop.f32.mrf.mxu0
        %v3912 = vadd.f32 %v3743, %v3911
        %3913 = vmatmul.bf16.gmra.mxu0 %v1126
        %v3914 = vpop.f32.mrf.mxu0
        %v3915 = vadd.f32 %v3746, %v3914
        %v3916 = vpop.f32.mrf.mxu0
        %v3917 = vadd.f32 %v3748, %v3916
        %3918 = vmatmul.bf16.gmra.mxu0 %v1130
        %v3919 = vpop.f32.mrf.mxu0
        %v3920 = vadd.f32 %v3751, %v3919
        %v3921 = vpop.f32.mrf.mxu0
        %v3922 = vadd.f32 %v3753, %v3921
        %3923 = vmatmul.bf16.gmra.mxu0 %v1134
        %v3924 = vpop.f32.mrf.mxu0
        %v3925 = vadd.f32 %v3756, %v3924
        %v3926 = vpop.f32.mrf.mxu0
        %v3927 = vadd.f32 %v3758, %v3926
        %3928 = vmatmul.bf16.gmra.mxu0 %v1138
        %v3929 = vpop.f32.mrf.mxu0
        %v3930 = vadd.f32 %v3761, %v3929
        %v3931 = vpop.f32.mrf.mxu0
        %v3932 = vadd.f32 %v3763, %v3931
        %3933 = vmatmul.bf16.gmra.mxu0 %v1142
        %v3934 = vpop.f32.mrf.mxu0
        %v3935 = vadd.f32 %v3766, %v3934
        %v3936 = vpop.f32.mrf.mxu0
        %v3937 = vadd.f32 %v3768, %v3936
        %3938 = vdwg.mxu0
        %3939 = vmatpush.bf16.msra.mxu0 %v1686
        %3940 = vmatpush.bf16.msra.mxu0 %v1682
        %3941 = vmatpush.bf16.msra.mxu0 %v1678
        %3942 = vmatpush.bf16.msra.mxu0 %v1674
        %3943 = vmatpush.bf16.msra.mxu0 %v1670
        %3944 = vmatpush.bf16.msra.mxu0 %v1666
        %3945 = vmatpush.bf16.msra.mxu0 %v1662
        %3946 = vmatpush.bf16.msra.mxu0 %v1658
        %3947 = vmatmul.bf16.gmra.mxu0 %v1015
        %v3948 = vpop.f32.mrf.mxu0
        %v3949 = vadd.f32 0.0, %v3948
        %v3950 = vpop.f32.mrf.mxu0
        %v3951 = vadd.f32 0.0, %v3950
        %3952 = vmatmul.bf16.gmra.mxu0 %v1019
        %v3953 = vpop.f32.mrf.mxu0
        %v3954 = vadd.f32 0.0, %v3953
        %v3955 = vpop.f32.mrf.mxu0
        %v3956 = vadd.f32 0.0, %v3955
        %3957 = vmatmul.bf16.gmra.mxu0 %v1023
        %v3958 = vpop.f32.mrf.mxu0
        %v3959 = vadd.f32 0.0, %v3958
        %v3960 = vpop.f32.mrf.mxu0
        %v3961 = vadd.f32 0.0, %v3960
        %3962 = vmatmul.bf16.gmra.mxu0 %v1027
        %v3963 = vpop.f32.mrf.mxu0
        %v3964 = vadd.f32 0.0, %v3963
        %v3965 = vpop.f32.mrf.mxu0
        %v3966 = vadd.f32 0.0, %v3965
        %3967 = vmatmul.bf16.gmra.mxu0 %v1031
        %v3968 = vpop.f32.mrf.mxu0
        %v3969 = vadd.f32 0.0, %v3968
        %v3970 = vpop.f32.mrf.mxu0
        %v3971 = vadd.f32 0.0, %v3970
        %3972 = vmatmul.bf16.gmra.mxu0 %v1035
        %v3973 = vpop.f32.mrf.mxu0
        %v3974 = vadd.f32 0.0, %v3973
        %v3975 = vpop.f32.mrf.mxu0
        %v3976 = vadd.f32 0.0, %v3975
        %3977 = vmatmul.bf16.gmra.mxu0 %v1039
        %v3978 = vpop.f32.mrf.mxu0
        %v3979 = vadd.f32 0.0, %v3978
        %v3980 = vpop.f32.mrf.mxu0
        %v3981 = vadd.f32 0.0, %v3980
        %3982 = vmatmul.bf16.gmra.mxu0 %v1043
        %v3983 = vpop.f32.mrf.mxu0
        %v3984 = vadd.f32 0.0, %v3983
        %v3985 = vpop.f32.mrf.mxu0
        %v3986 = vadd.f32 0.0, %v3985
        %3987 = vmatmul.bf16.gmra.mxu0 %v1047
        %v3988 = vpop.f32.mrf.mxu0
        %v3989 = vadd.f32 0.0, %v3988
        %v3990 = vpop.f32.mrf.mxu0
        %v3991 = vadd.f32 0.0, %v3990
        %3992 = vmatmul.bf16.gmra.mxu0 %v1051
        %v3993 = vpop.f32.mrf.mxu0
        %v3994 = vadd.f32 0.0, %v3993
        %v3995 = vpop.f32.mrf.mxu0
        %v3996 = vadd.f32 0.0, %v3995
        %3997 = vmatmul.bf16.gmra.mxu0 %v1055
        %v3998 = vpop.f32.mrf.mxu0
        %v3999 = vadd.f32 0.0, %v3998
        %v4000 = vpop.f32.mrf.mxu0
        %v4001 = vadd.f32 0.0, %v4000
        %4002 = vmatmul.bf16.gmra.mxu0 %v1059
        %v4003 = vpop.f32.mrf.mxu0
        %v4004 = vadd.f32 0.0, %v4003
        %v4005 = vpop.f32.mrf.mxu0
        %v4006 = vadd.f32 0.0, %v4005
        %4007 = vmatmul.bf16.gmra.mxu0 %v1063
        %v4008 = vpop.f32.mrf.mxu0
        %v4009 = vadd.f32 0.0, %v4008
        %v4010 = vpop.f32.mrf.mxu0
        %v4011 = vadd.f32 0.0, %v4010
        %4012 = vmatmul.bf16.gmra.mxu0 %v1067
        %v4013 = vpop.f32.mrf.mxu0
        %v4014 = vadd.f32 0.0, %v4013
        %v4015 = vpop.f32.mrf.mxu0
        %v4016 = vadd.f32 0.0, %v4015
        %4017 = vmatmul.bf16.gmra.mxu0 %v1071
        %v4018 = vpop.f32.mrf.mxu0
        %v4019 = vadd.f32 0.0, %v4018
        %v4020 = vpop.f32.mrf.mxu0
        %v4021 = vadd.f32 0.0, %v4020
        %4022 = vmatmul.bf16.gmra.mxu0 %v1075
        %v4023 = vpop.f32.mrf.mxu0
        %v4024 = vadd.f32 0.0, %v4023
        %v4025 = vpop.f32.mrf.mxu0
        %v4026 = vadd.f32 0.0, %v4025
        %4027 = vmatmul.bf16.gmra.mxu0 %v1079
        %v4028 = vpop.f32.mrf.mxu0
        %v4029 = vadd.f32 0.0, %v4028
        %v4030 = vpop.f32.mrf.mxu0
        %v4031 = vadd.f32 0.0, %v4030
        %4032 = vmatmul.bf16.gmra.mxu0 %v1083
        %v4033 = vpop.f32.mrf.mxu0
        %v4034 = vadd.f32 0.0, %v4033
        %v4035 = vpop.f32.mrf.mxu0
        %v4036 = vadd.f32 0.0, %v4035
        %4037 = vmatmul.bf16.gmra.mxu0 %v1087
        %v4038 = vpop.f32.mrf.mxu0
        %v4039 = vadd.f32 0.0, %v4038
        %v4040 = vpop.f32.mrf.mxu0
        %v4041 = vadd.f32 0.0, %v4040
        %4042 = vmatmul.bf16.gmra.mxu0 %v1091
        %v4043 = vpop.f32.mrf.mxu0
        %v4044 = vadd.f32 0.0, %v4043
        %v4045 = vpop.f32.mrf.mxu0
        %v4046 = vadd.f32 0.0, %v4045
        %4047 = vmatmul.bf16.gmra.mxu0 %v1095
        %v4048 = vpop.f32.mrf.mxu0
        %v4049 = vadd.f32 0.0, %v4048
        %v4050 = vpop.f32.mrf.mxu0
        %v4051 = vadd.f32 0.0, %v4050
        %4052 = vmatmul.bf16.gmra.mxu0 %v1099
        %v4053 = vpop.f32.mrf.mxu0
        %v4054 = vadd.f32 0.0, %v4053
        %v4055 = vpop.f32.mrf.mxu0
        %v4056 = vadd.f32 0.0, %v4055
        %4057 = vmatmul.bf16.gmra.mxu0 %v1103
        %v4058 = vpop.f32.mrf.mxu0
        %v4059 = vadd.f32 0.0, %v4058
        %v4060 = vpop.f32.mrf.mxu0
        %v4061 = vadd.f32 0.0, %v4060
        %4062 = vmatmul.bf16.gmra.mxu0 %v1107
        %v4063 = vpop.f32.mrf.mxu0
        %v4064 = vadd.f32 0.0, %v4063
        %v4065 = vpop.f32.mrf.mxu0
        %v4066 = vadd.f32 0.0, %v4065
        %4067 = vmatmul.bf16.gmra.mxu0 %v1111
        %v4068 = vpop.f32.mrf.mxu0
        %v4069 = vadd.f32 0.0, %v4068
        %v4070 = vpop.f32.mrf.mxu0
        %v4071 = vadd.f32 0.0, %v4070
        %4072 = vmatmul.bf16.gmra.mxu0 %v1115
        %v4073 = vpop.f32.mrf.mxu0
        %v4074 = vadd.f32 0.0, %v4073
        %v4075 = vpop.f32.mrf.mxu0
        %v4076 = vadd.f32 0.0, %v4075
        %4077 = vmatmul.bf16.gmra.mxu0 %v1119
        %v4078 = vpop.f32.mrf.mxu0
        %v4079 = vadd.f32 0.0, %v4078
        %v4080 = vpop.f32.mrf.mxu0
        %v4081 = vadd.f32 0.0, %v4080
        %4082 = vmatmul.bf16.gmra.mxu0 %v1123
        %v4083 = vpop.f32.mrf.mxu0
        %v4084 = vadd.f32 0.0, %v4083
        %v4085 = vpop.f32.mrf.mxu0
        %v4086 = vadd.f32 0.0, %v4085
        %4087 = vmatmul.bf16.gmra.mxu0 %v1127
        %v4088 = vpop.f32.mrf.mxu0
        %v4089 = vadd.f32 0.0, %v4088
        %v4090 = vpop.f32.mrf.mxu0
        %v4091 = vadd.f32 0.0, %v4090
        %4092 = vmatmul.bf16.gmra.mxu0 %v1131
        %v4093 = vpop.f32.mrf.mxu0
        %v4094 = vadd.f32 0.0, %v4093
        %v4095 = vpop.f32.mrf.mxu0
        %v4096 = vadd.f32 0.0, %v4095
        %4097 = vmatmul.bf16.gmra.mxu0 %v1135
        %v4098 = vpop.f32.mrf.mxu0
        %v4099 = vadd.f32 0.0, %v4098
        %v4100 = vpop.f32.mrf.mxu0
        %v4101 = vadd.f32 0.0, %v4100
        %4102 = vmatmul.bf16.gmra.mxu0 %v1139
        %v4103 = vpop.f32.mrf.mxu0
        %v4104 = vadd.f32 0.0, %v4103
        %v4105 = vpop.f32.mrf.mxu0
        %v4106 = vadd.f32 0.0, %v4105
        %4107 = vdwg.mxu0
        %4108 = vmatpush.bf16.msra.mxu0 %v1718
        %4109 = vmatpush.bf16.msra.mxu0 %v1714
        %4110 = vmatpush.bf16.msra.mxu0 %v1710
        %4111 = vmatpush.bf16.msra.mxu0 %v1706
        %4112 = vmatpush.bf16.msra.mxu0 %v1702
        %4113 = vmatpush.bf16.msra.mxu0 %v1698
        %4114 = vmatpush.bf16.msra.mxu0 %v1694
        %4115 = vmatpush.bf16.msra.mxu0 %v1690
        %4116 = vmatmul.bf16.gmra.mxu0 %v1016
        %v4117 = vpop.f32.mrf.mxu0
        %v4118 = vadd.f32 %v3949, %v4117
        %v4119 = vpop.f32.mrf.mxu0
        %v4120 = vadd.f32 %v3951, %v4119
        %4121 = vmatmul.bf16.gmra.mxu0 %v1020
        %v4122 = vpop.f32.mrf.mxu0
        %v4123 = vadd.f32 %v3954, %v4122
        %v4124 = vpop.f32.mrf.mxu0
        %v4125 = vadd.f32 %v3956, %v4124
        %4126 = vmatmul.bf16.gmra.mxu0 %v1024
        %v4127 = vpop.f32.mrf.mxu0
        %v4128 = vadd.f32 %v3959, %v4127
        %v4129 = vpop.f32.mrf.mxu0
        %v4130 = vadd.f32 %v3961, %v4129
        %4131 = vmatmul.bf16.gmra.mxu0 %v1028
        %v4132 = vpop.f32.mrf.mxu0
        %v4133 = vadd.f32 %v3964, %v4132
        %v4134 = vpop.f32.mrf.mxu0
        %v4135 = vadd.f32 %v3966, %v4134
        %4136 = vmatmul.bf16.gmra.mxu0 %v1032
        %v4137 = vpop.f32.mrf.mxu0
        %v4138 = vadd.f32 %v3969, %v4137
        %v4139 = vpop.f32.mrf.mxu0
        %v4140 = vadd.f32 %v3971, %v4139
        %4141 = vmatmul.bf16.gmra.mxu0 %v1036
        %v4142 = vpop.f32.mrf.mxu0
        %v4143 = vadd.f32 %v3974, %v4142
        %v4144 = vpop.f32.mrf.mxu0
        %v4145 = vadd.f32 %v3976, %v4144
        %4146 = vmatmul.bf16.gmra.mxu0 %v1040
        %v4147 = vpop.f32.mrf.mxu0
        %v4148 = vadd.f32 %v3979, %v4147
        %v4149 = vpop.f32.mrf.mxu0
        %v4150 = vadd.f32 %v3981, %v4149
        %4151 = vmatmul.bf16.gmra.mxu0 %v1044
        %v4152 = vpop.f32.mrf.mxu0
        %v4153 = vadd.f32 %v3984, %v4152
        %v4154 = vpop.f32.mrf.mxu0
        %v4155 = vadd.f32 %v3986, %v4154
        %4156 = vmatmul.bf16.gmra.mxu0 %v1048
        %v4157 = vpop.f32.mrf.mxu0
        %v4158 = vadd.f32 %v3989, %v4157
        %v4159 = vpop.f32.mrf.mxu0
        %v4160 = vadd.f32 %v3991, %v4159
        %4161 = vmatmul.bf16.gmra.mxu0 %v1052
        %v4162 = vpop.f32.mrf.mxu0
        %v4163 = vadd.f32 %v3994, %v4162
        %v4164 = vpop.f32.mrf.mxu0
        %v4165 = vadd.f32 %v3996, %v4164
        %4166 = vmatmul.bf16.gmra.mxu0 %v1056
        %v4167 = vpop.f32.mrf.mxu0
        %v4168 = vadd.f32 %v3999, %v4167
        %v4169 = vpop.f32.mrf.mxu0
        %v4170 = vadd.f32 %v4001, %v4169
        %4171 = vmatmul.bf16.gmra.mxu0 %v1060
        %v4172 = vpop.f32.mrf.mxu0
        %v4173 = vadd.f32 %v4004, %v4172
        %v4174 = vpop.f32.mrf.mxu0
        %v4175 = vadd.f32 %v4006, %v4174
        %4176 = vmatmul.bf16.gmra.mxu0 %v1064
        %v4177 = vpop.f32.mrf.mxu0
        %v4178 = vadd.f32 %v4009, %v4177
        %v4179 = vpop.f32.mrf.mxu0
        %v4180 = vadd.f32 %v4011, %v4179
        %4181 = vmatmul.bf16.gmra.mxu0 %v1068
        %v4182 = vpop.f32.mrf.mxu0
        %v4183 = vadd.f32 %v4014, %v4182
        %v4184 = vpop.f32.mrf.mxu0
        %v4185 = vadd.f32 %v4016, %v4184
        %4186 = vmatmul.bf16.gmra.mxu0 %v1072
        %v4187 = vpop.f32.mrf.mxu0
        %v4188 = vadd.f32 %v4019, %v4187
        %v4189 = vpop.f32.mrf.mxu0
        %v4190 = vadd.f32 %v4021, %v4189
        %4191 = vmatmul.bf16.gmra.mxu0 %v1076
        %v4192 = vpop.f32.mrf.mxu0
        %v4193 = vadd.f32 %v4024, %v4192
        %v4194 = vpop.f32.mrf.mxu0
        %v4195 = vadd.f32 %v4026, %v4194
        %4196 = vmatmul.bf16.gmra.mxu0 %v1080
        %v4197 = vpop.f32.mrf.mxu0
        %v4198 = vadd.f32 %v4029, %v4197
        %v4199 = vpop.f32.mrf.mxu0
        %v4200 = vadd.f32 %v4031, %v4199
        %4201 = vmatmul.bf16.gmra.mxu0 %v1084
        %v4202 = vpop.f32.mrf.mxu0
        %v4203 = vadd.f32 %v4034, %v4202
        %v4204 = vpop.f32.mrf.mxu0
        %v4205 = vadd.f32 %v4036, %v4204
        %4206 = vmatmul.bf16.gmra.mxu0 %v1088
        %v4207 = vpop.f32.mrf.mxu0
        %v4208 = vadd.f32 %v4039, %v4207
        %v4209 = vpop.f32.mrf.mxu0
        %v4210 = vadd.f32 %v4041, %v4209
        %4211 = vmatmul.bf16.gmra.mxu0 %v1092
        %v4212 = vpop.f32.mrf.mxu0
        %v4213 = vadd.f32 %v4044, %v4212
        %v4214 = vpop.f32.mrf.mxu0
        %v4215 = vadd.f32 %v4046, %v4214
        %4216 = vmatmul.bf16.gmra.mxu0 %v1096
        %v4217 = vpop.f32.mrf.mxu0
        %v4218 = vadd.f32 %v4049, %v4217
        %v4219 = vpop.f32.mrf.mxu0
        %v4220 = vadd.f32 %v4051, %v4219
        %4221 = vmatmul.bf16.gmra.mxu0 %v1100
        %v4222 = vpop.f32.mrf.mxu0
        %v4223 = vadd.f32 %v4054, %v4222
        %v4224 = vpop.f32.mrf.mxu0
        %v4225 = vadd.f32 %v4056, %v4224
        %4226 = vmatmul.bf16.gmra.mxu0 %v1104
        %v4227 = vpop.f32.mrf.mxu0
        %v4228 = vadd.f32 %v4059, %v4227
        %v4229 = vpop.f32.mrf.mxu0
        %v4230 = vadd.f32 %v4061, %v4229
        %4231 = vmatmul.bf16.gmra.mxu0 %v1108
        %v4232 = vpop.f32.mrf.mxu0
        %v4233 = vadd.f32 %v4064, %v4232
        %v4234 = vpop.f32.mrf.mxu0
        %v4235 = vadd.f32 %v4066, %v4234
        %4236 = vmatmul.bf16.gmra.mxu0 %v1112
        %v4237 = vpop.f32.mrf.mxu0
        %v4238 = vadd.f32 %v4069, %v4237
        %v4239 = vpop.f32.mrf.mxu0
        %v4240 = vadd.f32 %v4071, %v4239
        %4241 = vmatmul.bf16.gmra.mxu0 %v1116
        %v4242 = vpop.f32.mrf.mxu0
        %v4243 = vadd.f32 %v4074, %v4242
        %v4244 = vpop.f32.mrf.mxu0
        %v4245 = vadd.f32 %v4076, %v4244
        %4246 = vmatmul.bf16.gmra.mxu0 %v1120
        %v4247 = vpop.f32.mrf.mxu0
        %v4248 = vadd.f32 %v4079, %v4247
        %v4249 = vpop.f32.mrf.mxu0
        %v4250 = vadd.f32 %v4081, %v4249
        %4251 = vmatmul.bf16.gmra.mxu0 %v1124
        %v4252 = vpop.f32.mrf.mxu0
        %v4253 = vadd.f32 %v4084, %v4252
        %v4254 = vpop.f32.mrf.mxu0
        %v4255 = vadd.f32 %v4086, %v4254
        %4256 = vmatmul.bf16.gmra.mxu0 %v1128
        %v4257 = vpop.f32.mrf.mxu0
        %v4258 = vadd.f32 %v4089, %v4257
        %v4259 = vpop.f32.mrf.mxu0
        %v4260 = vadd.f32 %v4091, %v4259
        %4261 = vmatmul.bf16.gmra.mxu0 %v1132
        %v4262 = vpop.f32.mrf.mxu0
        %v4263 = vadd.f32 %v4094, %v4262
        %v4264 = vpop.f32.mrf.mxu0
        %v4265 = vadd.f32 %v4096, %v4264
        %4266 = vmatmul.bf16.gmra.mxu0 %v1136
        %v4267 = vpop.f32.mrf.mxu0
        %v4268 = vadd.f32 %v4099, %v4267
        %v4269 = vpop.f32.mrf.mxu0
        %v4270 = vadd.f32 %v4101, %v4269
        %4271 = vmatmul.bf16.gmra.mxu0 %v1140
        %v4272 = vpop.f32.mrf.mxu0
        %v4273 = vadd.f32 %v4104, %v4272
        %v4274 = vpop.f32.mrf.mxu0
        %v4275 = vadd.f32 %v4106, %v4274
        %4276 = vdwg.mxu0
        %4277 = vmatpush.bf16.msra.mxu0 %v1750
        %4278 = vmatpush.bf16.msra.mxu0 %v1746
        %4279 = vmatpush.bf16.msra.mxu0 %v1742
        %4280 = vmatpush.bf16.msra.mxu0 %v1738
        %4281 = vmatpush.bf16.msra.mxu0 %v1734
        %4282 = vmatpush.bf16.msra.mxu0 %v1730
        %4283 = vmatpush.bf16.msra.mxu0 %v1726
        %4284 = vmatpush.bf16.msra.mxu0 %v1722
        %4285 = vmatmul.bf16.gmra.mxu0 %v1017
        %v4286 = vpop.f32.mrf.mxu0
        %v4287 = vadd.f32 %v4118, %v4286
        %v4288 = vpop.f32.mrf.mxu0
        %v4289 = vadd.f32 %v4120, %v4288
        %4290 = vmatmul.bf16.gmra.mxu0 %v1021
        %v4291 = vpop.f32.mrf.mxu0
        %v4292 = vadd.f32 %v4123, %v4291
        %v4293 = vpop.f32.mrf.mxu0
        %v4294 = vadd.f32 %v4125, %v4293
        %4295 = vmatmul.bf16.gmra.mxu0 %v1025
        %v4296 = vpop.f32.mrf.mxu0
        %v4297 = vadd.f32 %v4128, %v4296
        %v4298 = vpop.f32.mrf.mxu0
        %v4299 = vadd.f32 %v4130, %v4298
        %4300 = vmatmul.bf16.gmra.mxu0 %v1029
        %v4301 = vpop.f32.mrf.mxu0
        %v4302 = vadd.f32 %v4133, %v4301
        %v4303 = vpop.f32.mrf.mxu0
        %v4304 = vadd.f32 %v4135, %v4303
        %4305 = vmatmul.bf16.gmra.mxu0 %v1033
        %v4306 = vpop.f32.mrf.mxu0
        %v4307 = vadd.f32 %v4138, %v4306
        %v4308 = vpop.f32.mrf.mxu0
        %v4309 = vadd.f32 %v4140, %v4308
        %4310 = vmatmul.bf16.gmra.mxu0 %v1037
        %v4311 = vpop.f32.mrf.mxu0
        %v4312 = vadd.f32 %v4143, %v4311
        %v4313 = vpop.f32.mrf.mxu0
        %v4314 = vadd.f32 %v4145, %v4313
        %4315 = vmatmul.bf16.gmra.mxu0 %v1041
        %v4316 = vpop.f32.mrf.mxu0
        %v4317 = vadd.f32 %v4148, %v4316
        %v4318 = vpop.f32.mrf.mxu0
        %v4319 = vadd.f32 %v4150, %v4318
        %4320 = vmatmul.bf16.gmra.mxu0 %v1045
        %v4321 = vpop.f32.mrf.mxu0
        %v4322 = vadd.f32 %v4153, %v4321
        %v4323 = vpop.f32.mrf.mxu0
        %v4324 = vadd.f32 %v4155, %v4323
        %4325 = vmatmul.bf16.gmra.mxu0 %v1049
        %v4326 = vpop.f32.mrf.mxu0
        %v4327 = vadd.f32 %v4158, %v4326
        %v4328 = vpop.f32.mrf.mxu0
        %v4329 = vadd.f32 %v4160, %v4328
        %4330 = vmatmul.bf16.gmra.mxu0 %v1053
        %v4331 = vpop.f32.mrf.mxu0
        %v4332 = vadd.f32 %v4163, %v4331
        %v4333 = vpop.f32.mrf.mxu0
        %v4334 = vadd.f32 %v4165, %v4333
        %4335 = vmatmul.bf16.gmra.mxu0 %v1057
        %v4336 = vpop.f32.mrf.mxu0
        %v4337 = vadd.f32 %v4168, %v4336
        %v4338 = vpop.f32.mrf.mxu0
        %v4339 = vadd.f32 %v4170, %v4338
        %4340 = vmatmul.bf16.gmra.mxu0 %v1061
        %v4341 = vpop.f32.mrf.mxu0
        %v4342 = vadd.f32 %v4173, %v4341
        %v4343 = vpop.f32.mrf.mxu0
        %v4344 = vadd.f32 %v4175, %v4343
        %4345 = vmatmul.bf16.gmra.mxu0 %v1065
        %v4346 = vpop.f32.mrf.mxu0
        %v4347 = vadd.f32 %v4178, %v4346
        %v4348 = vpop.f32.mrf.mxu0
        %v4349 = vadd.f32 %v4180, %v4348
        %4350 = vmatmul.bf16.gmra.mxu0 %v1069
        %v4351 = vpop.f32.mrf.mxu0
        %v4352 = vadd.f32 %v4183, %v4351
        %v4353 = vpop.f32.mrf.mxu0
        %v4354 = vadd.f32 %v4185, %v4353
        %4355 = vmatmul.bf16.gmra.mxu0 %v1073
        %v4356 = vpop.f32.mrf.mxu0
        %v4357 = vadd.f32 %v4188, %v4356
        %v4358 = vpop.f32.mrf.mxu0
        %v4359 = vadd.f32 %v4190, %v4358
        %4360 = vmatmul.bf16.gmra.mxu0 %v1077
        %v4361 = vpop.f32.mrf.mxu0
        %v4362 = vadd.f32 %v4193, %v4361
        %v4363 = vpop.f32.mrf.mxu0
        %v4364 = vadd.f32 %v4195, %v4363
        %4365 = vmatmul.bf16.gmra.mxu0 %v1081
        %v4366 = vpop.f32.mrf.mxu0
        %v4367 = vadd.f32 %v4198, %v4366
        %v4368 = vpop.f32.mrf.mxu0
        %v4369 = vadd.f32 %v4200, %v4368
        %4370 = vmatmul.bf16.gmra.mxu0 %v1085
        %v4371 = vpop.f32.mrf.mxu0
        %v4372 = vadd.f32 %v4203, %v4371
        %v4373 = vpop.f32.mrf.mxu0
        %v4374 = vadd.f32 %v4205, %v4373
        %4375 = vmatmul.bf16.gmra.mxu0 %v1089
        %v4376 = vpop.f32.mrf.mxu0
        %v4377 = vadd.f32 %v4208, %v4376
        %v4378 = vpop.f32.mrf.mxu0
        %v4379 = vadd.f32 %v4210, %v4378
        %4380 = vmatmul.bf16.gmra.mxu0 %v1093
        %v4381 = vpop.f32.mrf.mxu0
        %v4382 = vadd.f32 %v4213, %v4381
        %v4383 = vpop.f32.mrf.mxu0
        %v4384 = vadd.f32 %v4215, %v4383
        %4385 = vmatmul.bf16.gmra.mxu0 %v1097
        %v4386 = vpop.f32.mrf.mxu0
        %v4387 = vadd.f32 %v4218, %v4386
        %v4388 = vpop.f32.mrf.mxu0
        %v4389 = vadd.f32 %v4220, %v4388
        %4390 = vmatmul.bf16.gmra.mxu0 %v1101
        %v4391 = vpop.f32.mrf.mxu0
        %v4392 = vadd.f32 %v4223, %v4391
        %v4393 = vpop.f32.mrf.mxu0
        %v4394 = vadd.f32 %v4225, %v4393
        %4395 = vmatmul.bf16.gmra.mxu0 %v1105
        %v4396 = vpop.f32.mrf.mxu0
        %v4397 = vadd.f32 %v4228, %v4396
        %v4398 = vpop.f32.mrf.mxu0
        %v4399 = vadd.f32 %v4230, %v4398
        %4400 = vmatmul.bf16.gmra.mxu0 %v1109
        %v4401 = vpop.f32.mrf.mxu0
        %v4402 = vadd.f32 %v4233, %v4401
        %v4403 = vpop.f32.mrf.mxu0
        %v4404 = vadd.f32 %v4235, %v4403
        %4405 = vmatmul.bf16.gmra.mxu0 %v1113
        %v4406 = vpop.f32.mrf.mxu0
        %v4407 = vadd.f32 %v4238, %v4406
        %v4408 = vpop.f32.mrf.mxu0
        %v4409 = vadd.f32 %v4240, %v4408
        %4410 = vmatmul.bf16.gmra.mxu0 %v1117
        %v4411 = vpop.f32.mrf.mxu0
        %v4412 = vadd.f32 %v4243, %v4411
        %v4413 = vpop.f32.mrf.mxu0
        %v4414 = vadd.f32 %v4245, %v4413
        %4415 = vmatmul.bf16.gmra.mxu0 %v1121
        %v4416 = vpop.f32.mrf.mxu0
        %v4417 = vadd.f32 %v4248, %v4416
        %v4418 = vpop.f32.mrf.mxu0
        %v4419 = vadd.f32 %v4250, %v4418
        %4420 = vmatmul.bf16.gmra.mxu0 %v1125
        %v4421 = vpop.f32.mrf.mxu0
        %v4422 = vadd.f32 %v4253, %v4421
        %v4423 = vpop.f32.mrf.mxu0
        %v4424 = vadd.f32 %v4255, %v4423
        %4425 = vmatmul.bf16.gmra.mxu0 %v1129
        %v4426 = vpop.f32.mrf.mxu0
        %v4427 = vadd.f32 %v4258, %v4426
        %v4428 = vpop.f32.mrf.mxu0
        %v4429 = vadd.f32 %v4260, %v4428
        %4430 = vmatmul.bf16.gmra.mxu0 %v1133
        %v4431 = vpop.f32.mrf.mxu0
        %v4432 = vadd.f32 %v4263, %v4431
        %v4433 = vpop.f32.mrf.mxu0
        %v4434 = vadd.f32 %v4265, %v4433
        %4435 = vmatmul.bf16.gmra.mxu0 %v1137
        %v4436 = vpop.f32.mrf.mxu0
        %v4437 = vadd.f32 %v4268, %v4436
        %v4438 = vpop.f32.mrf.mxu0
        %v4439 = vadd.f32 %v4270, %v4438
        %4440 = vmatmul.bf16.gmra.mxu0 %v1141
        %v4441 = vpop.f32.mrf.mxu0
        %v4442 = vadd.f32 %v4273, %v4441
        %v4443 = vpop.f32.mrf.mxu0
        %v4444 = vadd.f32 %v4275, %v4443
        %4445 = vdwg.mxu0
        %4446 = vmatpush.bf16.msra.mxu0 %v1782
        %4447 = vmatpush.bf16.msra.mxu0 %v1778
        %4448 = vmatpush.bf16.msra.mxu0 %v1774
        %4449 = vmatpush.bf16.msra.mxu0 %v1770
        %4450 = vmatpush.bf16.msra.mxu0 %v1766
        %4451 = vmatpush.bf16.msra.mxu0 %v1762
        %4452 = vmatpush.bf16.msra.mxu0 %v1758
        %4453 = vmatpush.bf16.msra.mxu0 %v1754
        %4454 = vmatmul.bf16.gmra.mxu0 %v1018
        %v4455 = vpop.f32.mrf.mxu0
        %v4456 = vadd.f32 %v4287, %v4455
        %v4457 = vpop.f32.mrf.mxu0
        %v4458 = vadd.f32 %v4289, %v4457
        %4459 = vmatmul.bf16.gmra.mxu0 %v1022
        %v4460 = vpop.f32.mrf.mxu0
        %v4461 = vadd.f32 %v4292, %v4460
        %v4462 = vpop.f32.mrf.mxu0
        %v4463 = vadd.f32 %v4294, %v4462
        %4464 = vmatmul.bf16.gmra.mxu0 %v1026
        %v4465 = vpop.f32.mrf.mxu0
        %v4466 = vadd.f32 %v4297, %v4465
        %v4467 = vpop.f32.mrf.mxu0
        %v4468 = vadd.f32 %v4299, %v4467
        %4469 = vmatmul.bf16.gmra.mxu0 %v1030
        %v4470 = vpop.f32.mrf.mxu0
        %v4471 = vadd.f32 %v4302, %v4470
        %v4472 = vpop.f32.mrf.mxu0
        %v4473 = vadd.f32 %v4304, %v4472
        %4474 = vmatmul.bf16.gmra.mxu0 %v1034
        %v4475 = vpop.f32.mrf.mxu0
        %v4476 = vadd.f32 %v4307, %v4475
        %v4477 = vpop.f32.mrf.mxu0
        %v4478 = vadd.f32 %v4309, %v4477
        %4479 = vmatmul.bf16.gmra.mxu0 %v1038
        %v4480 = vpop.f32.mrf.mxu0
        %v4481 = vadd.f32 %v4312, %v4480
        %v4482 = vpop.f32.mrf.mxu0
        %v4483 = vadd.f32 %v4314, %v4482
        %4484 = vmatmul.bf16.gmra.mxu0 %v1042
        %v4485 = vpop.f32.mrf.mxu0
        %v4486 = vadd.f32 %v4317, %v4485
        %v4487 = vpop.f32.mrf.mxu0
        %v4488 = vadd.f32 %v4319, %v4487
        %4489 = vmatmul.bf16.gmra.mxu0 %v1046
        %v4490 = vpop.f32.mrf.mxu0
        %v4491 = vadd.f32 %v4322, %v4490
        %v4492 = vpop.f32.mrf.mxu0
        %v4493 = vadd.f32 %v4324, %v4492
        %4494 = vmatmul.bf16.gmra.mxu0 %v1050
        %v4495 = vpop.f32.mrf.mxu0
        %v4496 = vadd.f32 %v4327, %v4495
        %v4497 = vpop.f32.mrf.mxu0
        %v4498 = vadd.f32 %v4329, %v4497
        %4499 = vmatmul.bf16.gmra.mxu0 %v1054
        %v4500 = vpop.f32.mrf.mxu0
        %v4501 = vadd.f32 %v4332, %v4500
        %v4502 = vpop.f32.mrf.mxu0
        %v4503 = vadd.f32 %v4334, %v4502
        %4504 = vmatmul.bf16.gmra.mxu0 %v1058
        %v4505 = vpop.f32.mrf.mxu0
        %v4506 = vadd.f32 %v4337, %v4505
        %v4507 = vpop.f32.mrf.mxu0
        %v4508 = vadd.f32 %v4339, %v4507
        %4509 = vmatmul.bf16.gmra.mxu0 %v1062
        %v4510 = vpop.f32.mrf.mxu0
        %v4511 = vadd.f32 %v4342, %v4510
        %v4512 = vpop.f32.mrf.mxu0
        %v4513 = vadd.f32 %v4344, %v4512
        %4514 = vmatmul.bf16.gmra.mxu0 %v1066
        %v4515 = vpop.f32.mrf.mxu0
        %v4516 = vadd.f32 %v4347, %v4515
        %v4517 = vpop.f32.mrf.mxu0
        %v4518 = vadd.f32 %v4349, %v4517
        %4519 = vmatmul.bf16.gmra.mxu0 %v1070
        %v4520 = vpop.f32.mrf.mxu0
        %v4521 = vadd.f32 %v4352, %v4520
        %v4522 = vpop.f32.mrf.mxu0
        %v4523 = vadd.f32 %v4354, %v4522
        %4524 = vmatmul.bf16.gmra.mxu0 %v1074
        %v4525 = vpop.f32.mrf.mxu0
        %v4526 = vadd.f32 %v4357, %v4525
        %v4527 = vpop.f32.mrf.mxu0
        %v4528 = vadd.f32 %v4359, %v4527
        %4529 = vmatmul.bf16.gmra.mxu0 %v1078
        %v4530 = vpop.f32.mrf.mxu0
        %v4531 = vadd.f32 %v4362, %v4530
        %v4532 = vpop.f32.mrf.mxu0
        %v4533 = vadd.f32 %v4364, %v4532
        %4534 = vmatmul.bf16.gmra.mxu0 %v1082
        %v4535 = vpop.f32.mrf.mxu0
        %v4536 = vadd.f32 %v4367, %v4535
        %v4537 = vpop.f32.mrf.mxu0
        %v4538 = vadd.f32 %v4369, %v4537
        %4539 = vmatmul.bf16.gmra.mxu0 %v1086
        %v4540 = vpop.f32.mrf.mxu0
        %v4541 = vadd.f32 %v4372, %v4540
        %v4542 = vpop.f32.mrf.mxu0
        %v4543 = vadd.f32 %v4374, %v4542
        %4544 = vmatmul.bf16.gmra.mxu0 %v1090
        %v4545 = vpop.f32.mrf.mxu0
        %v4546 = vadd.f32 %v4377, %v4545
        %v4547 = vpop.f32.mrf.mxu0
        %v4548 = vadd.f32 %v4379, %v4547
        %4549 = vmatmul.bf16.gmra.mxu0 %v1094
        %v4550 = vpop.f32.mrf.mxu0
        %v4551 = vadd.f32 %v4382, %v4550
        %v4552 = vpop.f32.mrf.mxu0
        %v4553 = vadd.f32 %v4384, %v4552
        %4554 = vmatmul.bf16.gmra.mxu0 %v1098
        %v4555 = vpop.f32.mrf.mxu0
        %v4556 = vadd.f32 %v4387, %v4555
        %v4557 = vpop.f32.mrf.mxu0
        %v4558 = vadd.f32 %v4389, %v4557
        %4559 = vmatmul.bf16.gmra.mxu0 %v1102
        %v4560 = vpop.f32.mrf.mxu0
        %v4561 = vadd.f32 %v4392, %v4560
        %v4562 = vpop.f32.mrf.mxu0
        %v4563 = vadd.f32 %v4394, %v4562
        %4564 = vmatmul.bf16.gmra.mxu0 %v1106
        %v4565 = vpop.f32.mrf.mxu0
        %v4566 = vadd.f32 %v4397, %v4565
        %v4567 = vpop.f32.mrf.mxu0
        %v4568 = vadd.f32 %v4399, %v4567
        %4569 = vmatmul.bf16.gmra.mxu0 %v1110
        %v4570 = vpop.f32.mrf.mxu0
        %v4571 = vadd.f32 %v4402, %v4570
        %v4572 = vpop.f32.mrf.mxu0
        %v4573 = vadd.f32 %v4404, %v4572
        %4574 = vmatmul.bf16.gmra.mxu0 %v1114
        %v4575 = vpop.f32.mrf.mxu0
        %v4576 = vadd.f32 %v4407, %v4575
        %v4577 = vpop.f32.mrf.mxu0
        %v4578 = vadd.f32 %v4409, %v4577
        %4579 = vmatmul.bf16.gmra.mxu0 %v1118
        %v4580 = vpop.f32.mrf.mxu0
        %v4581 = vadd.f32 %v4412, %v4580
        %v4582 = vpop.f32.mrf.mxu0
        %v4583 = vadd.f32 %v4414, %v4582
        %4584 = vmatmul.bf16.gmra.mxu0 %v1122
        %v4585 = vpop.f32.mrf.mxu0
        %v4586 = vadd.f32 %v4417, %v4585
        %v4587 = vpop.f32.mrf.mxu0
        %v4588 = vadd.f32 %v4419, %v4587
        %4589 = vmatmul.bf16.gmra.mxu0 %v1126
        %v4590 = vpop.f32.mrf.mxu0
        %v4591 = vadd.f32 %v4422, %v4590
        %v4592 = vpop.f32.mrf.mxu0
        %v4593 = vadd.f32 %v4424, %v4592
        %4594 = vmatmul.bf16.gmra.mxu0 %v1130
        %v4595 = vpop.f32.mrf.mxu0
        %v4596 = vadd.f32 %v4427, %v4595
        %v4597 = vpop.f32.mrf.mxu0
        %v4598 = vadd.f32 %v4429, %v4597
        %4599 = vmatmul.bf16.gmra.mxu0 %v1134
        %v4600 = vpop.f32.mrf.mxu0
        %v4601 = vadd.f32 %v4432, %v4600
        %v4602 = vpop.f32.mrf.mxu0
        %v4603 = vadd.f32 %v4434, %v4602
        %4604 = vmatmul.bf16.gmra.mxu0 %v1138
        %v4605 = vpop.f32.mrf.mxu0
        %v4606 = vadd.f32 %v4437, %v4605
        %v4607 = vpop.f32.mrf.mxu0
        %v4608 = vadd.f32 %v4439, %v4607
        %4609 = vmatmul.bf16.gmra.mxu0 %v1142
        %v4610 = vpop.f32.mrf.mxu0
        %v4611 = vadd.f32 %v4442, %v4610
        %v4612 = vpop.f32.mrf.mxu0
        %v4613 = vadd.f32 %v4444, %v4612
        %4614 = vdwg.mxu0
        %v4615 = vadd.f32 %v503, %v2428
        %v4616 = vadd.f32 %v504, %v3104
        %v4617 = vadd.f32 %v505, %v3780
        %v4618 = vadd.f32 %v506, %v4456
        %v4619 = vadd.f32 %v507, %v2430
        %v4620 = vadd.f32 %v508, %v3106
        %v4621 = vadd.f32 %v509, %v3782
        %v4622 = vadd.f32 %v510, %v4458
        %v4623 = vadd.f32 %v511, %v2433
        %v4624 = vadd.f32 %v512, %v3109
        %v4625 = vadd.f32 %v513, %v3785
        %v4626 = vadd.f32 %v514, %v4461
        %v4627 = vadd.f32 %v515, %v2435
        %v4628 = vadd.f32 %v516, %v3111
        %v4629 = vadd.f32 %v517, %v3787
        %v4630 = vadd.f32 %v518, %v4463
        %v4631 = vadd.f32 %v519, %v2438
        %v4632 = vadd.f32 %v520, %v3114
        %v4633 = vadd.f32 %v521, %v3790
        %v4634 = vadd.f32 %v522, %v4466
        %v4635 = vadd.f32 %v523, %v2440
        %v4636 = vadd.f32 %v524, %v3116
        %v4637 = vadd.f32 %v525, %v3792
        %v4638 = vadd.f32 %v526, %v4468
        %v4639 = vadd.f32 %v527, %v2443
        %v4640 = vadd.f32 %v528, %v3119
        %v4641 = vadd.f32 %v529, %v3795
        %v4642 = vadd.f32 %v530, %v4471
        %v4643 = vadd.f32 %v531, %v2445
        %v4644 = vadd.f32 %v532, %v3121
        %v4645 = vadd.f32 %v533, %v3797
        %v4646 = vadd.f32 %v534, %v4473
        %v4647 = vadd.f32 %v535, %v2448
        %v4648 = vadd.f32 %v536, %v3124
        %v4649 = vadd.f32 %v537, %v3800
        %v4650 = vadd.f32 %v538, %v4476
        %v4651 = vadd.f32 %v539, %v2450
        %v4652 = vadd.f32 %v540, %v3126
        %v4653 = vadd.f32 %v541, %v3802
        %v4654 = vadd.f32 %v542, %v4478
        %v4655 = vadd.f32 %v543, %v2453
        %v4656 = vadd.f32 %v544, %v3129
        %v4657 = vadd.f32 %v545, %v3805
        %v4658 = vadd.f32 %v546, %v4481
        %v4659 = vadd.f32 %v547, %v2455
        %v4660 = vadd.f32 %v548, %v3131
        %v4661 = vadd.f32 %v549, %v3807
        %v4662 = vadd.f32 %v550, %v4483
        %v4663 = vadd.f32 %v551, %v2458
        %v4664 = vadd.f32 %v552, %v3134
        %v4665 = vadd.f32 %v553, %v3810
        %v4666 = vadd.f32 %v554, %v4486
        %v4667 = vadd.f32 %v555, %v2460
        %v4668 = vadd.f32 %v556, %v3136
        %v4669 = vadd.f32 %v557, %v3812
        %v4670 = vadd.f32 %v558, %v4488
        %v4671 = vadd.f32 %v559, %v2463
        %v4672 = vadd.f32 %v560, %v3139
        %v4673 = vadd.f32 %v561, %v3815
        %v4674 = vadd.f32 %v562, %v4491
        %v4675 = vadd.f32 %v563, %v2465
        %v4676 = vadd.f32 %v564, %v3141
        %v4677 = vadd.f32 %v565, %v3817
        %v4678 = vadd.f32 %v566, %v4493
        %v4679 = vadd.f32 %v567, %v2468
        %v4680 = vadd.f32 %v568, %v3144
        %v4681 = vadd.f32 %v569, %v3820
        %v4682 = vadd.f32 %v570, %v4496
        %v4683 = vadd.f32 %v571, %v2470
        %v4684 = vadd.f32 %v572, %v3146
        %v4685 = vadd.f32 %v573, %v3822
        %v4686 = vadd.f32 %v574, %v4498
        %v4687 = vadd.f32 %v575, %v2473
        %v4688 = vadd.f32 %v576, %v3149
        %v4689 = vadd.f32 %v577, %v3825
        %v4690 = vadd.f32 %v578, %v4501
        %v4691 = vadd.f32 %v579, %v2475
        %v4692 = vadd.f32 %v580, %v3151
        %v4693 = vadd.f32 %v581, %v3827
        %v4694 = vadd.f32 %v582, %v4503
        %v4695 = vadd.f32 %v583, %v2478
        %v4696 = vadd.f32 %v584, %v3154
        %v4697 = vadd.f32 %v585, %v3830
        %v4698 = vadd.f32 %v586, %v4506
        %v4699 = vadd.f32 %v587, %v2480
        %v4700 = vadd.f32 %v588, %v3156
        %v4701 = vadd.f32 %v589, %v3832
        %v4702 = vadd.f32 %v590, %v4508
        %v4703 = vadd.f32 %v591, %v2483
        %v4704 = vadd.f32 %v592, %v3159
        %v4705 = vadd.f32 %v593, %v3835
        %v4706 = vadd.f32 %v594, %v4511
        %v4707 = vadd.f32 %v595, %v2485
        %v4708 = vadd.f32 %v596, %v3161
        %v4709 = vadd.f32 %v597, %v3837
        %v4710 = vadd.f32 %v598, %v4513
        %v4711 = vadd.f32 %v599, %v2488
        %v4712 = vadd.f32 %v600, %v3164
        %v4713 = vadd.f32 %v601, %v3840
        %v4714 = vadd.f32 %v602, %v4516
        %v4715 = vadd.f32 %v603, %v2490
        %v4716 = vadd.f32 %v604, %v3166
        %v4717 = vadd.f32 %v605, %v3842
        %v4718 = vadd.f32 %v606, %v4518
        %v4719 = vadd.f32 %v607, %v2493
        %v4720 = vadd.f32 %v608, %v3169
        %v4721 = vadd.f32 %v609, %v3845
        %v4722 = vadd.f32 %v610, %v4521
        %v4723 = vadd.f32 %v611, %v2495
        %v4724 = vadd.f32 %v612, %v3171
        %v4725 = vadd.f32 %v613, %v3847
        %v4726 = vadd.f32 %v614, %v4523
        %v4727 = vadd.f32 %v615, %v2498
        %v4728 = vadd.f32 %v616, %v3174
        %v4729 = vadd.f32 %v617, %v3850
        %v4730 = vadd.f32 %v618, %v4526
        %v4731 = vadd.f32 %v619, %v2500
        %v4732 = vadd.f32 %v620, %v3176
        %v4733 = vadd.f32 %v621, %v3852
        %v4734 = vadd.f32 %v622, %v4528
        %v4735 = vadd.f32 %v623, %v2503
        %v4736 = vadd.f32 %v624, %v3179
        %v4737 = vadd.f32 %v625, %v3855
        %v4738 = vadd.f32 %v626, %v4531
        %v4739 = vadd.f32 %v627, %v2505
        %v4740 = vadd.f32 %v628, %v3181
        %v4741 = vadd.f32 %v629, %v3857
        %v4742 = vadd.f32 %v630, %v4533
        %v4743 = vadd.f32 %v631, %v2508
        %v4744 = vadd.f32 %v632, %v3184
        %v4745 = vadd.f32 %v633, %v3860
        %v4746 = vadd.f32 %v634, %v4536
        %v4747 = vadd.f32 %v635, %v2510
        %v4748 = vadd.f32 %v636, %v3186
        %v4749 = vadd.f32 %v637, %v3862
        %v4750 = vadd.f32 %v638, %v4538
        %v4751 = vadd.f32 %v639, %v2513
        %v4752 = vadd.f32 %v640, %v3189
        %v4753 = vadd.f32 %v641, %v3865
        %v4754 = vadd.f32 %v642, %v4541
        %v4755 = vadd.f32 %v643, %v2515
        %v4756 = vadd.f32 %v644, %v3191
        %v4757 = vadd.f32 %v645, %v3867
        %v4758 = vadd.f32 %v646, %v4543
        %v4759 = vadd.f32 %v647, %v2518
        %v4760 = vadd.f32 %v648, %v3194
        %v4761 = vadd.f32 %v649, %v3870
        %v4762 = vadd.f32 %v650, %v4546
        %v4763 = vadd.f32 %v651, %v2520
        %v4764 = vadd.f32 %v652, %v3196
        %v4765 = vadd.f32 %v653, %v3872
        %v4766 = vadd.f32 %v654, %v4548
        %v4767 = vadd.f32 %v655, %v2523
        %v4768 = vadd.f32 %v656, %v3199
        %v4769 = vadd.f32 %v657, %v3875
        %v4770 = vadd.f32 %v658, %v4551
        %v4771 = vadd.f32 %v659, %v2525
        %v4772 = vadd.f32 %v660, %v3201
        %v4773 = vadd.f32 %v661, %v3877
        %v4774 = vadd.f32 %v662, %v4553
        %v4775 = vadd.f32 %v663, %v2528
        %v4776 = vadd.f32 %v664, %v3204
        %v4777 = vadd.f32 %v665, %v3880
        %v4778 = vadd.f32 %v666, %v4556
        %v4779 = vadd.f32 %v667, %v2530
        %v4780 = vadd.f32 %v668, %v3206
        %v4781 = vadd.f32 %v669, %v3882
        %v4782 = vadd.f32 %v670, %v4558
        %v4783 = vadd.f32 %v671, %v2533
        %v4784 = vadd.f32 %v672, %v3209
        %v4785 = vadd.f32 %v673, %v3885
        %v4786 = vadd.f32 %v674, %v4561
        %v4787 = vadd.f32 %v675, %v2535
        %v4788 = vadd.f32 %v676, %v3211
        %v4789 = vadd.f32 %v677, %v3887
        %v4790 = vadd.f32 %v678, %v4563
        %v4791 = vadd.f32 %v679, %v2538
        %v4792 = vadd.f32 %v680, %v3214
        %v4793 = vadd.f32 %v681, %v3890
        %v4794 = vadd.f32 %v682, %v4566
        %v4795 = vadd.f32 %v683, %v2540
        %v4796 = vadd.f32 %v684, %v3216
        %v4797 = vadd.f32 %v685, %v3892
        %v4798 = vadd.f32 %v686, %v4568
        %v4799 = vadd.f32 %v687, %v2543
        %v4800 = vadd.f32 %v688, %v3219
        %v4801 = vadd.f32 %v689, %v3895
        %v4802 = vadd.f32 %v690, %v4571
        %v4803 = vadd.f32 %v691, %v2545
        %v4804 = vadd.f32 %v692, %v3221
        %v4805 = vadd.f32 %v693, %v3897
        %v4806 = vadd.f32 %v694, %v4573
        %v4807 = vadd.f32 %v695, %v2548
        %v4808 = vadd.f32 %v696, %v3224
        %v4809 = vadd.f32 %v697, %v3900
        %v4810 = vadd.f32 %v698, %v4576
        %v4811 = vadd.f32 %v699, %v2550
        %v4812 = vadd.f32 %v700, %v3226
        %v4813 = vadd.f32 %v701, %v3902
        %v4814 = vadd.f32 %v702, %v4578
        %v4815 = vadd.f32 %v703, %v2553
        %v4816 = vadd.f32 %v704, %v3229
        %v4817 = vadd.f32 %v705, %v3905
        %v4818 = vadd.f32 %v706, %v4581
        %v4819 = vadd.f32 %v707, %v2555
        %v4820 = vadd.f32 %v708, %v3231
        %v4821 = vadd.f32 %v709, %v3907
        %v4822 = vadd.f32 %v710, %v4583
        %v4823 = vadd.f32 %v711, %v2558
        %v4824 = vadd.f32 %v712, %v3234
        %v4825 = vadd.f32 %v713, %v3910
        %v4826 = vadd.f32 %v714, %v4586
        %v4827 = vadd.f32 %v715, %v2560
        %v4828 = vadd.f32 %v716, %v3236
        %v4829 = vadd.f32 %v717, %v3912
        %v4830 = vadd.f32 %v718, %v4588
        %v4831 = vadd.f32 %v719, %v2563
        %v4832 = vadd.f32 %v720, %v3239
        %v4833 = vadd.f32 %v721, %v3915
        %v4834 = vadd.f32 %v722, %v4591
        %v4835 = vadd.f32 %v723, %v2565
        %v4836 = vadd.f32 %v724, %v3241
        %v4837 = vadd.f32 %v725, %v3917
        %v4838 = vadd.f32 %v726, %v4593
        %v4839 = vadd.f32 %v727, %v2568
        %v4840 = vadd.f32 %v728, %v3244
        %v4841 = vadd.f32 %v729, %v3920
        %v4842 = vadd.f32 %v730, %v4596
        %v4843 = vadd.f32 %v731, %v2570
        %v4844 = vadd.f32 %v732, %v3246
        %v4845 = vadd.f32 %v733, %v3922
        %v4846 = vadd.f32 %v734, %v4598
        %v4847 = vadd.f32 %v735, %v2573
        %v4848 = vadd.f32 %v736, %v3249
        %v4849 = vadd.f32 %v737, %v3925
        %v4850 = vadd.f32 %v738, %v4601
        %v4851 = vadd.f32 %v739, %v2575
        %v4852 = vadd.f32 %v740, %v3251
        %v4853 = vadd.f32 %v741, %v3927
        %v4854 = vadd.f32 %v742, %v4603
        %v4855 = vadd.f32 %v743, %v2578
        %v4856 = vadd.f32 %v744, %v3254
        %v4857 = vadd.f32 %v745, %v3930
        %v4858 = vadd.f32 %v746, %v4606
        %v4859 = vadd.f32 %v747, %v2580
        %v4860 = vadd.f32 %v748, %v3256
        %v4861 = vadd.f32 %v749, %v3932
        %v4862 = vadd.f32 %v750, %v4608
        %v4863 = vadd.f32 %v751, %v2583
        %v4864 = vadd.f32 %v752, %v3259
        %v4865 = vadd.f32 %v753, %v3935
        %v4866 = vadd.f32 %v754, %v4611
        %v4867 = vadd.f32 %v755, %v2585
        %v4868 = vadd.f32 %v756, %v3261
        %v4869 = vadd.f32 %v757, %v3937
        %v4870 = vadd.f32 %v758, %v4613
        %4871 = vst [vmem:[#allocation2] sm:$0xff] %v4615
        %4872 = vst [vmem:[#allocation2 + $0x8] sm:$0xff] %v4616
        %4873 = vst [vmem:[#allocation2 + $0x10] sm:$0xff] %v4617
        %4874 = vst [vmem:[#allocation2 + $0x18] sm:$0xff] %v4618
        %4875 = vst [vmem:[#allocation2 + $0x20] sm:$0xff] %v4619
        %4876 = vst [vmem:[#allocation2 + $0x28] sm:$0xff] %v4620
        %4877 = vst [vmem:[#allocation2 + $0x30] sm:$0xff] %v4621
        %4878 = vst [vmem:[#allocation2 + $0x38] sm:$0xff] %v4622
        %4879 = vst [vmem:[#allocation2 + $0x40] sm:$0xff] %v4623
        %4880 = vst [vmem:[#allocation2 + $0x48] sm:$0xff] %v4624
        %4881 = vst [vmem:[#allocation2 + $0x50] sm:$0xff] %v4625
        %4882 = vst [vmem:[#allocation2 + $0x58] sm:$0xff] %v4626
        %4883 = vst [vmem:[#allocation2 + $0x60] sm:$0xff] %v4627
        %4884 = vst [vmem:[#allocation2 + $0x68] sm:$0xff] %v4628
        %4885 = vst [vmem:[#allocation2 + $0x70] sm:$0xff] %v4629
        %4886 = vst [vmem:[#allocation2 + $0x78] sm:$0xff] %v4630
        %4887 = vst [vmem:[#allocation2 + $0x80] sm:$0xff] %v4631
        %4888 = vst [vmem:[#allocation2 + $0x88] sm:$0xff] %v4632
        %4889 = vst [vmem:[#allocation2 + $0x90] sm:$0xff] %v4633
        %4890 = vst [vmem:[#allocation2 + $0x98] sm:$0xff] %v4634
        %4891 = vst [vmem:[#allocation2 + $0xa0] sm:$0xff] %v4635
        %4892 = vst [vmem:[#allocation2 + $0xa8] sm:$0xff] %v4636
        %4893 = vst [vmem:[#allocation2 + $0xb0] sm:$0xff] %v4637
        %4894 = vst [vmem:[#allocation2 + $0xb8] sm:$0xff] %v4638
        %4895 = vst [vmem:[#allocation2 + $0xc0] sm:$0xff] %v4639
        %4896 = vst [vmem:[#allocation2 + $0xc8] sm:$0xff] %v4640
        %4897 = vst [vmem:[#allocation2 + $0xd0] sm:$0xff] %v4641
        %4898 = vst [vmem:[#allocation2 + $0xd8] sm:$0xff] %v4642
        %4899 = vst [vmem:[#allocation2 + $0xe0] sm:$0xff] %v4643
        %4900 = vst [vmem:[#allocation2 + $0xe8] sm:$0xff] %v4644
        %4901 = vst [vmem:[#allocation2 + $0xf0] sm:$0xff] %v4645
        %4902 = vst [vmem:[#allocation2 + $0xf8] sm:$0xff] %v4646
        %4903 = vst [vmem:[#allocation2 + $0x100] sm:$0xff] %v4647
        %4904 = vst [vmem:[#allocation2 + $0x108] sm:$0xff] %v4648
        %4905 = vst [vmem:[#allocation2 + $0x110] sm:$0xff] %v4649
        %4906 = vst [vmem:[#allocation2 + $0x118] sm:$0xff] %v4650
        %4907 = vst [vmem:[#allocation2 + $0x120] sm:$0xff] %v4651
        %4908 = vst [vmem:[#allocation2 + $0x128] sm:$0xff] %v4652
        %4909 = vst [vmem:[#allocation2 + $0x130] sm:$0xff] %v4653
        %4910 = vst [vmem:[#allocation2 + $0x138] sm:$0xff] %v4654
        %4911 = vst [vmem:[#allocation2 + $0x140] sm:$0xff] %v4655
        %4912 = vst [vmem:[#allocation2 + $0x148] sm:$0xff] %v4656
        %4913 = vst [vmem:[#allocation2 + $0x150] sm:$0xff] %v4657
        %4914 = vst [vmem:[#allocation2 + $0x158] sm:$0xff] %v4658
        %4915 = vst [vmem:[#allocation2 + $0x160] sm:$0xff] %v4659
        %4916 = vst [vmem:[#allocation2 + $0x168] sm:$0xff] %v4660
        %4917 = vst [vmem:[#allocation2 + $0x170] sm:$0xff] %v4661
        %4918 = vst [vmem:[#allocation2 + $0x178] sm:$0xff] %v4662
        %4919 = vst [vmem:[#allocation2 + $0x180] sm:$0xff] %v4663
        %4920 = vst [vmem:[#allocation2 + $0x188] sm:$0xff] %v4664
        %4921 = vst [vmem:[#allocation2 + $0x190] sm:$0xff] %v4665
        %4922 = vst [vmem:[#allocation2 + $0x198] sm:$0xff] %v4666
        %4923 = vst [vmem:[#allocation2 + $0x1a0] sm:$0xff] %v4667
        %4924 = vst [vmem:[#allocation2 + $0x1a8] sm:$0xff] %v4668
        %4925 = vst [vmem:[#allocation2 + $0x1b0] sm:$0xff] %v4669
        %4926 = vst [vmem:[#allocation2 + $0x1b8] sm:$0xff] %v4670
        %4927 = vst [vmem:[#allocation2 + $0x1c0] sm:$0xff] %v4671
        %4928 = vst [vmem:[#allocation2 + $0x1c8] sm:$0xff] %v4672
        %4929 = vst [vmem:[#allocation2 + $0x1d0] sm:$0xff] %v4673
        %4930 = vst [vmem:[#allocation2 + $0x1d8] sm:$0xff] %v4674
        %4931 = vst [vmem:[#allocation2 + $0x1e0] sm:$0xff] %v4675
        %4932 = vst [vmem:[#allocation2 + $0x1e8] sm:$0xff] %v4676
        %4933 = vst [vmem:[#allocation2 + $0x1f0] sm:$0xff] %v4677
        %4934 = vst [vmem:[#allocation2 + $0x1f8] sm:$0xff] %v4678
        %4935 = vst [vmem:[#allocation2 + $0x200] sm:$0xff] %v4679
        %4936 = vst [vmem:[#allocation2 + $0x208] sm:$0xff] %v4680
        %4937 = vst [vmem:[#allocation2 + $0x210] sm:$0xff] %v4681
        %4938 = vst [vmem:[#allocation2 + $0x218] sm:$0xff] %v4682
        %4939 = vst [vmem:[#allocation2 + $0x220] sm:$0xff] %v4683
        %4940 = vst [vmem:[#allocation2 + $0x228] sm:$0xff] %v4684
        %4941 = vst [vmem:[#allocation2 + $0x230] sm:$0xff] %v4685
        %4942 = vst [vmem:[#allocation2 + $0x238] sm:$0xff] %v4686
        %4943 = vst [vmem:[#allocation2 + $0x240] sm:$0xff] %v4687
        %4944 = vst [vmem:[#allocation2 + $0x248] sm:$0xff] %v4688
        %4945 = vst [vmem:[#allocation2 + $0x250] sm:$0xff] %v4689
        %4946 = vst [vmem:[#allocation2 + $0x258] sm:$0xff] %v4690
        %4947 = vst [vmem:[#allocation2 + $0x260] sm:$0xff] %v4691
        %4948 = vst [vmem:[#allocation2 + $0x268] sm:$0xff] %v4692
        %4949 = vst [vmem:[#allocation2 + $0x270] sm:$0xff] %v4693
        %4950 = vst [vmem:[#allocation2 + $0x278] sm:$0xff] %v4694
        %4951 = vst [vmem:[#allocation2 + $0x280] sm:$0xff] %v4695
        %4952 = vst [vmem:[#allocation2 + $0x288] sm:$0xff] %v4696
        %4953 = vst [vmem:[#allocation2 + $0x290] sm:$0xff] %v4697
        %4954 = vst [vmem:[#allocation2 + $0x298] sm:$0xff] %v4698
        %4955 = vst [vmem:[#allocation2 + $0x2a0] sm:$0xff] %v4699
        %4956 = vst [vmem:[#allocation2 + $0x2a8] sm:$0xff] %v4700
        %4957 = vst [vmem:[#allocation2 + $0x2b0] sm:$0xff] %v4701
        %4958 = vst [vmem:[#allocation2 + $0x2b8] sm:$0xff] %v4702
        %4959 = vst [vmem:[#allocation2 + $0x2c0] sm:$0xff] %v4703
        %4960 = vst [vmem:[#allocation2 + $0x2c8] sm:$0xff] %v4704
        %4961 = vst [vmem:[#allocation2 + $0x2d0] sm:$0xff] %v4705
        %4962 = vst [vmem:[#allocation2 + $0x2d8] sm:$0xff] %v4706
        %4963 = vst [vmem:[#allocation2 + $0x2e0] sm:$0xff] %v4707
        %4964 = vst [vmem:[#allocation2 + $0x2e8] sm:$0xff] %v4708
        %4965 = vst [vmem:[#allocation2 + $0x2f0] sm:$0xff] %v4709
        %4966 = vst [vmem:[#allocation2 + $0x2f8] sm:$0xff] %v4710
        %4967 = vst [vmem:[#allocation2 + $0x300] sm:$0xff] %v4711
        %4968 = vst [vmem:[#allocation2 + $0x308] sm:$0xff] %v4712
        %4969 = vst [vmem:[#allocation2 + $0x310] sm:$0xff] %v4713
        %4970 = vst [vmem:[#allocation2 + $0x318] sm:$0xff] %v4714
        %4971 = vst [vmem:[#allocation2 + $0x320] sm:$0xff] %v4715
        %4972 = vst [vmem:[#allocation2 + $0x328] sm:$0xff] %v4716
        %4973 = vst [vmem:[#allocation2 + $0x330] sm:$0xff] %v4717
        %4974 = vst [vmem:[#allocation2 + $0x338] sm:$0xff] %v4718
        %4975 = vst [vmem:[#allocation2 + $0x340] sm:$0xff] %v4719
        %4976 = vst [vmem:[#allocation2 + $0x348] sm:$0xff] %v4720
        %4977 = vst [vmem:[#allocation2 + $0x350] sm:$0xff] %v4721
        %4978 = vst [vmem:[#allocation2 + $0x358] sm:$0xff] %v4722
        %4979 = vst [vmem:[#allocation2 + $0x360] sm:$0xff] %v4723
        %4980 = vst [vmem:[#allocation2 + $0x368] sm:$0xff] %v4724
        %4981 = vst [vmem:[#allocation2 + $0x370] sm:$0xff] %v4725
        %4982 = vst [vmem:[#allocation2 + $0x378] sm:$0xff] %v4726
        %4983 = vst [vmem:[#allocation2 + $0x380] sm:$0xff] %v4727
        %4984 = vst [vmem:[#allocation2 + $0x388] sm:$0xff] %v4728
        %4985 = vst [vmem:[#allocation2 + $0x390] sm:$0xff] %v4729
        %4986 = vst [vmem:[#allocation2 + $0x398] sm:$0xff] %v4730
        %4987 = vst [vmem:[#allocation2 + $0x3a0] sm:$0xff] %v4731
        %4988 = vst [vmem:[#allocation2 + $0x3a8] sm:$0xff] %v4732
        %4989 = vst [vmem:[#allocation2 + $0x3b0] sm:$0xff] %v4733
        %4990 = vst [vmem:[#allocation2 + $0x3b8] sm:$0xff] %v4734
        %4991 = vst [vmem:[#allocation2 + $0x3c0] sm:$0xff] %v4735
        %4992 = vst [vmem:[#allocation2 + $0x3c8] sm:$0xff] %v4736
        %4993 = vst [vmem:[#allocation2 + $0x3d0] sm:$0xff] %v4737
        %4994 = vst [vmem:[#allocation2 + $0x3d8] sm:$0xff] %v4738
        %4995 = vst [vmem:[#allocation2 + $0x3e0] sm:$0xff] %v4739
        %4996 = vst [vmem:[#allocation2 + $0x3e8] sm:$0xff] %v4740
        %4997 = vst [vmem:[#allocation2 + $0x3f0] sm:$0xff] %v4741
        %4998 = vst [vmem:[#allocation2 + $0x3f8] sm:$0xff] %v4742
        %4999 = vst [vmem:[#allocation2 + $0x400] sm:$0xff] %v4743
        %5000 = vst [vmem:[#allocation2 + $0x408] sm:$0xff] %v4744
        %5001 = vst [vmem:[#allocation2 + $0x410] sm:$0xff] %v4745
        %5002 = vst [vmem:[#allocation2 + $0x418] sm:$0xff] %v4746
        %5003 = vst [vmem:[#allocation2 + $0x420] sm:$0xff] %v4747
        %5004 = vst [vmem:[#allocation2 + $0x428] sm:$0xff] %v4748
        %5005 = vst [vmem:[#allocation2 + $0x430] sm:$0xff] %v4749
        %5006 = vst [vmem:[#allocation2 + $0x438] sm:$0xff] %v4750
        %5007 = vst [vmem:[#allocation2 + $0x440] sm:$0xff] %v4751
        %5008 = vst [vmem:[#allocation2 + $0x448] sm:$0xff] %v4752
        %5009 = vst [vmem:[#allocation2 + $0x450] sm:$0xff] %v4753
        %5010 = vst [vmem:[#allocation2 + $0x458] sm:$0xff] %v4754
        %5011 = vst [vmem:[#allocation2 + $0x460] sm:$0xff] %v4755
        %5012 = vst [vmem:[#allocation2 + $0x468] sm:$0xff] %v4756
        %5013 = vst [vmem:[#allocation2 + $0x470] sm:$0xff] %v4757
        %5014 = vst [vmem:[#allocation2 + $0x478] sm:$0xff] %v4758
        %5015 = vst [vmem:[#allocation2 + $0x480] sm:$0xff] %v4759
        %5016 = vst [vmem:[#allocation2 + $0x488] sm:$0xff] %v4760
        %5017 = vst [vmem:[#allocation2 + $0x490] sm:$0xff] %v4761
        %5018 = vst [vmem:[#allocation2 + $0x498] sm:$0xff] %v4762
        %5019 = vst [vmem:[#allocation2 + $0x4a0] sm:$0xff] %v4763
        %5020 = vst [vmem:[#allocation2 + $0x4a8] sm:$0xff] %v4764
        %5021 = vst [vmem:[#allocation2 + $0x4b0] sm:$0xff] %v4765
        %5022 = vst [vmem:[#allocation2 + $0x4b8] sm:$0xff] %v4766
        %5023 = vst [vmem:[#allocation2 + $0x4c0] sm:$0xff] %v4767
        %5024 = vst [vmem:[#allocation2 + $0x4c8] sm:$0xff] %v4768
        %5025 = vst [vmem:[#allocation2 + $0x4d0] sm:$0xff] %v4769
        %5026 = vst [vmem:[#allocation2 + $0x4d8] sm:$0xff] %v4770
        %5027 = vst [vmem:[#allocation2 + $0x4e0] sm:$0xff] %v4771
        %5028 = vst [vmem:[#allocation2 + $0x4e8] sm:$0xff] %v4772
        %5029 = vst [vmem:[#allocation2 + $0x4f0] sm:$0xff] %v4773
        %5030 = vst [vmem:[#allocation2 + $0x4f8] sm:$0xff] %v4774
        %5031 = vst [vmem:[#allocation2 + $0x500] sm:$0xff] %v4775
        %5032 = vst [vmem:[#allocation2 + $0x508] sm:$0xff] %v4776
        %5033 = vst [vmem:[#allocation2 + $0x510] sm:$0xff] %v4777
        %5034 = vst [vmem:[#allocation2 + $0x518] sm:$0xff] %v4778
        %5035 = vst [vmem:[#allocation2 + $0x520] sm:$0xff] %v4779
        %5036 = vst [vmem:[#allocation2 + $0x528] sm:$0xff] %v4780
        %5037 = vst [vmem:[#allocation2 + $0x530] sm:$0xff] %v4781
        %5038 = vst [vmem:[#allocation2 + $0x538] sm:$0xff] %v4782
        %5039 = vst [vmem:[#allocation2 + $0x540] sm:$0xff] %v4783
        %5040 = vst [vmem:[#allocation2 + $0x548] sm:$0xff] %v4784
        %5041 = vst [vmem:[#allocation2 + $0x550] sm:$0xff] %v4785
        %5042 = vst [vmem:[#allocation2 + $0x558] sm:$0xff] %v4786
        %5043 = vst [vmem:[#allocation2 + $0x560] sm:$0xff] %v4787
        %5044 = vst [vmem:[#allocation2 + $0x568] sm:$0xff] %v4788
        %5045 = vst [vmem:[#allocation2 + $0x570] sm:$0xff] %v4789
        %5046 = vst [vmem:[#allocation2 + $0x578] sm:$0xff] %v4790
        %5047 = vst [vmem:[#allocation2 + $0x580] sm:$0xff] %v4791
        %5048 = vst [vmem:[#allocation2 + $0x588] sm:$0xff] %v4792
        %5049 = vst [vmem:[#allocation2 + $0x590] sm:$0xff] %v4793
        %5050 = vst [vmem:[#allocation2 + $0x598] sm:$0xff] %v4794
        %5051 = vst [vmem:[#allocation2 + $0x5a0] sm:$0xff] %v4795
        %5052 = vst [vmem:[#allocation2 + $0x5a8] sm:$0xff] %v4796
        %5053 = vst [vmem:[#allocation2 + $0x5b0] sm:$0xff] %v4797
        %5054 = vst [vmem:[#allocation2 + $0x5b8] sm:$0xff] %v4798
        %5055 = vst [vmem:[#allocation2 + $0x5c0] sm:$0xff] %v4799
        %5056 = vst [vmem:[#allocation2 + $0x5c8] sm:$0xff] %v4800
        %5057 = vst [vmem:[#allocation2 + $0x5d0] sm:$0xff] %v4801
        %5058 = vst [vmem:[#allocation2 + $0x5d8] sm:$0xff] %v4802
        %5059 = vst [vmem:[#allocation2 + $0x5e0] sm:$0xff] %v4803
        %5060 = vst [vmem:[#allocation2 + $0x5e8] sm:$0xff] %v4804
        %5061 = vst [vmem:[#allocation2 + $0x5f0] sm:$0xff] %v4805
        %5062 = vst [vmem:[#allocation2 + $0x5f8] sm:$0xff] %v4806
        %5063 = vst [vmem:[#allocation2 + $0x600] sm:$0xff] %v4807
        %5064 = vst [vmem:[#allocation2 + $0x608] sm:$0xff] %v4808
        %5065 = vst [vmem:[#allocation2 + $0x610] sm:$0xff] %v4809
        %5066 = vst [vmem:[#allocation2 + $0x618] sm:$0xff] %v4810
        %5067 = vst [vmem:[#allocation2 + $0x620] sm:$0xff] %v4811
        %5068 = vst [vmem:[#allocation2 + $0x628] sm:$0xff] %v4812
        %5069 = vst [vmem:[#allocation2 + $0x630] sm:$0xff] %v4813
        %5070 = vst [vmem:[#allocation2 + $0x638] sm:$0xff] %v4814
        %5071 = vst [vmem:[#allocation2 + $0x640] sm:$0xff] %v4815
        %5072 = vst [vmem:[#allocation2 + $0x648] sm:$0xff] %v4816
        %5073 = vst [vmem:[#allocation2 + $0x650] sm:$0xff] %v4817
        %5074 = vst [vmem:[#allocation2 + $0x658] sm:$0xff] %v4818
        %5075 = vst [vmem:[#allocation2 + $0x660] sm:$0xff] %v4819
        %5076 = vst [vmem:[#allocation2 + $0x668] sm:$0xff] %v4820
        %5077 = vst [vmem:[#allocation2 + $0x670] sm:$0xff] %v4821
        %5078 = vst [vmem:[#allocation2 + $0x678] sm:$0xff] %v4822
        %5079 = vst [vmem:[#allocation2 + $0x680] sm:$0xff] %v4823
        %5080 = vst [vmem:[#allocation2 + $0x688] sm:$0xff] %v4824
        %5081 = vst [vmem:[#allocation2 + $0x690] sm:$0xff] %v4825
        %5082 = vst [vmem:[#allocation2 + $0x698] sm:$0xff] %v4826
        %5083 = vst [vmem:[#allocation2 + $0x6a0] sm:$0xff] %v4827
        %5084 = vst [vmem:[#allocation2 + $0x6a8] sm:$0xff] %v4828
        %5085 = vst [vmem:[#allocation2 + $0x6b0] sm:$0xff] %v4829
        %5086 = vst [vmem:[#allocation2 + $0x6b8] sm:$0xff] %v4830
        %5087 = vst [vmem:[#allocation2 + $0x6c0] sm:$0xff] %v4831
        %5088 = vst [vmem:[#allocation2 + $0x6c8] sm:$0xff] %v4832
        %5089 = vst [vmem:[#allocation2 + $0x6d0] sm:$0xff] %v4833
        %5090 = vst [vmem:[#allocation2 + $0x6d8] sm:$0xff] %v4834
        %5091 = vst [vmem:[#allocation2 + $0x6e0] sm:$0xff] %v4835
        %5092 = vst [vmem:[#allocation2 + $0x6e8] sm:$0xff] %v4836
        %5093 = vst [vmem:[#allocation2 + $0x6f0] sm:$0xff] %v4837
        %5094 = vst [vmem:[#allocation2 + $0x6f8] sm:$0xff] %v4838
        %5095 = vst [vmem:[#allocation2 + $0x700] sm:$0xff] %v4839
        %5096 = vst [vmem:[#allocation2 + $0x708] sm:$0xff] %v4840
        %5097 = vst [vmem:[#allocation2 + $0x710] sm:$0xff] %v4841
        %5098 = vst [vmem:[#allocation2 + $0x718] sm:$0xff] %v4842
        %5099 = vst [vmem:[#allocation2 + $0x720] sm:$0xff] %v4843
        %5100 = vst [vmem:[#allocation2 + $0x728] sm:$0xff] %v4844
        %5101 = vst [vmem:[#allocation2 + $0x730] sm:$0xff] %v4845
        %5102 = vst [vmem:[#allocation2 + $0x738] sm:$0xff] %v4846
        %5103 = vst [vmem:[#allocation2 + $0x740] sm:$0xff] %v4847
        %5104 = vst [vmem:[#allocation2 + $0x748] sm:$0xff] %v4848
        %5105 = vst [vmem:[#allocation2 + $0x750] sm:$0xff] %v4849
        %5106 = vst [vmem:[#allocation2 + $0x758] sm:$0xff] %v4850
        %5107 = vst [vmem:[#allocation2 + $0x760] sm:$0xff] %v4851
        %5108 = vst [vmem:[#allocation2 + $0x768] sm:$0xff] %v4852
        %5109 = vst [vmem:[#allocation2 + $0x770] sm:$0xff] %v4853
        %5110 = vst [vmem:[#allocation2 + $0x778] sm:$0xff] %v4854
        %5111 = vst [vmem:[#allocation2 + $0x780] sm:$0xff] %v4855
        %5112 = vst [vmem:[#allocation2 + $0x788] sm:$0xff] %v4856
        %5113 = vst [vmem:[#allocation2 + $0x790] sm:$0xff] %v4857
        %5114 = vst [vmem:[#allocation2 + $0x798] sm:$0xff] %v4858
        %5115 = vst [vmem:[#allocation2 + $0x7a0] sm:$0xff] %v4859
        %5116 = vst [vmem:[#allocation2 + $0x7a8] sm:$0xff] %v4860
        %5117 = vst [vmem:[#allocation2 + $0x7b0] sm:$0xff] %v4861
        %5118 = vst [vmem:[#allocation2 + $0x7b8] sm:$0xff] %v4862
        %5119 = vst [vmem:[#allocation2 + $0x7c0] sm:$0xff] %v4863
        %5120 = vst [vmem:[#allocation2 + $0x7c8] sm:$0xff] %v4864
        %5121 = vst [vmem:[#allocation2 + $0x7d0] sm:$0xff] %v4865
        %5122 = vst [vmem:[#allocation2 + $0x7d8] sm:$0xff] %v4866
        %5123 = vst [vmem:[#allocation2 + $0x7e0] sm:$0xff] %v4867
        %5124 = vst [vmem:[#allocation2 + $0x7e8] sm:$0xff] %v4868
        %5125 = vst [vmem:[#allocation2 + $0x7f0] sm:$0xff] %v4869
        %5126 = vst [vmem:[#allocation2 + $0x7f8] sm:$0xff] %v4870
        %p5127 = scmp.eq.s32.totalorder %s29, 1
        // Predicated region
        $region41: #{tpu_custom_call.1} parent=27 // pred_check
          %p5128 = pneg %p5127
        $region42: #{tpu_custom_call.1} parent=27 // pred_check_branch
          %5130 = sbr.rel (%p5128) target = $region44
        $region43: #{tpu_custom_call.1} parent=27 // pred_region
          %v5131 = vld [vmem:[#allocation2] sm:$0xff]
          %v5132 = vld [vmem:[#allocation2 + $0x8] sm:$0xff]
          %v5133 = vld [vmem:[#allocation2 + $0x10] sm:$0xff]
          %v5134 = vld [vmem:[#allocation2 + $0x18] sm:$0xff]
          %v5135 = vld [vmem:[#allocation2 + $0x20] sm:$0xff]
          %v5136 = vld [vmem:[#allocation2 + $0x28] sm:$0xff]
          %v5137 = vld [vmem:[#allocation2 + $0x30] sm:$0xff]
          %v5138 = vld [vmem:[#allocation2 + $0x38] sm:$0xff]
          %v5139 = vld [vmem:[#allocation2 + $0x40] sm:$0xff]
          %v5140 = vld [vmem:[#allocation2 + $0x48] sm:$0xff]
          %v5141 = vld [vmem:[#allocation2 + $0x50] sm:$0xff]
          %v5142 = vld [vmem:[#allocation2 + $0x58] sm:$0xff]
          %v5143 = vld [vmem:[#allocation2 + $0x60] sm:$0xff]
          %v5144 = vld [vmem:[#allocation2 + $0x68] sm:$0xff]
          %v5145 = vld [vmem:[#allocation2 + $0x70] sm:$0xff]
          %v5146 = vld [vmem:[#allocation2 + $0x78] sm:$0xff]
          %v5147 = vld [vmem:[#allocation2 + $0x80] sm:$0xff]
          %v5148 = vld [vmem:[#allocation2 + $0x88] sm:$0xff]
          %v5149 = vld [vmem:[#allocation2 + $0x90] sm:$0xff]
          %v5150 = vld [vmem:[#allocation2 + $0x98] sm:$0xff]
          %v5151 = vld [vmem:[#allocation2 + $0xa0] sm:$0xff]
          %v5152 = vld [vmem:[#allocation2 + $0xa8] sm:$0xff]
          %v5153 = vld [vmem:[#allocation2 + $0xb0] sm:$0xff]
          %v5154 = vld [vmem:[#allocation2 + $0xb8] sm:$0xff]
          %v5155 = vld [vmem:[#allocation2 + $0xc0] sm:$0xff]
          %v5156 = vld [vmem:[#allocation2 + $0xc8] sm:$0xff]
          %v5157 = vld [vmem:[#allocation2 + $0xd0] sm:$0xff]
          %v5158 = vld [vmem:[#allocation2 + $0xd8] sm:$0xff]
          %v5159 = vld [vmem:[#allocation2 + $0xe0] sm:$0xff]
          %v5160 = vld [vmem:[#allocation2 + $0xe8] sm:$0xff]
          %v5161 = vld [vmem:[#allocation2 + $0xf0] sm:$0xff]
          %v5162 = vld [vmem:[#allocation2 + $0xf8] sm:$0xff]
          %v5163 = vld [vmem:[#allocation2 + $0x100] sm:$0xff]
          %v5164 = vld [vmem:[#allocation2 + $0x108] sm:$0xff]
          %v5165 = vld [vmem:[#allocation2 + $0x110] sm:$0xff]
          %v5166 = vld [vmem:[#allocation2 + $0x118] sm:$0xff]
          %v5167 = vld [vmem:[#allocation2 + $0x120] sm:$0xff]
          %v5168 = vld [vmem:[#allocation2 + $0x128] sm:$0xff]
          %v5169 = vld [vmem:[#allocation2 + $0x130] sm:$0xff]
          %v5170 = vld [vmem:[#allocation2 + $0x138] sm:$0xff]
          %v5171 = vld [vmem:[#allocation2 + $0x140] sm:$0xff]
          %v5172 = vld [vmem:[#allocation2 + $0x148] sm:$0xff]
          %v5173 = vld [vmem:[#allocation2 + $0x150] sm:$0xff]
          %v5174 = vld [vmem:[#allocation2 + $0x158] sm:$0xff]
          %v5175 = vld [vmem:[#allocation2 + $0x160] sm:$0xff]
          %v5176 = vld [vmem:[#allocation2 + $0x168] sm:$0xff]
          %v5177 = vld [vmem:[#allocation2 + $0x170] sm:$0xff]
          %v5178 = vld [vmem:[#allocation2 + $0x178] sm:$0xff]
          %v5179 = vld [vmem:[#allocation2 + $0x180] sm:$0xff]
          %v5180 = vld [vmem:[#allocation2 + $0x188] sm:$0xff]
          %v5181 = vld [vmem:[#allocation2 + $0x190] sm:$0xff]
          %v5182 = vld [vmem:[#allocation2 + $0x198] sm:$0xff]
          %v5183 = vld [vmem:[#allocation2 + $0x1a0] sm:$0xff]
          %v5184 = vld [vmem:[#allocation2 + $0x1a8] sm:$0xff]
          %v5185 = vld [vmem:[#allocation2 + $0x1b0] sm:$0xff]
          %v5186 = vld [vmem:[#allocation2 + $0x1b8] sm:$0xff]
          %v5187 = vld [vmem:[#allocation2 + $0x1c0] sm:$0xff]
          %v5188 = vld [vmem:[#allocation2 + $0x1c8] sm:$0xff]
          %v5189 = vld [vmem:[#allocation2 + $0x1d0] sm:$0xff]
          %v5190 = vld [vmem:[#allocation2 + $0x1d8] sm:$0xff]
          %v5191 = vld [vmem:[#allocation2 + $0x1e0] sm:$0xff]
          %v5192 = vld [vmem:[#allocation2 + $0x1e8] sm:$0xff]
          %v5193 = vld [vmem:[#allocation2 + $0x1f0] sm:$0xff]
          %v5194 = vld [vmem:[#allocation2 + $0x1f8] sm:$0xff]
          %v5195 = vld [vmem:[#allocation2 + $0x200] sm:$0xff]
          %v5196 = vld [vmem:[#allocation2 + $0x208] sm:$0xff]
          %v5197 = vld [vmem:[#allocation2 + $0x210] sm:$0xff]
          %v5198 = vld [vmem:[#allocation2 + $0x218] sm:$0xff]
          %v5199 = vld [vmem:[#allocation2 + $0x220] sm:$0xff]
          %v5200 = vld [vmem:[#allocation2 + $0x228] sm:$0xff]
          %v5201 = vld [vmem:[#allocation2 + $0x230] sm:$0xff]
          %v5202 = vld [vmem:[#allocation2 + $0x238] sm:$0xff]
          %v5203 = vld [vmem:[#allocation2 + $0x240] sm:$0xff]
          %v5204 = vld [vmem:[#allocation2 + $0x248] sm:$0xff]
          %v5205 = vld [vmem:[#allocation2 + $0x250] sm:$0xff]
          %v5206 = vld [vmem:[#allocation2 + $0x258] sm:$0xff]
          %v5207 = vld [vmem:[#allocation2 + $0x260] sm:$0xff]
          %v5208 = vld [vmem:[#allocation2 + $0x268] sm:$0xff]
          %v5209 = vld [vmem:[#allocation2 + $0x270] sm:$0xff]
          %v5210 = vld [vmem:[#allocation2 + $0x278] sm:$0xff]
          %v5211 = vld [vmem:[#allocation2 + $0x280] sm:$0xff]
          %v5212 = vld [vmem:[#allocation2 + $0x288] sm:$0xff]
          %v5213 = vld [vmem:[#allocation2 + $0x290] sm:$0xff]
          %v5214 = vld [vmem:[#allocation2 + $0x298] sm:$0xff]
          %v5215 = vld [vmem:[#allocation2 + $0x2a0] sm:$0xff]
          %v5216 = vld [vmem:[#allocation2 + $0x2a8] sm:$0xff]
          %v5217 = vld [vmem:[#allocation2 + $0x2b0] sm:$0xff]
          %v5218 = vld [vmem:[#allocation2 + $0x2b8] sm:$0xff]
          %v5219 = vld [vmem:[#allocation2 + $0x2c0] sm:$0xff]
          %v5220 = vld [vmem:[#allocation2 + $0x2c8] sm:$0xff]
          %v5221 = vld [vmem:[#allocation2 + $0x2d0] sm:$0xff]
          %v5222 = vld [vmem:[#allocation2 + $0x2d8] sm:$0xff]
          %v5223 = vld [vmem:[#allocation2 + $0x2e0] sm:$0xff]
          %v5224 = vld [vmem:[#allocation2 + $0x2e8] sm:$0xff]
          %v5225 = vld [vmem:[#allocation2 + $0x2f0] sm:$0xff]
          %v5226 = vld [vmem:[#allocation2 + $0x2f8] sm:$0xff]
          %v5227 = vld [vmem:[#allocation2 + $0x300] sm:$0xff]
          %v5228 = vld [vmem:[#allocation2 + $0x308] sm:$0xff]
          %v5229 = vld [vmem:[#allocation2 + $0x310] sm:$0xff]
          %v5230 = vld [vmem:[#allocation2 + $0x318] sm:$0xff]
          %v5231 = vld [vmem:[#allocation2 + $0x320] sm:$0xff]
          %v5232 = vld [vmem:[#allocation2 + $0x328] sm:$0xff]
          %v5233 = vld [vmem:[#allocation2 + $0x330] sm:$0xff]
          %v5234 = vld [vmem:[#allocation2 + $0x338] sm:$0xff]
          %v5235 = vld [vmem:[#allocation2 + $0x340] sm:$0xff]
          %v5236 = vld [vmem:[#allocation2 + $0x348] sm:$0xff]
          %v5237 = vld [vmem:[#allocation2 + $0x350] sm:$0xff]
          %v5238 = vld [vmem:[#allocation2 + $0x358] sm:$0xff]
          %v5239 = vld [vmem:[#allocation2 + $0x360] sm:$0xff]
          %v5240 = vld [vmem:[#allocation2 + $0x368] sm:$0xff]
          %v5241 = vld [vmem:[#allocation2 + $0x370] sm:$0xff]
          %v5242 = vld [vmem:[#allocation2 + $0x378] sm:$0xff]
          %v5243 = vld [vmem:[#allocation2 + $0x380] sm:$0xff]
          %v5244 = vld [vmem:[#allocation2 + $0x388] sm:$0xff]
          %v5245 = vld [vmem:[#allocation2 + $0x390] sm:$0xff]
          %v5246 = vld [vmem:[#allocation2 + $0x398] sm:$0xff]
          %v5247 = vld [vmem:[#allocation2 + $0x3a0] sm:$0xff]
          %v5248 = vld [vmem:[#allocation2 + $0x3a8] sm:$0xff]
          %v5249 = vld [vmem:[#allocation2 + $0x3b0] sm:$0xff]
          %v5250 = vld [vmem:[#allocation2 + $0x3b8] sm:$0xff]
          %v5251 = vld [vmem:[#allocation2 + $0x3c0] sm:$0xff]
          %v5252 = vld [vmem:[#allocation2 + $0x3c8] sm:$0xff]
          %v5253 = vld [vmem:[#allocation2 + $0x3d0] sm:$0xff]
          %v5254 = vld [vmem:[#allocation2 + $0x3d8] sm:$0xff]
          %v5255 = vld [vmem:[#allocation2 + $0x3e0] sm:$0xff]
          %v5256 = vld [vmem:[#allocation2 + $0x3e8] sm:$0xff]
          %v5257 = vld [vmem:[#allocation2 + $0x3f0] sm:$0xff]
          %v5258 = vld [vmem:[#allocation2 + $0x3f8] sm:$0xff]
          %v5259 = vld [vmem:[#allocation2 + $0x400] sm:$0xff]
          %v5260 = vld [vmem:[#allocation2 + $0x408] sm:$0xff]
          %v5261 = vld [vmem:[#allocation2 + $0x410] sm:$0xff]
          %v5262 = vld [vmem:[#allocation2 + $0x418] sm:$0xff]
          %v5263 = vld [vmem:[#allocation2 + $0x420] sm:$0xff]
          %v5264 = vld [vmem:[#allocation2 + $0x428] sm:$0xff]
          %v5265 = vld [vmem:[#allocation2 + $0x430] sm:$0xff]
          %v5266 = vld [vmem:[#allocation2 + $0x438] sm:$0xff]
          %v5267 = vld [vmem:[#allocation2 + $0x440] sm:$0xff]
          %v5268 = vld [vmem:[#allocation2 + $0x448] sm:$0xff]
          %v5269 = vld [vmem:[#allocation2 + $0x450] sm:$0xff]
          %v5270 = vld [vmem:[#allocation2 + $0x458] sm:$0xff]
          %v5271 = vld [vmem:[#allocation2 + $0x460] sm:$0xff]
          %v5272 = vld [vmem:[#allocation2 + $0x468] sm:$0xff]
          %v5273 = vld [vmem:[#allocation2 + $0x470] sm:$0xff]
          %v5274 = vld [vmem:[#allocation2 + $0x478] sm:$0xff]
          %v5275 = vld [vmem:[#allocation2 + $0x480] sm:$0xff]
          %v5276 = vld [vmem:[#allocation2 + $0x488] sm:$0xff]
          %v5277 = vld [vmem:[#allocation2 + $0x490] sm:$0xff]
          %v5278 = vld [vmem:[#allocation2 + $0x498] sm:$0xff]
          %v5279 = vld [vmem:[#allocation2 + $0x4a0] sm:$0xff]
          %v5280 = vld [vmem:[#allocation2 + $0x4a8] sm:$0xff]
          %v5281 = vld [vmem:[#allocation2 + $0x4b0] sm:$0xff]
          %v5282 = vld [vmem:[#allocation2 + $0x4b8] sm:$0xff]
          %v5283 = vld [vmem:[#allocation2 + $0x4c0] sm:$0xff]
          %v5284 = vld [vmem:[#allocation2 + $0x4c8] sm:$0xff]
          %v5285 = vld [vmem:[#allocation2 + $0x4d0] sm:$0xff]
          %v5286 = vld [vmem:[#allocation2 + $0x4d8] sm:$0xff]
          %v5287 = vld [vmem:[#allocation2 + $0x4e0] sm:$0xff]
          %v5288 = vld [vmem:[#allocation2 + $0x4e8] sm:$0xff]
          %v5289 = vld [vmem:[#allocation2 + $0x4f0] sm:$0xff]
          %v5290 = vld [vmem:[#allocation2 + $0x4f8] sm:$0xff]
          %v5291 = vld [vmem:[#allocation2 + $0x500] sm:$0xff]
          %v5292 = vld [vmem:[#allocation2 + $0x508] sm:$0xff]
          %v5293 = vld [vmem:[#allocation2 + $0x510] sm:$0xff]
          %v5294 = vld [vmem:[#allocation2 + $0x518] sm:$0xff]
          %v5295 = vld [vmem:[#allocation2 + $0x520] sm:$0xff]
          %v5296 = vld [vmem:[#allocation2 + $0x528] sm:$0xff]
          %v5297 = vld [vmem:[#allocation2 + $0x530] sm:$0xff]
          %v5298 = vld [vmem:[#allocation2 + $0x538] sm:$0xff]
          %v5299 = vld [vmem:[#allocation2 + $0x540] sm:$0xff]
          %v5300 = vld [vmem:[#allocation2 + $0x548] sm:$0xff]
          %v5301 = vld [vmem:[#allocation2 + $0x550] sm:$0xff]
          %v5302 = vld [vmem:[#allocation2 + $0x558] sm:$0xff]
          %v5303 = vld [vmem:[#allocation2 + $0x560] sm:$0xff]
          %v5304 = vld [vmem:[#allocation2 + $0x568] sm:$0xff]
          %v5305 = vld [vmem:[#allocation2 + $0x570] sm:$0xff]
          %v5306 = vld [vmem:[#allocation2 + $0x578] sm:$0xff]
          %v5307 = vld [vmem:[#allocation2 + $0x580] sm:$0xff]
          %v5308 = vld [vmem:[#allocation2 + $0x588] sm:$0xff]
          %v5309 = vld [vmem:[#allocation2 + $0x590] sm:$0xff]
          %v5310 = vld [vmem:[#allocation2 + $0x598] sm:$0xff]
          %v5311 = vld [vmem:[#allocation2 + $0x5a0] sm:$0xff]
          %v5312 = vld [vmem:[#allocation2 + $0x5a8] sm:$0xff]
          %v5313 = vld [vmem:[#allocation2 + $0x5b0] sm:$0xff]
          %v5314 = vld [vmem:[#allocation2 + $0x5b8] sm:$0xff]
          %v5315 = vld [vmem:[#allocation2 + $0x5c0] sm:$0xff]
          %v5316 = vld [vmem:[#allocation2 + $0x5c8] sm:$0xff]
          %v5317 = vld [vmem:[#allocation2 + $0x5d0] sm:$0xff]
          %v5318 = vld [vmem:[#allocation2 + $0x5d8] sm:$0xff]
          %v5319 = vld [vmem:[#allocation2 + $0x5e0] sm:$0xff]
          %v5320 = vld [vmem:[#allocation2 + $0x5e8] sm:$0xff]
          %v5321 = vld [vmem:[#allocation2 + $0x5f0] sm:$0xff]
          %v5322 = vld [vmem:[#allocation2 + $0x5f8] sm:$0xff]
          %v5323 = vld [vmem:[#allocation2 + $0x600] sm:$0xff]
          %v5324 = vld [vmem:[#allocation2 + $0x608] sm:$0xff]
          %v5325 = vld [vmem:[#allocation2 + $0x610] sm:$0xff]
          %v5326 = vld [vmem:[#allocation2 + $0x618] sm:$0xff]
          %v5327 = vld [vmem:[#allocation2 + $0x620] sm:$0xff]
          %v5328 = vld [vmem:[#allocation2 + $0x628] sm:$0xff]
          %v5329 = vld [vmem:[#allocation2 + $0x630] sm:$0xff]
          %v5330 = vld [vmem:[#allocation2 + $0x638] sm:$0xff]
          %v5331 = vld [vmem:[#allocation2 + $0x640] sm:$0xff]
          %v5332 = vld [vmem:[#allocation2 + $0x648] sm:$0xff]
          %v5333 = vld [vmem:[#allocation2 + $0x650] sm:$0xff]
          %v5334 = vld [vmem:[#allocation2 + $0x658] sm:$0xff]
          %v5335 = vld [vmem:[#allocation2 + $0x660] sm:$0xff]
          %v5336 = vld [vmem:[#allocation2 + $0x668] sm:$0xff]
          %v5337 = vld [vmem:[#allocation2 + $0x670] sm:$0xff]
          %v5338 = vld [vmem:[#allocation2 + $0x678] sm:$0xff]
          %v5339 = vld [vmem:[#allocation2 + $0x680] sm:$0xff]
          %v5340 = vld [vmem:[#allocation2 + $0x688] sm:$0xff]
          %v5341 = vld [vmem:[#allocation2 + $0x690] sm:$0xff]
          %v5342 = vld [vmem:[#allocation2 + $0x698] sm:$0xff]
          %v5343 = vld [vmem:[#allocation2 + $0x6a0] sm:$0xff]
          %v5344 = vld [vmem:[#allocation2 + $0x6a8] sm:$0xff]
          %v5345 = vld [vmem:[#allocation2 + $0x6b0] sm:$0xff]
          %v5346 = vld [vmem:[#allocation2 + $0x6b8] sm:$0xff]
          %v5347 = vld [vmem:[#allocation2 + $0x6c0] sm:$0xff]
          %v5348 = vld [vmem:[#allocation2 + $0x6c8] sm:$0xff]
          %v5349 = vld [vmem:[#allocation2 + $0x6d0] sm:$0xff]
          %v5350 = vld [vmem:[#allocation2 + $0x6d8] sm:$0xff]
          %v5351 = vld [vmem:[#allocation2 + $0x6e0] sm:$0xff]
          %v5352 = vld [vmem:[#allocation2 + $0x6e8] sm:$0xff]
          %v5353 = vld [vmem:[#allocation2 + $0x6f0] sm:$0xff]
          %v5354 = vld [vmem:[#allocation2 + $0x6f8] sm:$0xff]
          %v5355 = vld [vmem:[#allocation2 + $0x700] sm:$0xff]
          %v5356 = vld [vmem:[#allocation2 + $0x708] sm:$0xff]
          %v5357 = vld [vmem:[#allocation2 + $0x710] sm:$0xff]
          %v5358 = vld [vmem:[#allocation2 + $0x718] sm:$0xff]
          %v5359 = vld [vmem:[#allocation2 + $0x720] sm:$0xff]
          %v5360 = vld [vmem:[#allocation2 + $0x728] sm:$0xff]
          %v5361 = vld [vmem:[#allocation2 + $0x730] sm:$0xff]
          %v5362 = vld [vmem:[#allocation2 + $0x738] sm:$0xff]
          %v5363 = vld [vmem:[#allocation2 + $0x740] sm:$0xff]
          %v5364 = vld [vmem:[#allocation2 + $0x748] sm:$0xff]
          %v5365 = vld [vmem:[#allocation2 + $0x750] sm:$0xff]
          %v5366 = vld [vmem:[#allocation2 + $0x758] sm:$0xff]
          %v5367 = vld [vmem:[#allocation2 + $0x760] sm:$0xff]
          %v5368 = vld [vmem:[#allocation2 + $0x768] sm:$0xff]
          %v5369 = vld [vmem:[#allocation2 + $0x770] sm:$0xff]
          %v5370 = vld [vmem:[#allocation2 + $0x778] sm:$0xff]
          %v5371 = vld [vmem:[#allocation2 + $0x780] sm:$0xff]
          %v5372 = vld [vmem:[#allocation2 + $0x788] sm:$0xff]
          %v5373 = vld [vmem:[#allocation2 + $0x790] sm:$0xff]
          %v5374 = vld [vmem:[#allocation2 + $0x798] sm:$0xff]
          %v5375 = vld [vmem:[#allocation2 + $0x7a0] sm:$0xff]
          %v5376 = vld [vmem:[#allocation2 + $0x7a8] sm:$0xff]
          %v5377 = vld [vmem:[#allocation2 + $0x7b0] sm:$0xff]
          %v5378 = vld [vmem:[#allocation2 + $0x7b8] sm:$0xff]
          %v5379 = vld [vmem:[#allocation2 + $0x7c0] sm:$0xff]
          %v5380 = vld [vmem:[#allocation2 + $0x7c8] sm:$0xff]
          %v5381 = vld [vmem:[#allocation2 + $0x7d0] sm:$0xff]
          %v5382 = vld [vmem:[#allocation2 + $0x7d8] sm:$0xff]
          %v5383 = vld [vmem:[#allocation2 + $0x7e0] sm:$0xff]
          %v5384 = vld [vmem:[#allocation2 + $0x7e8] sm:$0xff]
          %v5385 = vld [vmem:[#allocation2 + $0x7f0] sm:$0xff]
          %v5386 = vld [vmem:[#allocation2 + $0x7f8] sm:$0xff]
          %v5387 = vpack.c.bf16 %v5132, %v5131
          %v5388 = vpack.c.bf16 %v5134, %v5133
          %v5389 = vpack.c.bf16 %v5136, %v5135
          %v5390 = vpack.c.bf16 %v5138, %v5137
          %v5391 = vpack.c.bf16 %v5140, %v5139
          %v5392 = vpack.c.bf16 %v5142, %v5141
          %v5393 = vpack.c.bf16 %v5144, %v5143
          %v5394 = vpack.c.bf16 %v5146, %v5145
          %v5395 = vpack.c.bf16 %v5148, %v5147
          %v5396 = vpack.c.bf16 %v5150, %v5149
          %v5397 = vpack.c.bf16 %v5152, %v5151
          %v5398 = vpack.c.bf16 %v5154, %v5153
          %v5399 = vpack.c.bf16 %v5156, %v5155
          %v5400 = vpack.c.bf16 %v5158, %v5157
          %v5401 = vpack.c.bf16 %v5160, %v5159
          %v5402 = vpack.c.bf16 %v5162, %v5161
          %v5403 = vpack.c.bf16 %v5164, %v5163
          %v5404 = vpack.c.bf16 %v5166, %v5165
          %v5405 = vpack.c.bf16 %v5168, %v5167
          %v5406 = vpack.c.bf16 %v5170, %v5169
          %v5407 = vpack.c.bf16 %v5172, %v5171
          %v5408 = vpack.c.bf16 %v5174, %v5173
          %v5409 = vpack.c.bf16 %v5176, %v5175
          %v5410 = vpack.c.bf16 %v5178, %v5177
          %v5411 = vpack.c.bf16 %v5180, %v5179
          %v5412 = vpack.c.bf16 %v5182, %v5181
          %v5413 = vpack.c.bf16 %v5184, %v5183
          %v5414 = vpack.c.bf16 %v5186, %v5185
          %v5415 = vpack.c.bf16 %v5188, %v5187
          %v5416 = vpack.c.bf16 %v5190, %v5189
          %v5417 = vpack.c.bf16 %v5192, %v5191
          %v5418 = vpack.c.bf16 %v5194, %v5193
          %v5419 = vpack.c.bf16 %v5196, %v5195
          %v5420 = vpack.c.bf16 %v5198, %v5197
          %v5421 = vpack.c.bf16 %v5200, %v5199
          %v5422 = vpack.c.bf16 %v5202, %v5201
          %v5423 = vpack.c.bf16 %v5204, %v5203
          %v5424 = vpack.c.bf16 %v5206, %v5205
          %v5425 = vpack.c.bf16 %v5208, %v5207
          %v5426 = vpack.c.bf16 %v5210, %v5209
          %v5427 = vpack.c.bf16 %v5212, %v5211
          %v5428 = vpack.c.bf16 %v5214, %v5213
          %v5429 = vpack.c.bf16 %v5216, %v5215
          %v5430 = vpack.c.bf16 %v5218, %v5217
          %v5431 = vpack.c.bf16 %v5220, %v5219
          %v5432 = vpack.c.bf16 %v5222, %v5221
          %v5433 = vpack.c.bf16 %v5224, %v5223
          %v5434 = vpack.c.bf16 %v5226, %v5225
          %v5435 = vpack.c.bf16 %v5228, %v5227
          %v5436 = vpack.c.bf16 %v5230, %v5229
          %v5437 = vpack.c.bf16 %v5232, %v5231
          %v5438 = vpack.c.bf16 %v5234, %v5233
          %v5439 = vpack.c.bf16 %v5236, %v5235
          %v5440 = vpack.c.bf16 %v5238, %v5237
          %v5441 = vpack.c.bf16 %v5240, %v5239
          %v5442 = vpack.c.bf16 %v5242, %v5241
          %v5443 = vpack.c.bf16 %v5244, %v5243
          %v5444 = vpack.c.bf16 %v5246, %v5245
          %v5445 = vpack.c.bf16 %v5248, %v5247
          %v5446 = vpack.c.bf16 %v5250, %v5249
          %v5447 = vpack.c.bf16 %v5252, %v5251
          %v5448 = vpack.c.bf16 %v5254, %v5253
          %v5449 = vpack.c.bf16 %v5256, %v5255
          %v5450 = vpack.c.bf16 %v5258, %v5257
          %v5451 = vpack.c.bf16 %v5260, %v5259
          %v5452 = vpack.c.bf16 %v5262, %v5261
          %v5453 = vpack.c.bf16 %v5264, %v5263
          %v5454 = vpack.c.bf16 %v5266, %v5265
          %v5455 = vpack.c.bf16 %v5268, %v5267
          %v5456 = vpack.c.bf16 %v5270, %v5269
          %v5457 = vpack.c.bf16 %v5272, %v5271
          %v5458 = vpack.c.bf16 %v5274, %v5273
          %v5459 = vpack.c.bf16 %v5276, %v5275
          %v5460 = vpack.c.bf16 %v5278, %v5277
          %v5461 = vpack.c.bf16 %v5280, %v5279
          %v5462 = vpack.c.bf16 %v5282, %v5281
          %v5463 = vpack.c.bf16 %v5284, %v5283
          %v5464 = vpack.c.bf16 %v5286, %v5285
          %v5465 = vpack.c.bf16 %v5288, %v5287
          %v5466 = vpack.c.bf16 %v5290, %v5289
          %v5467 = vpack.c.bf16 %v5292, %v5291
          %v5468 = vpack.c.bf16 %v5294, %v5293
          %v5469 = vpack.c.bf16 %v5296, %v5295
          %v5470 = vpack.c.bf16 %v5298, %v5297
          %v5471 = vpack.c.bf16 %v5300, %v5299
          %v5472 = vpack.c.bf16 %v5302, %v5301
          %v5473 = vpack.c.bf16 %v5304, %v5303
          %v5474 = vpack.c.bf16 %v5306, %v5305
          %v5475 = vpack.c.bf16 %v5308, %v5307
          %v5476 = vpack.c.bf16 %v5310, %v5309
          %v5477 = vpack.c.bf16 %v5312, %v5311
          %v5478 = vpack.c.bf16 %v5314, %v5313
          %v5479 = vpack.c.bf16 %v5316, %v5315
          %v5480 = vpack.c.bf16 %v5318, %v5317
          %v5481 = vpack.c.bf16 %v5320, %v5319
          %v5482 = vpack.c.bf16 %v5322, %v5321
          %v5483 = vpack.c.bf16 %v5324, %v5323
          %v5484 = vpack.c.bf16 %v5326, %v5325
          %v5485 = vpack.c.bf16 %v5328, %v5327
          %v5486 = vpack.c.bf16 %v5330, %v5329
          %v5487 = vpack.c.bf16 %v5332, %v5331
          %v5488 = vpack.c.bf16 %v5334, %v5333
          %v5489 = vpack.c.bf16 %v5336, %v5335
          %v5490 = vpack.c.bf16 %v5338, %v5337
          %v5491 = vpack.c.bf16 %v5340, %v5339
          %v5492 = vpack.c.bf16 %v5342, %v5341
          %v5493 = vpack.c.bf16 %v5344, %v5343
          %v5494 = vpack.c.bf16 %v5346, %v5345
          %v5495 = vpack.c.bf16 %v5348, %v5347
          %v5496 = vpack.c.bf16 %v5350, %v5349
          %v5497 = vpack.c.bf16 %v5352, %v5351
          %v5498 = vpack.c.bf16 %v5354, %v5353
          %v5499 = vpack.c.bf16 %v5356, %v5355
          %v5500 = vpack.c.bf16 %v5358, %v5357
          %v5501 = vpack.c.bf16 %v5360, %v5359
          %v5502 = vpack.c.bf16 %v5362, %v5361
          %v5503 = vpack.c.bf16 %v5364, %v5363
          %v5504 = vpack.c.bf16 %v5366, %v5365
          %v5505 = vpack.c.bf16 %v5368, %v5367
          %v5506 = vpack.c.bf16 %v5370, %v5369
          %v5507 = vpack.c.bf16 %v5372, %v5371
          %v5508 = vpack.c.bf16 %v5374, %v5373
          %v5509 = vpack.c.bf16 %v5376, %v5375
          %v5510 = vpack.c.bf16 %v5378, %v5377
          %v5511 = vpack.c.bf16 %v5380, %v5379
          %v5512 = vpack.c.bf16 %v5382, %v5381
          %v5513 = vpack.c.bf16 %v5384, %v5383
          %v5514 = vpack.c.bf16 %v5386, %v5385
          %5515 = vst [vmem:[%s236] sm:$0xff] %v5387
          %5516 = vst [vmem:[%s236 + $0x8] sm:$0xff] %v5388
          %5517 = vst [vmem:[%s236 + $0x10] sm:$0xff] %v5389
          %5518 = vst [vmem:[%s236 + $0x18] sm:$0xff] %v5390
          %5519 = vst [vmem:[%s236 + $0x20] sm:$0xff] %v5391
          %5520 = vst [vmem:[%s236 + $0x28] sm:$0xff] %v5392
          %5521 = vst [vmem:[%s236 + $0x30] sm:$0xff] %v5393
          %5522 = vst [vmem:[%s236 + $0x38] sm:$0xff] %v5394
          %5523 = vst [vmem:[%s236 + $0x40] sm:$0xff] %v5395
          %5524 = vst [vmem:[%s236 + $0x48] sm:$0xff] %v5396
          %5525 = vst [vmem:[%s236 + $0x50] sm:$0xff] %v5397
          %5526 = vst [vmem:[%s236 + $0x58] sm:$0xff] %v5398
          %5527 = vst [vmem:[%s236 + $0x60] sm:$0xff] %v5399
          %5528 = vst [vmem:[%s236 + $0x68] sm:$0xff] %v5400
          %5529 = vst [vmem:[%s236 + $0x70] sm:$0xff] %v5401
          %5530 = vst [vmem:[%s236 + $0x78] sm:$0xff] %v5402
          %5531 = vst [vmem:[%s236 + $0x80] sm:$0xff] %v5403
          %5532 = vst [vmem:[%s236 + $0x88] sm:$0xff] %v5404
          %5533 = vst [vmem:[%s236 + $0x90] sm:$0xff] %v5405
          %5534 = vst [vmem:[%s236 + $0x98] sm:$0xff] %v5406
          %5535 = vst [vmem:[%s236 + $0xa0] sm:$0xff] %v5407
          %5536 = vst [vmem:[%s236 + $0xa8] sm:$0xff] %v5408
          %5537 = vst [vmem:[%s236 + $0xb0] sm:$0xff] %v5409
          %5538 = vst [vmem:[%s236 + $0xb8] sm:$0xff] %v5410
          %5539 = vst [vmem:[%s236 + $0xc0] sm:$0xff] %v5411
          %5540 = vst [vmem:[%s236 + $0xc8] sm:$0xff] %v5412
          %5541 = vst [vmem:[%s236 + $0xd0] sm:$0xff] %v5413
          %5542 = vst [vmem:[%s236 + $0xd8] sm:$0xff] %v5414
          %5543 = vst [vmem:[%s236 + $0xe0] sm:$0xff] %v5415
          %5544 = vst [vmem:[%s236 + $0xe8] sm:$0xff] %v5416
          %5545 = vst [vmem:[%s236 + $0xf0] sm:$0xff] %v5417
          %5546 = vst [vmem:[%s236 + $0xf8] sm:$0xff] %v5418
          %5547 = vst [vmem:[%s236 + $0x100] sm:$0xff] %v5419
          %5548 = vst [vmem:[%s236 + $0x108] sm:$0xff] %v5420
          %5549 = vst [vmem:[%s236 + $0x110] sm:$0xff] %v5421
          %5550 = vst [vmem:[%s236 + $0x118] sm:$0xff] %v5422
          %5551 = vst [vmem:[%s236 + $0x120] sm:$0xff] %v5423
          %5552 = vst [vmem:[%s236 + $0x128] sm:$0xff] %v5424
          %5553 = vst [vmem:[%s236 + $0x130] sm:$0xff] %v5425
          %5554 = vst [vmem:[%s236 + $0x138] sm:$0xff] %v5426
          %5555 = vst [vmem:[%s236 + $0x140] sm:$0xff] %v5427
          %5556 = vst [vmem:[%s236 + $0x148] sm:$0xff] %v5428
          %5557 = vst [vmem:[%s236 + $0x150] sm:$0xff] %v5429
          %5558 = vst [vmem:[%s236 + $0x158] sm:$0xff] %v5430
          %5559 = vst [vmem:[%s236 + $0x160] sm:$0xff] %v5431
          %5560 = vst [vmem:[%s236 + $0x168] sm:$0xff] %v5432
          %5561 = vst [vmem:[%s236 + $0x170] sm:$0xff] %v5433
          %5562 = vst [vmem:[%s236 + $0x178] sm:$0xff] %v5434
          %5563 = vst [vmem:[%s236 + $0x180] sm:$0xff] %v5435
          %5564 = vst [vmem:[%s236 + $0x188] sm:$0xff] %v5436
          %5565 = vst [vmem:[%s236 + $0x190] sm:$0xff] %v5437
          %5566 = vst [vmem:[%s236 + $0x198] sm:$0xff] %v5438
          %5567 = vst [vmem:[%s236 + $0x1a0] sm:$0xff] %v5439
          %5568 = vst [vmem:[%s236 + $0x1a8] sm:$0xff] %v5440
          %5569 = vst [vmem:[%s236 + $0x1b0] sm:$0xff] %v5441
          %5570 = vst [vmem:[%s236 + $0x1b8] sm:$0xff] %v5442
          %5571 = vst [vmem:[%s236 + $0x1c0] sm:$0xff] %v5443
          %5572 = vst [vmem:[%s236 + $0x1c8] sm:$0xff] %v5444
          %5573 = vst [vmem:[%s236 + $0x1d0] sm:$0xff] %v5445
          %5574 = vst [vmem:[%s236 + $0x1d8] sm:$0xff] %v5446
          %5575 = vst [vmem:[%s236 + $0x1e0] sm:$0xff] %v5447
          %5576 = vst [vmem:[%s236 + $0x1e8] sm:$0xff] %v5448
          %5577 = vst [vmem:[%s236 + $0x1f0] sm:$0xff] %v5449
          %5578 = vst [vmem:[%s236 + $0x1f8] sm:$0xff] %v5450
          %5579 = vst [vmem:[%s236 + $0x200] sm:$0xff] %v5451
          %5580 = vst [vmem:[%s236 + $0x208] sm:$0xff] %v5452
          %5581 = vst [vmem:[%s236 + $0x210] sm:$0xff] %v5453
          %5582 = vst [vmem:[%s236 + $0x218] sm:$0xff] %v5454
          %5583 = vst [vmem:[%s236 + $0x220] sm:$0xff] %v5455
          %5584 = vst [vmem:[%s236 + $0x228] sm:$0xff] %v5456
          %5585 = vst [vmem:[%s236 + $0x230] sm:$0xff] %v5457
          %5586 = vst [vmem:[%s236 + $0x238] sm:$0xff] %v5458
          %5587 = vst [vmem:[%s236 + $0x240] sm:$0xff] %v5459
          %5588 = vst [vmem:[%s236 + $0x248] sm:$0xff] %v5460
          %5589 = vst [vmem:[%s236 + $0x250] sm:$0xff] %v5461
          %5590 = vst [vmem:[%s236 + $0x258] sm:$0xff] %v5462
          %5591 = vst [vmem:[%s236 + $0x260] sm:$0xff] %v5463
          %5592 = vst [vmem:[%s236 + $0x268] sm:$0xff] %v5464
          %5593 = vst [vmem:[%s236 + $0x270] sm:$0xff] %v5465
          %5594 = vst [vmem:[%s236 + $0x278] sm:$0xff] %v5466
          %5595 = vst [vmem:[%s236 + $0x280] sm:$0xff] %v5467
          %5596 = vst [vmem:[%s236 + $0x288] sm:$0xff] %v5468
          %5597 = vst [vmem:[%s236 + $0x290] sm:$0xff] %v5469
          %5598 = vst [vmem:[%s236 + $0x298] sm:$0xff] %v5470
          %5599 = vst [vmem:[%s236 + $0x2a0] sm:$0xff] %v5471
          %5600 = vst [vmem:[%s236 + $0x2a8] sm:$0xff] %v5472
          %5601 = vst [vmem:[%s236 + $0x2b0] sm:$0xff] %v5473
          %5602 = vst [vmem:[%s236 + $0x2b8] sm:$0xff] %v5474
          %5603 = vst [vmem:[%s236 + $0x2c0] sm:$0xff] %v5475
          %5604 = vst [vmem:[%s236 + $0x2c8] sm:$0xff] %v5476
          %5605 = vst [vmem:[%s236 + $0x2d0] sm:$0xff] %v5477
          %5606 = vst [vmem:[%s236 + $0x2d8] sm:$0xff] %v5478
          %5607 = vst [vmem:[%s236 + $0x2e0] sm:$0xff] %v5479
          %5608 = vst [vmem:[%s236 + $0x2e8] sm:$0xff] %v5480
          %5609 = vst [vmem:[%s236 + $0x2f0] sm:$0xff] %v5481
          %5610 = vst [vmem:[%s236 + $0x2f8] sm:$0xff] %v5482
          %5611 = vst [vmem:[%s236 + $0x300] sm:$0xff] %v5483
          %5612 = vst [vmem:[%s236 + $0x308] sm:$0xff] %v5484
          %5613 = vst [vmem:[%s236 + $0x310] sm:$0xff] %v5485
          %5614 = vst [vmem:[%s236 + $0x318] sm:$0xff] %v5486
          %5615 = vst [vmem:[%s236 + $0x320] sm:$0xff] %v5487
          %5616 = vst [vmem:[%s236 + $0x328] sm:$0xff] %v5488
          %5617 = vst [vmem:[%s236 + $0x330] sm:$0xff] %v5489
          %5618 = vst [vmem:[%s236 + $0x338] sm:$0xff] %v5490
          %5619 = vst [vmem:[%s236 + $0x340] sm:$0xff] %v5491
          %5620 = vst [vmem:[%s236 + $0x348] sm:$0xff] %v5492
          %5621 = vst [vmem:[%s236 + $0x350] sm:$0xff] %v5493
          %5622 = vst [vmem:[%s236 + $0x358] sm:$0xff] %v5494
          %5623 = vst [vmem:[%s236 + $0x360] sm:$0xff] %v5495
          %5624 = vst [vmem:[%s236 + $0x368] sm:$0xff] %v5496
          %5625 = vst [vmem:[%s236 + $0x370] sm:$0xff] %v5497
          %5626 = vst [vmem:[%s236 + $0x378] sm:$0xff] %v5498
          %5627 = vst [vmem:[%s236 + $0x380] sm:$0xff] %v5499
          %5628 = vst [vmem:[%s236 + $0x388] sm:$0xff] %v5500
          %5629 = vst [vmem:[%s236 + $0x390] sm:$0xff] %v5501
          %5630 = vst [vmem:[%s236 + $0x398] sm:$0xff] %v5502
          %5631 = vst [vmem:[%s236 + $0x3a0] sm:$0xff] %v5503
          %5632 = vst [vmem:[%s236 + $0x3a8] sm:$0xff] %v5504
          %5633 = vst [vmem:[%s236 + $0x3b0] sm:$0xff] %v5505
          %5634 = vst [vmem:[%s236 + $0x3b8] sm:$0xff] %v5506
          %5635 = vst [vmem:[%s236 + $0x3c0] sm:$0xff] %v5507
          %5636 = vst [vmem:[%s236 + $0x3c8] sm:$0xff] %v5508
          %5637 = vst [vmem:[%s236 + $0x3d0] sm:$0xff] %v5509
          %5638 = vst [vmem:[%s236 + $0x3d8] sm:$0xff] %v5510
          %5639 = vst [vmem:[%s236 + $0x3e0] sm:$0xff] %v5511
          %5640 = vst [vmem:[%s236 + $0x3e8] sm:$0xff] %v5512
          %5641 = vst [vmem:[%s236 + $0x3f0] sm:$0xff] %v5513
          %5642 = vst [vmem:[%s236 + $0x3f8] sm:$0xff] %v5514
        $region44: #{tpu_custom_call.1} parent=27 // pred_fallthru
          _
        %s5643 = sand.u32 %s107, 1
        %s5644 = scalar_lea.sflag [#allocation5], %s5643
        %s5645 = sand.u32 %s107, 1
        %s5646 = smul.addr %s5645, 1024
        %s5647 = scalar_lea.vmem [#allocation8], %s5646
        // Predicated region
        $region45: #{tpu_custom_call.1} parent=27 // pred_check
          %p5648 = pneg %p117
        $region46: #{tpu_custom_call.1} parent=27 // pred_check_branch
          %5650 = sbr.rel (%p5648) target = $region48
        $region47: #{tpu_custom_call.1} parent=27 // pred_region
          %s5651 = smul.u32 64, %s27
          %s5652 = smul.u32 4, %s28
          %5654 = vsyncadd %s5644, 0
          %s5655 = smul.addr %s5651, 12
          %s5656 = sadd.s32 %s5652, %s5655
          %s5657 = smul.addr %s5656, 4
          %s5658 = scalar_lea.hbm %s2, %s5657
          %s5659 = sshll.u32 %s5647, 4
          %s5660 = int_to_ptr.vmem [resolvable:$true] %s5659
          %s5661 = sshll.u32 %s5658, 4
          %s5662 = int_to_ptr.hbm [resolvable:$true] %s5661
          %5667 = dma.vmem_to_hbm [thread:$0]  %s5660, 16384, %s5662, %s5644, 256, 768, 16
        $region48: #{tpu_custom_call.1} parent=27 // pred_fallthru
          _
      $region28: #{tpu_custom_call.1} parent=5 // pred_fallthru
        _
      %p5668 = scmp.le.s32.totalorder 2, %s17
      // Predicated region
      $region49: #{tpu_custom_call.1} parent=5 // pred_check
        %p5669 = pneg %p5668
      $region50: #{tpu_custom_call.1} parent=5 // pred_check_branch
        %5671 = sbr.rel (%p5669) target = $region52
      $region51: #{tpu_custom_call.1} parent=5 // pred_region
        %s5672 = ssub.s32 %s17, 2
        // Predicated region
        $region53: #{tpu_custom_call.1} parent=51 // pred_check
          %p5673 = pneg %p123
        $region54: #{tpu_custom_call.1} parent=51 // pred_check_branch
          %5675 = sbr.rel (%p5673) target = $region56
        $region55: #{tpu_custom_call.1} parent=51 // pred_region
          %s5676 = sand.u32 %s108, 1
          %s5677 = scalar_lea.sflag [#allocation5], %s5676
          %s5678 = sand.u32 %s108, 1
          %s5679 = smul.addr %s5678, 1024
          %s5680 = scalar_lea.vmem [#allocation8], %s5679
          %5682 = dma.done %s5677, 16384
        $region56: #{tpu_custom_call.1} parent=51 // pred_fallthru
          _
      $region52: #{tpu_custom_call.1} parent=5 // pred_fallthru
        _
    $region6: #{tpu_custom_call.1} parent=1 // loop_footer
      %s21 = sadd.s32 1, %s17
    $region7: #{tpu_custom_call.1} parent=1 // loop_footer_branch
      %16 = sbr.rel target = $region3
    $region8: #{tpu_custom_call.1} parent=1 // loop_exit
      _
    %5683 = vsyncpa [#allocation4], 1
    %s5684 = scalar_lea.sflag [#allocation4], 1
    %5685 = vsyncpa %s5684, 1
    %5686 = vsyncpa [#allocation7], 1
    %s5687 = scalar_lea.sflag [#allocation7], 1
    %5688 = vsyncpa %s5687, 1
    %5689 = vsyncpa [#allocation5], 1
    %s5690 = scalar_lea.sflag [#allocation5], 1
    %5691 = vsyncpa %s5690, 1

</llo_original>
